<compile_context>
chip_gen: v7x
topology: tpu7x:2x2x1
jax: 0.10.0
libtpu: 0.0.40
codegen_flags: <defaults>
</compile_context>

<pallas_src>
import functools

import jax
import jax.numpy as jnp
import numpy as np
from jax.experimental import pallas as pl
from jax.experimental.pallas import tpu as pltpu


# --------------------------------------------------------------------------- #
# Fused trunk kernel: per grid step = one image, all three conv layers.
#
# Geometry (84x84 input):
#   space-to-depth(4) grid : 21x21 (padded to 22x22) -> 2x2 parity classes of 11x11
#   layer 1 (8x8 s4)       : -> 20x20x32, stored as 4 parity classes, pitch 11 (440 rows)
#   layer 2 (4x4 s2)       : -> 9x9x64,   pitch 11 (97 rows)
#   layer 3 (3x3 s1)       : -> 7x7x64,   pitch 11 (73 rows) -> compacted to (49, 64)
# --------------------------------------------------------------------------- #
def _make_trunk_kernel(cin):
    CIN1 = 16 * cin          # channels of the space-to-depth(4) input
    K1 = 4 * CIN1            # layer-1 patch width (2x2 taps over the s2d grid)

    def kernel(xc_ref, w1_ref, b1_ref, w2_ref, b2_ref, w3_ref, b3_ref, out_ref,
               xf, p1, h1s, p2, h2s, p3):
        # uint8 -> f32 once for the whole per-image block (the /255 lives in w1).
        xf[...] = xc_ref[0].astype(jnp.float32)                  # (4, 121, 16*cin)

        # ---------------- layer 1: 8x8 stride-4 conv -------------------------
        # On the space-to-depth(4) input this is a 2x2 stride-1 conv.  Output rows
        # are grouped into the 4 (p,q) parity classes that layer 2's stride-2
        # sampling needs, laid out with pitch 11 so each tap is one contiguous copy.
        for pp in range(2):
            for qq in range(2):
                cls = pp * 2 + qq
                # pitch gap row (keeps the whole patch matrix initialized)
                p1[cls * 110 + 109:cls * 110 + 110, :] = jnp.zeros((1, K1), jnp.float32)
                for jh in range(2):
                    for jw in range(2):
                        t = jh * 2 + jw
                        src = ((pp + jh) % 2) * 2 + (qq + jw) % 2
                        off = ((pp + jh) // 2) * 11 + (qq + jw) // 2
                        p1[cls * 110:cls * 110 + 109, t * CIN1:(t + 1) * CIN1] = (
                            xf[src, off:off + 109, :])
        h1 = jnp.dot(p1[...].astype(jnp.bfloat16), w1_ref[...],
                     preferred_element_type=jnp.float32)
        h1s[...] = jnp.maximum(h1 + b1_ref[...], 0.0)            # (440, 32)

        # ---------------- layer 2: 4x4 stride-2 conv -------------------------
        # = 2x2 stride-1 conv over the 4 parity classes of h1 (pitched rows).
        for pp in range(2):
            for qq in range(2):
                for jh in range(2):
                    for jw in range(2):
                        t = (pp * 2 + qq) * 4 + jh * 2 + jw
                        off = (pp * 2 + qq) * 110 + jh * 11 + jw
                        p2[:, t * 32:(t + 1) * 32] = h1s[off:off + 97, :]
        h2 = jnp.dot(p2[...].astype(jnp.bfloat16), w2_ref[...],
                     preferred_element_type=jnp.float32)
        h2s[...] = jnp.maximum(h2 + b2_ref[...], 0.0)            # (97, 64); row = ho*11+wo

        # ---------------- layer 3: 3x3 stride-1 conv -------------------------
        for ih in range(3):
            for iw in range(3):
                t = ih * 3 + iw
                p3[:, t * 64:(t + 1) * 64] = h2s[ih * 11 + iw:ih * 11 + iw + 73, :]
        h3 = jnp.dot(p3[...].astype(jnp.bfloat16), w3_ref[...],
                     preferred_element_type=jnp.float32)
        h3 = jnp.maximum(h3 + b3_ref[...], 0.0)                  # (73, 64); row = ho*11+wo

        # compact the pitched rows into the dense (49, 64) output tile
        for a in range(7):
            out_ref[0, a * 7:(a + 1) * 7, :] = h3[a * 11:a * 11 + 7, :]

    return kernel


# --------------------------------------------------------------------------- #
# Wrapper-side layout plumbing (cheap XLA reshapes/transposes on tiny tensors).
# --------------------------------------------------------------------------- #
def _prep_input(x_nchw):
    """NCHW uint8 -> (B, 4, 121, 16C) uint8: space-to-depth(4) + stride-2 parity classes.

    Xc[b, r*2+s, u*11+v, (dh*4+dw)*C + c] == x[b, c, 8u+4r+dh, 8v+4s+dw]
    """
    B, C, _, _ = x_nchw.shape
    x = jnp.transpose(x_nchw, (0, 2, 3, 1))                       # (B, 84, 84, C)
    x = x.reshape(B, 21, 4, 21, 4, C).transpose(0, 1, 3, 2, 4, 5)
    x = x.reshape(B, 21, 21, 16 * C)                              # space-to-depth(4)
    x = jnp.pad(x, ((0, 0), (0, 1), (0, 1), (0, 0)))              # 21 -> 22 (pad never read)
    x = x.reshape(B, 11, 2, 11, 2, 16 * C).transpose(0, 2, 4, 1, 3, 5)
    return x.reshape(B, 4, 121, 16 * C)


def _prep_weights(params):
    """HWIO conv weights -> matmul layouts matching the kernel's patch ordering (bf16)."""
    C = params["w1"].shape[2]
    # layer 1: fold the /255 input scale into the weights; match s2d(4) + 2x2-tap layout.
    w1 = params["w1"].astype(jnp.float32) / 255.0                 # (8, 8, C, 32)
    w1 = w1.reshape(2, 4, 2, 4, C, 32).transpose(0, 2, 1, 3, 4, 5).reshape(64 * C, 32)
    # layer 2: (parity class (p,q), 2x2 tap (jh,jw)) ordering, ih = 2*jh + p.
    w2 = params["w2"].astype(jnp.float32)                         # (4, 4, 32, 64)
    w2 = w2.reshape(2, 2, 2, 2, 32, 64).transpose(1, 3, 0, 2, 4, 5).reshape(512, 64)
    # layer 3: plain HWIO flatten.
    w3 = params["w3"].astype(jnp.float32).reshape(9 * 64, 64)
    b1 = params["b1"].reshape(1, 32).astype(jnp.float32)
    b2 = params["b2"].reshape(1, 64).astype(jnp.float32)
    b3 = params["b3"].reshape(1, 64).astype(jnp.float32)
    return (w1.astype(jnp.bfloat16), b1, w2.astype(jnp.bfloat16), b2,
            w3.astype(jnp.bfloat16), b3)


def dqn_base_forward(x_nchw, params):
    """Replicates DQNBase.forward: fx = x.float()/255; conv stack; NCHW-order flatten."""
    B, C, H, W = x_nchw.shape
    assert (H, W) == (84, 84), "DQNBase asserts a 7x7x64 embedding (84x84 input)"
    xc = _prep_input(x_nchw)
    w1, b1, w2, b2, w3, b3 = _prep_weights(params)
    K1 = 64 * C

    out = pl.pallas_call(
        _make_trunk_kernel(C),
        out_shape=jax.ShapeDtypeStruct((B, 49, 64), jnp.float32),
        grid=(B,),
        in_specs=[
            pl.BlockSpec((1, 4, 121, 16 * C), lambda b: (b, 0, 0, 0)),  # uint8 image block
            pl.BlockSpec((K1, 32), lambda b: (0, 0)),                   # w1 (bf16)
            pl.BlockSpec((1, 32), lambda b: (0, 0)),                    # b1
            pl.BlockSpec((512, 64), lambda b: (0, 0)),                  # w2 (bf16)
            pl.BlockSpec((1, 64), lambda b: (0, 0)),                    # b2
            pl.BlockSpec((576, 64), lambda b: (0, 0)),                  # w3 (bf16)
            pl.BlockSpec((1, 64), lambda b: (0, 0)),                    # b3
        ],
        out_specs=pl.BlockSpec((1, 49, 64), lambda b: (b, 0, 0)),
        scratch_shapes=[
            pltpu.VMEM((4, 121, 16 * C), jnp.float32),   # f32 image (parity classes)
            pltpu.VMEM((440, K1), jnp.float32),          # layer-1 patch matrix
            pltpu.VMEM((440, 32), jnp.float32),          # h1 (pitched rows)
            pltpu.VMEM((97, 512), jnp.float32),          # layer-2 patch matrix
            pltpu.VMEM((97, 64), jnp.float32),           # h2 (pitched rows)
            pltpu.VMEM((73, 576), jnp.float32),          # layer-3 patch matrix
        ],
        compiler_params=pltpu.CompilerParams(
            dimension_semantics=("parallel",),           # batch split across TCs (v7x)
            vmem_limit_bytes=32 * 1024 * 1024),          # explicit, safe on v7x's 64 MiB
    )(xc, w1, b1, w2, b2, w3, b3)

    # PyTorch's .view(B, -1) flattens NCHW -> channel-major order.
    return jnp.transpose(out, (0, 2, 1)).reshape(B, 64 * 49)


# --------------------------- deterministic init --------------------------- #
def init_params(key, num_channels):
    def conv_init(k, kh, kw, cin, cout):
        kw_key, kb_key = jax.random.split(k)
        fan_in = kh * kw * cin
        bound = 1.0 / jnp.sqrt(fan_in)            # PyTorch Conv2d default-ish uniform
        w = jax.random.uniform(kw_key, (kh, kw, cin, cout), jnp.float32, -bound, bound)
        b = jax.random.uniform(kb_key, (cout,), jnp.float32, -bound, bound)
        return w, b

    k1, k2, k3 = jax.random.split(key, 3)
    w1, b1 = conv_init(k1, 8, 8, num_channels, 32)
    w2, b2 = conv_init(k2, 4, 4, 32, 64)
    w3, b3 = conv_init(k3, 3, 3, 64, 64)
    return {"w1": w1, "b1": b1, "w2": w2, "b2": b2, "w3": w3, "b3": b3}


# ------------------------- pure-JAX reference (f32) ------------------------ #
@jax.jit
def _reference_forward(x_nchw, params):
    x = jnp.transpose(x_nchw.astype(jnp.float32) / 255.0, (0, 2, 3, 1))
    dn = ("NHWC", "HWIO", "NHWC")
    h = x
    for w, b, s in ((params["w1"], params["b1"], 4),
                    (params["w2"], params["b2"], 2),
                    (params["w3"], params["b3"], 1)):
        h = jax.lax.conv_general_dilated(h, w, (s, s), "VALID", dimension_numbers=dn)
        h = jnp.maximum(h + b, 0.0)
    return jnp.transpose(h, (0, 3, 1, 2)).reshape(x.shape[0], -1)


# ---------------------------------- main ---------------------------------- #
if __name__ == "__main__":
    key = jax.random.PRNGKey(0)
    k_params, k_x = jax.random.split(key)

    num_channels = 4
    batch = 2
    # Spatial size must be 84x84 so the conv stack yields 7x7x64 (module asserts this).
    x = jax.random.randint(k_x, (batch, num_channels, 84, 84), 0, 256, dtype=jnp.int32)
    x = x.astype(jnp.uint8)

    params = init_params(k_params, num_channels)

    fwd = jax.jit(dqn_base_forward)
    out = jax.block_until_ready(fwd(x, params))

    assert out.shape == (batch, 7 * 7 * 64)
    assert out.dtype == jnp.float32

    # Numerical check against the f32 XLA reference (bf16 MXU -> loose tolerance).
    ref = jax.block_until_ready(_reference_forward(x, params))
    np.testing.assert_allclose(np.asarray(out), np.asarray(ref), rtol=2e-2, atol=2e-2)

    print("KERNEL_OK")
</pallas_src>

<mosaic_0001>
module attributes {stable_mosaic.version = 11 : i64} {
  func.func @kernel(%arg0: i32, %arg1: memref<1x4x121x64xi8, #tpu.memory_space<vmem>>, %arg2: memref<256x32xbf16, #tpu.memory_space<vmem>>, %arg3: memref<1x32xf32, #tpu.memory_space<vmem>>, %arg4: memref<512x64xbf16, #tpu.memory_space<vmem>>, %arg5: memref<1x64xf32, #tpu.memory_space<vmem>>, %arg6: memref<576x64xbf16, #tpu.memory_space<vmem>>, %arg7: memref<1x64xf32, #tpu.memory_space<vmem>>, %arg8: memref<1x49x64xf32, #tpu.memory_space<vmem>>, %arg9: memref<4x121x64xf32, #tpu.memory_space<vmem>>, %arg10: memref<440x256xf32, #tpu.memory_space<vmem>>, %arg11: memref<440x32xf32, #tpu.memory_space<vmem>>, %arg12: memref<97x512xf32, #tpu.memory_space<vmem>>, %arg13: memref<97x64xf32, #tpu.memory_space<vmem>>, %arg14: memref<73x576xf32, #tpu.memory_space<vmem>>) attributes {dimension_semantics = [#tpu.dimension_semantics<parallel>], iteration_bounds = array<i64: 2>, scalar_prefetch = 0 : i64, scratch_operands = 6 : i64, tpu.core_type = #tpu.core_type<tc>, window_params = [{transform_indices = @transform_0, window_bounds = array<i64: 1, 4, 121, 64>}, {pipeline_mode = #tpu.pipeline_mode<synchronous>, transform_indices = @transform_1, window_bounds = array<i64: 256, 32>}, {pipeline_mode = #tpu.pipeline_mode<synchronous>, transform_indices = @transform_2, window_bounds = array<i64: 1, 32>}, {pipeline_mode = #tpu.pipeline_mode<synchronous>, transform_indices = @transform_3, window_bounds = array<i64: 512, 64>}, {pipeline_mode = #tpu.pipeline_mode<synchronous>, transform_indices = @transform_4, window_bounds = array<i64: 1, 64>}, {pipeline_mode = #tpu.pipeline_mode<synchronous>, transform_indices = @transform_5, window_bounds = array<i64: 576, 64>}, {pipeline_mode = #tpu.pipeline_mode<synchronous>, transform_indices = @transform_6, window_bounds = array<i64: 1, 64>}, {transform_indices = @transform_7, window_bounds = array<i64: 1, 49, 64>}]} {
    %c0 = arith.constant 0 : index
    %c0_0 = arith.constant 0 : index
    %c0_1 = arith.constant 0 : index
    %c0_2 = arith.constant 0 : index
    %0 = vector.load %arg1[%c0, %c0_0, %c0_1, %c0_2] : memref<1x4x121x64xi8, #tpu.memory_space<vmem>>, vector<1x4x121x64xi8>
    %1 = vector.shape_cast %0 : vector<1x4x121x64xi8> to vector<4x121x64xi8>
    %2 = arith.uitofp %1 : vector<4x121x64xi8> to vector<4x121x64xf32>
    %c0_3 = arith.constant 0 : index
    %c0_4 = arith.constant 0 : index
    %c0_5 = arith.constant 0 : index
    %3 = vector.load %arg9[%c0_3, %c0_4, %c0_5] : memref<4x121x64xf32, #tpu.memory_space<vmem>>, vector<4x121x64xf32>
    tpu.vector_store %arg9[%c0_3, %c0_4, %c0_5], %2 {strides = array<i32>} : memref<4x121x64xf32, #tpu.memory_space<vmem>>, vector<4x121x64xf32>,
    %cst = arith.constant 0.000000e+00 : f32
    %4 = vector.broadcast %cst : f32 to vector<1x256xf32>
    %c109 = arith.constant 109 : index
    %c0_6 = arith.constant 0 : index
    %5 = vector.load %arg10[%c109, %c0_6] : memref<440x256xf32, #tpu.memory_space<vmem>>, vector<1x256xf32>
    tpu.vector_store %arg10[%c109, %c0_6], %4 {strides = array<i32>} : memref<440x256xf32, #tpu.memory_space<vmem>>, vector<1x256xf32>,
    %c0_7 = arith.constant 0 : index
    %c0_8 = arith.constant 0 : index
    %c0_9 = arith.constant 0 : index
    %6 = vector.load %arg9[%c0_7, %c0_8, %c0_9] : memref<4x121x64xf32, #tpu.memory_space<vmem>>, vector<1x109x64xf32>
    %7 = vector.shape_cast %6 : vector<1x109x64xf32> to vector<109x64xf32>
    %c0_10 = arith.constant 0 : index
    %c0_11 = arith.constant 0 : index
    %8 = vector.load %arg10[%c0_10, %c0_11] : memref<440x256xf32, #tpu.memory_space<vmem>>, vector<109x64xf32>
    tpu.vector_store %arg10[%c0_10, %c0_11], %7 {strides = array<i32>} : memref<440x256xf32, #tpu.memory_space<vmem>>, vector<109x64xf32>,
    %c1 = arith.constant 1 : index
    %c0_12 = arith.constant 0 : index
    %c0_13 = arith.constant 0 : index
    %9 = vector.load %arg9[%c1, %c0_12, %c0_13] : memref<4x121x64xf32, #tpu.memory_space<vmem>>, vector<1x109x64xf32>
    %10 = vector.shape_cast %9 : vector<1x109x64xf32> to vector<109x64xf32>
    %c0_14 = arith.constant 0 : index
    %c64 = arith.constant 64 : index
    %11 = vector.load %arg10[%c0_14, %c64] : memref<440x256xf32, #tpu.memory_space<vmem>>, vector<109x64xf32>
    tpu.vector_store %arg10[%c0_14, %c64], %10 {strides = array<i32>} : memref<440x256xf32, #tpu.memory_space<vmem>>, vector<109x64xf32>,
    %c2 = arith.constant 2 : index
    %c0_15 = arith.constant 0 : index
    %c0_16 = arith.constant 0 : index
    %12 = vector.load %arg9[%c2, %c0_15, %c0_16] : memref<4x121x64xf32, #tpu.memory_space<vmem>>, vector<1x109x64xf32>
    %13 = vector.shape_cast %12 : vector<1x109x64xf32> to vector<109x64xf32>
    %c0_17 = arith.constant 0 : index
    %c128 = arith.constant 128 : index
    %14 = vector.load %arg10[%c0_17, %c128] : memref<440x256xf32, #tpu.memory_space<vmem>>, vector<109x64xf32>
    tpu.vector_store %arg10[%c0_17, %c128], %13 {strides = array<i32>} : memref<440x256xf32, #tpu.memory_space<vmem>>, vector<109x64xf32>,
    %c3 = arith.constant 3 : index
    %c0_18 = arith.constant 0 : index
    %c0_19 = arith.constant 0 : index
    %15 = vector.load %arg9[%c3, %c0_18, %c0_19] : memref<4x121x64xf32, #tpu.memory_space<vmem>>, vector<1x109x64xf32>
    %16 = vector.shape_cast %15 : vector<1x109x64xf32> to vector<109x64xf32>
    %c0_20 = arith.constant 0 : index
    %c192 = arith.constant 192 : index
    %17 = vector.load %arg10[%c0_20, %c192] : memref<440x256xf32, #tpu.memory_space<vmem>>, vector<109x64xf32>
    tpu.vector_store %arg10[%c0_20, %c192], %16 {strides = array<i32>} : memref<440x256xf32, #tpu.memory_space<vmem>>, vector<109x64xf32>,
    %cst_21 = arith.constant 0.000000e+00 : f32
    %18 = vector.broadcast %cst_21 : f32 to vector<1x256xf32>
    %c219 = arith.constant 219 : index
    %c0_22 = arith.constant 0 : index
    %19 = vector.load %arg10[%c219, %c0_22] : memref<440x256xf32, #tpu.memory_space<vmem>>, vector<1x256xf32>
    tpu.vector_store %arg10[%c219, %c0_22], %18 {strides = array<i32>} : memref<440x256xf32, #tpu.memory_space<vmem>>, vector<1x256xf32>,
    %c1_23 = arith.constant 1 : index
    %c0_24 = arith.constant 0 : index
    %c0_25 = arith.constant 0 : index
    %20 = vector.load %arg9[%c1_23, %c0_24, %c0_25] : memref<4x121x64xf32, #tpu.memory_space<vmem>>, vector<1x109x64xf32>
    %21 = vector.shape_cast %20 : vector<1x109x64xf32> to vector<109x64xf32>
    %c110 = arith.constant 110 : index
    %c0_26 = arith.constant 0 : index
    %22 = vector.load %arg10[%c110, %c0_26] : memref<440x256xf32, #tpu.memory_space<vmem>>, vector<109x64xf32>
    tpu.vector_store %arg10[%c110, %c0_26], %21 {strides = array<i32>} : memref<440x256xf32, #tpu.memory_space<vmem>>, vector<109x64xf32>,
    %c0_27 = arith.constant 0 : index
    %c1_28 = arith.constant 1 : index
    %c0_29 = arith.constant 0 : index
    %23 = vector.load %arg9[%c0_27, %c1_28, %c0_29] : memref<4x121x64xf32, #tpu.memory_space<vmem>>, vector<1x109x64xf32>
    %24 = vector.shape_cast %23 : vector<1x109x64xf32> to vector<109x64xf32>
    %c110_30 = arith.constant 110 : index
    %c64_31 = arith.constant 64 : index
    %25 = vector.load %arg10[%c110_30, %c64_31] : memref<440x256xf32, #tpu.memory_space<vmem>>, vector<109x64xf32>
    tpu.vector_store %arg10[%c110_30, %c64_31], %24 {strides = array<i32>} : memref<440x256xf32, #tpu.memory_space<vmem>>, vector<109x64xf32>,
    %c3_32 = arith.constant 3 : index
    %c0_33 = arith.constant 0 : index
    %c0_34 = arith.constant 0 : index
    %26 = vector.load %arg9[%c3_32, %c0_33, %c0_34] : memref<4x121x64xf32, #tpu.memory_space<vmem>>, vector<1x109x64xf32>
    %27 = vector.shape_cast %26 : vector<1x109x64xf32> to vector<109x64xf32>
    %c110_35 = arith.constant 110 : index
    %c128_36 = arith.constant 128 : index
    %28 = vector.load %arg10[%c110_35, %c128_36] : memref<440x256xf32, #tpu.memory_space<vmem>>, vector<109x64xf32>
    tpu.vector_store %arg10[%c110_35, %c128_36], %27 {strides = array<i32>} : memref<440x256xf32, #tpu.memory_space<vmem>>, vector<109x64xf32>,
    %c2_37 = arith.constant 2 : index
    %c1_38 = arith.constant 1 : index
    %c0_39 = arith.constant 0 : index
    %29 = vector.load %arg9[%c2_37, %c1_38, %c0_39] : memref<4x121x64xf32, #tpu.memory_space<vmem>>, vector<1x109x64xf32>
    %30 = vector.shape_cast %29 : vector<1x109x64xf32> to vector<109x64xf32>
    %c110_40 = arith.constant 110 : index
    %c192_41 = arith.constant 192 : index
    %31 = vector.load %arg10[%c110_40, %c192_41] : memref<440x256xf32, #tpu.memory_space<vmem>>, vector<109x64xf32>
    tpu.vector_store %arg10[%c110_40, %c192_41], %30 {strides = array<i32>} : memref<440x256xf32, #tpu.memory_space<vmem>>, vector<109x64xf32>,
    %cst_42 = arith.constant 0.000000e+00 : f32
    %32 = vector.broadcast %cst_42 : f32 to vector<1x256xf32>
    %c329 = arith.constant 329 : index
    %c0_43 = arith.constant 0 : index
    %33 = vector.load %arg10[%c329, %c0_43] : memref<440x256xf32, #tpu.memory_space<vmem>>, vector<1x256xf32>
    tpu.vector_store %arg10[%c329, %c0_43], %32 {strides = array<i32>} : memref<440x256xf32, #tpu.memory_space<vmem>>, vector<1x256xf32>,
    %c2_44 = arith.constant 2 : index
    %c0_45 = arith.constant 0 : index
    %c0_46 = arith.constant 0 : index
    %34 = vector.load %arg9[%c2_44, %c0_45, %c0_46] : memref<4x121x64xf32, #tpu.memory_space<vmem>>, vector<1x109x64xf32>
    %35 = vector.shape_cast %34 : vector<1x109x64xf32> to vector<109x64xf32>
    %c220 = arith.constant 220 : index
    %c0_47 = arith.constant 0 : index
    %36 = vector.load %arg10[%c220, %c0_47] : memref<440x256xf32, #tpu.memory_space<vmem>>, vector<109x64xf32>
    tpu.vector_store %arg10[%c220, %c0_47], %35 {strides = array<i32>} : memref<440x256xf32, #tpu.memory_space<vmem>>, vector<109x64xf32>,
    %c3_48 = arith.constant 3 : index
    %c0_49 = arith.constant 0 : index
    %c0_50 = arith.constant 0 : index
    %37 = vector.load %arg9[%c3_48, %c0_49, %c0_50] : memref<4x121x64xf32, #tpu.memory_space<vmem>>, vector<1x109x64xf32>
    %38 = vector.shape_cast %37 : vector<1x109x64xf32> to vector<109x64xf32>
    %c220_51 = arith.constant 220 : index
    %c64_52 = arith.constant 64 : index
    %39 = vector.load %arg10[%c220_51, %c64_52] : memref<440x256xf32, #tpu.memory_space<vmem>>, vector<109x64xf32>
    tpu.vector_store %arg10[%c220_51, %c64_52], %38 {strides = array<i32>} : memref<440x256xf32, #tpu.memory_space<vmem>>, vector<109x64xf32>,
    %c0_53 = arith.constant 0 : index
    %c11 = arith.constant 11 : index
    %c0_54 = arith.constant 0 : index
    %40 = vector.load %arg9[%c0_53, %c11, %c0_54] : memref<4x121x64xf32, #tpu.memory_space<vmem>>, vector<1x109x64xf32>
    %41 = vector.shape_cast %40 : vector<1x109x64xf32> to vector<109x64xf32>
    %c220_55 = arith.constant 220 : index
    %c128_56 = arith.constant 128 : index
    %42 = vector.load %arg10[%c220_55, %c128_56] : memref<440x256xf32, #tpu.memory_space<vmem>>, vector<109x64xf32>
    tpu.vector_store %arg10[%c220_55, %c128_56], %41 {strides = array<i32>} : memref<440x256xf32, #tpu.memory_space<vmem>>, vector<109x64xf32>,
    %c1_57 = arith.constant 1 : index
    %c11_58 = arith.constant 11 : index
    %c0_59 = arith.constant 0 : index
    %43 = vector.load %arg9[%c1_57, %c11_58, %c0_59] : memref<4x121x64xf32, #tpu.memory_space<vmem>>, vector<1x109x64xf32>
    %44 = vector.shape_cast %43 : vector<1x109x64xf32> to vector<109x64xf32>
    %c220_60 = arith.constant 220 : index
    %c192_61 = arith.constant 192 : index
    %45 = vector.load %arg10[%c220_60, %c192_61] : memref<440x256xf32, #tpu.memory_space<vmem>>, vector<109x64xf32>
    tpu.vector_store %arg10[%c220_60, %c192_61], %44 {strides = array<i32>} : memref<440x256xf32, #tpu.memory_space<vmem>>, vector<109x64xf32>,
    %cst_62 = arith.constant 0.000000e+00 : f32
    %46 = vector.broadcast %cst_62 : f32 to vector<1x256xf32>
    %c439 = arith.constant 439 : index
    %c0_63 = arith.constant 0 : index
    %47 = vector.load %arg10[%c439, %c0_63] : memref<440x256xf32, #tpu.memory_space<vmem>>, vector<1x256xf32>
    tpu.vector_store %arg10[%c439, %c0_63], %46 {strides = array<i32>} : memref<440x256xf32, #tpu.memory_space<vmem>>, vector<1x256xf32>,
    %c3_64 = arith.constant 3 : index
    %c0_65 = arith.constant 0 : index
    %c0_66 = arith.constant 0 : index
    %48 = vector.load %arg9[%c3_64, %c0_65, %c0_66] : memref<4x121x64xf32, #tpu.memory_space<vmem>>, vector<1x109x64xf32>
    %49 = vector.shape_cast %48 : vector<1x109x64xf32> to vector<109x64xf32>
    %c330 = arith.constant 330 : index
    %c0_67 = arith.constant 0 : index
    %50 = vector.load %arg10[%c330, %c0_67] : memref<440x256xf32, #tpu.memory_space<vmem>>, vector<109x64xf32>
    tpu.vector_store %arg10[%c330, %c0_67], %49 {strides = array<i32>} : memref<440x256xf32, #tpu.memory_space<vmem>>, vector<109x64xf32>,
    %c2_68 = arith.constant 2 : index
    %c1_69 = arith.constant 1 : index
    %c0_70 = arith.constant 0 : index
    %51 = vector.load %arg9[%c2_68, %c1_69, %c0_70] : memref<4x121x64xf32, #tpu.memory_space<vmem>>, vector<1x109x64xf32>
    %52 = vector.shape_cast %51 : vector<1x109x64xf32> to vector<109x64xf32>
    %c330_71 = arith.constant 330 : index
    %c64_72 = arith.constant 64 : index
    %53 = vector.load %arg10[%c330_71, %c64_72] : memref<440x256xf32, #tpu.memory_space<vmem>>, vector<109x64xf32>
    tpu.vector_store %arg10[%c330_71, %c64_72], %52 {strides = array<i32>} : memref<440x256xf32, #tpu.memory_space<vmem>>, vector<109x64xf32>,
    %c1_73 = arith.constant 1 : index
    %c11_74 = arith.constant 11 : index
    %c0_75 = arith.constant 0 : index
    %54 = vector.load %arg9[%c1_73, %c11_74, %c0_75] : memref<4x121x64xf32, #tpu.memory_space<vmem>>, vector<1x109x64xf32>
    %55 = vector.shape_cast %54 : vector<1x109x64xf32> to vector<109x64xf32>
    %c330_76 = arith.constant 330 : index
    %c128_77 = arith.constant 128 : index
    %56 = vector.load %arg10[%c330_76, %c128_77] : memref<440x256xf32, #tpu.memory_space<vmem>>, vector<109x64xf32>
    tpu.vector_store %arg10[%c330_76, %c128_77], %55 {strides = array<i32>} : memref<440x256xf32, #tpu.memory_space<vmem>>, vector<109x64xf32>,
    %c0_78 = arith.constant 0 : index
    %c12 = arith.constant 12 : index
    %c0_79 = arith.constant 0 : index
    %57 = vector.load %arg9[%c0_78, %c12, %c0_79] : memref<4x121x64xf32, #tpu.memory_space<vmem>>, vector<1x109x64xf32>
    %58 = vector.shape_cast %57 : vector<1x109x64xf32> to vector<109x64xf32>
    %c330_80 = arith.constant 330 : index
    %c192_81 = arith.constant 192 : index
    %59 = vector.load %arg10[%c330_80, %c192_81] : memref<440x256xf32, #tpu.memory_space<vmem>>, vector<109x64xf32>
    tpu.vector_store %arg10[%c330_80, %c192_81], %58 {strides = array<i32>} : memref<440x256xf32, #tpu.memory_space<vmem>>, vector<109x64xf32>,
    %c0_82 = arith.constant 0 : index
    %c0_83 = arith.constant 0 : index
    %60 = vector.load %arg10[%c0_82, %c0_83] : memref<440x256xf32, #tpu.memory_space<vmem>>, vector<440x256xf32>
    %61 = arith.truncf %60 : vector<440x256xf32> to vector<440x256xbf16>
    %c0_84 = arith.constant 0 : index
    %c0_85 = arith.constant 0 : index
    %62 = vector.load %arg2[%c0_84, %c0_85] : memref<256x32xbf16, #tpu.memory_space<vmem>>, vector<256x32xbf16>
    %cst_86 = arith.constant dense<0.000000e+00> : vector<440x32xf32>
    %63 = tpu.matmul %61, %62, %cst_86 {dimension_numbers = #tpu.dot_dimension_numbers<[1], [0], [0], [1], [0, 0, 1, 1], [], []>} : vector<440x256xbf16>, vector<256x32xbf16>, vector<440x32xf32> -> vector<440x32xf32>
    %c0_87 = arith.constant 0 : index
    %c0_88 = arith.constant 0 : index
    %64 = vector.load %arg3[%c0_87, %c0_88] : memref<1x32xf32, #tpu.memory_space<vmem>>, vector<1x32xf32>
    %65 = vector.broadcast %64 : vector<1x32xf32> to vector<440x32xf32>
    %66 = arith.addf %63, %65 : vector<440x32xf32>
    %cst_89 = arith.constant 0.000000e+00 : f32
    %67 = vector.broadcast %cst_89 : f32 to vector<440x32xf32>
    %68 = arith.maximumf %66, %67 : vector<440x32xf32>
    %c0_90 = arith.constant 0 : index
    %c0_91 = arith.constant 0 : index
    %69 = vector.load %arg11[%c0_90, %c0_91] : memref<440x32xf32, #tpu.memory_space<vmem>>, vector<440x32xf32>
    tpu.vector_store %arg11[%c0_90, %c0_91], %68 {strides = array<i32>} : memref<440x32xf32, #tpu.memory_space<vmem>>, vector<440x32xf32>,
    %c0_92 = arith.constant 0 : index
    %c0_93 = arith.constant 0 : index
    %70 = vector.load %arg11[%c0_92, %c0_93] : memref<440x32xf32, #tpu.memory_space<vmem>>, vector<97x32xf32>
    %c0_94 = arith.constant 0 : index
    %c0_95 = arith.constant 0 : index
    %71 = vector.load %arg12[%c0_94, %c0_95] : memref<97x512xf32, #tpu.memory_space<vmem>>, vector<97x32xf32>
    tpu.vector_store %arg12[%c0_94, %c0_95], %70 {strides = array<i32>} : memref<97x512xf32, #tpu.memory_space<vmem>>, vector<97x32xf32>,
    %c1_96 = arith.constant 1 : index
    %c0_97 = arith.constant 0 : index
    %72 = vector.load %arg11[%c1_96, %c0_97] : memref<440x32xf32, #tpu.memory_space<vmem>>, vector<97x32xf32>
    %c0_98 = arith.constant 0 : index
    %c32 = arith.constant 32 : index
    %73 = vector.load %arg12[%c0_98, %c32] : memref<97x512xf32, #tpu.memory_space<vmem>>, vector<97x32xf32>
    tpu.vector_store %arg12[%c0_98, %c32], %72 {strides = array<i32>} : memref<97x512xf32, #tpu.memory_space<vmem>>, vector<97x32xf32>,
    %c11_99 = arith.constant 11 : index
    %c0_100 = arith.constant 0 : index
    %74 = vector.load %arg11[%c11_99, %c0_100] : memref<440x32xf32, #tpu.memory_space<vmem>>, vector<97x32xf32>
    %c0_101 = arith.constant 0 : index
    %c64_102 = arith.constant 64 : index
    %75 = vector.load %arg12[%c0_101, %c64_102] : memref<97x512xf32, #tpu.memory_space<vmem>>, vector<97x32xf32>
    tpu.vector_store %arg12[%c0_101, %c64_102], %74 {strides = array<i32>} : memref<97x512xf32, #tpu.memory_space<vmem>>, vector<97x32xf32>,
    %c12_103 = arith.constant 12 : index
    %c0_104 = arith.constant 0 : index
    %76 = vector.load %arg11[%c12_103, %c0_104] : memref<440x32xf32, #tpu.memory_space<vmem>>, vector<97x32xf32>
    %c0_105 = arith.constant 0 : index
    %c96 = arith.constant 96 : index
    %77 = vector.load %arg12[%c0_105, %c96] : memref<97x512xf32, #tpu.memory_space<vmem>>, vector<97x32xf32>
    tpu.vector_store %arg12[%c0_105, %c96], %76 {strides = array<i32>} : memref<97x512xf32, #tpu.memory_space<vmem>>, vector<97x32xf32>,
    %c110_106 = arith.constant 110 : index
    %c0_107 = arith.constant 0 : index
    %78 = vector.load %arg11[%c110_106, %c0_107] : memref<440x32xf32, #tpu.memory_space<vmem>>, vector<97x32xf32>
    %c0_108 = arith.constant 0 : index
    %c128_109 = arith.constant 128 : index
    %79 = vector.load %arg12[%c0_108, %c128_109] : memref<97x512xf32, #tpu.memory_space<vmem>>, vector<97x32xf32>
    tpu.vector_store %arg12[%c0_108, %c128_109], %78 {strides = array<i32>} : memref<97x512xf32, #tpu.memory_space<vmem>>, vector<97x32xf32>,
    %c111 = arith.constant 111 : index
    %c0_110 = arith.constant 0 : index
    %80 = vector.load %arg11[%c111, %c0_110] : memref<440x32xf32, #tpu.memory_space<vmem>>, vector<97x32xf32>
    %c0_111 = arith.constant 0 : index
    %c160 = arith.constant 160 : index
    %81 = vector.load %arg12[%c0_111, %c160] : memref<97x512xf32, #tpu.memory_space<vmem>>, vector<97x32xf32>
    tpu.vector_store %arg12[%c0_111, %c160], %80 {strides = array<i32>} : memref<97x512xf32, #tpu.memory_space<vmem>>, vector<97x32xf32>,
    %c121 = arith.constant 121 : index
    %c0_112 = arith.constant 0 : index
    %82 = vector.load %arg11[%c121, %c0_112] : memref<440x32xf32, #tpu.memory_space<vmem>>, vector<97x32xf32>
    %c0_113 = arith.constant 0 : index
    %c192_114 = arith.constant 192 : index
    %83 = vector.load %arg12[%c0_113, %c192_114] : memref<97x512xf32, #tpu.memory_space<vmem>>, vector<97x32xf32>
    tpu.vector_store %arg12[%c0_113, %c192_114], %82 {strides = array<i32>} : memref<97x512xf32, #tpu.memory_space<vmem>>, vector<97x32xf32>,
    %c122 = arith.constant 122 : index
    %c0_115 = arith.constant 0 : index
    %84 = vector.load %arg11[%c122, %c0_115] : memref<440x32xf32, #tpu.memory_space<vmem>>, vector<97x32xf32>
    %c0_116 = arith.constant 0 : index
    %c224 = arith.constant 224 : index
    %85 = vector.load %arg12[%c0_116, %c224] : memref<97x512xf32, #tpu.memory_space<vmem>>, vector<97x32xf32>
    tpu.vector_store %arg12[%c0_116, %c224], %84 {strides = array<i32>} : memref<97x512xf32, #tpu.memory_space<vmem>>, vector<97x32xf32>,
    %c220_117 = arith.constant 220 : index
    %c0_118 = arith.constant 0 : index
    %86 = vector.load %arg11[%c220_117, %c0_118] : memref<440x32xf32, #tpu.memory_space<vmem>>, vector<97x32xf32>
    %c0_119 = arith.constant 0 : index
    %c256 = arith.constant 256 : index
    %87 = vector.load %arg12[%c0_119, %c256] : memref<97x512xf32, #tpu.memory_space<vmem>>, vector<97x32xf32>
    tpu.vector_store %arg12[%c0_119, %c256], %86 {strides = array<i32>} : memref<97x512xf32, #tpu.memory_space<vmem>>, vector<97x32xf32>,
    %c221 = arith.constant 221 : index
    %c0_120 = arith.constant 0 : index
    %88 = vector.load %arg11[%c221, %c0_120] : memref<440x32xf32, #tpu.memory_space<vmem>>, vector<97x32xf32>
    %c0_121 = arith.constant 0 : index
    %c288 = arith.constant 288 : index
    %89 = vector.load %arg12[%c0_121, %c288] : memref<97x512xf32, #tpu.memory_space<vmem>>, vector<97x32xf32>
    tpu.vector_store %arg12[%c0_121, %c288], %88 {strides = array<i32>} : memref<97x512xf32, #tpu.memory_space<vmem>>, vector<97x32xf32>,
    %c231 = arith.constant 231 : index
    %c0_122 = arith.constant 0 : index
    %90 = vector.load %arg11[%c231, %c0_122] : memref<440x32xf32, #tpu.memory_space<vmem>>, vector<97x32xf32>
    %c0_123 = arith.constant 0 : index
    %c320 = arith.constant 320 : index
    %91 = vector.load %arg12[%c0_123, %c320] : memref<97x512xf32, #tpu.memory_space<vmem>>, vector<97x32xf32>
    tpu.vector_store %arg12[%c0_123, %c320], %90 {strides = array<i32>} : memref<97x512xf32, #tpu.memory_space<vmem>>, vector<97x32xf32>,
    %c232 = arith.constant 232 : index
    %c0_124 = arith.constant 0 : index
    %92 = vector.load %arg11[%c232, %c0_124] : memref<440x32xf32, #tpu.memory_space<vmem>>, vector<97x32xf32>
    %c0_125 = arith.constant 0 : index
    %c352 = arith.constant 352 : index
    %93 = vector.load %arg12[%c0_125, %c352] : memref<97x512xf32, #tpu.memory_space<vmem>>, vector<97x32xf32>
    tpu.vector_store %arg12[%c0_125, %c352], %92 {strides = array<i32>} : memref<97x512xf32, #tpu.memory_space<vmem>>, vector<97x32xf32>,
    %c330_126 = arith.constant 330 : index
    %c0_127 = arith.constant 0 : index
    %94 = vector.load %arg11[%c330_126, %c0_127] : memref<440x32xf32, #tpu.memory_space<vmem>>, vector<97x32xf32>
    %c0_128 = arith.constant 0 : index
    %c384 = arith.constant 384 : index
    %95 = vector.load %arg12[%c0_128, %c384] : memref<97x512xf32, #tpu.memory_space<vmem>>, vector<97x32xf32>
    tpu.vector_store %arg12[%c0_128, %c384], %94 {strides = array<i32>} : memref<97x512xf32, #tpu.memory_space<vmem>>, vector<97x32xf32>,
    %c331 = arith.constant 331 : index
    %c0_129 = arith.constant 0 : index
    %96 = vector.load %arg11[%c331, %c0_129] : memref<440x32xf32, #tpu.memory_space<vmem>>, vector<97x32xf32>
    %c0_130 = arith.constant 0 : index
    %c416 = arith.constant 416 : index
    %97 = vector.load %arg12[%c0_130, %c416] : memref<97x512xf32, #tpu.memory_space<vmem>>, vector<97x32xf32>
    tpu.vector_store %arg12[%c0_130, %c416], %96 {strides = array<i32>} : memref<97x512xf32, #tpu.memory_space<vmem>>, vector<97x32xf32>,
    %c341 = arith.constant 341 : index
    %c0_131 = arith.constant 0 : index
    %98 = vector.load %arg11[%c341, %c0_131] : memref<440x32xf32, #tpu.memory_space<vmem>>, vector<97x32xf32>
    %c0_132 = arith.constant 0 : index
    %c448 = arith.constant 448 : index
    %99 = vector.load %arg12[%c0_132, %c448] : memref<97x512xf32, #tpu.memory_space<vmem>>, vector<97x32xf32>
    tpu.vector_store %arg12[%c0_132, %c448], %98 {strides = array<i32>} : memref<97x512xf32, #tpu.memory_space<vmem>>, vector<97x32xf32>,
    %c342 = arith.constant 342 : index
    %c0_133 = arith.constant 0 : index
    %100 = vector.load %arg11[%c342, %c0_133] : memref<440x32xf32, #tpu.memory_space<vmem>>, vector<97x32xf32>
    %c0_134 = arith.constant 0 : index
    %c480 = arith.constant 480 : index
    %101 = vector.load %arg12[%c0_134, %c480] : memref<97x512xf32, #tpu.memory_space<vmem>>, vector<97x32xf32>
    tpu.vector_store %arg12[%c0_134, %c480], %100 {strides = array<i32>} : memref<97x512xf32, #tpu.memory_space<vmem>>, vector<97x32xf32>,
    %c0_135 = arith.constant 0 : index
    %c0_136 = arith.constant 0 : index
    %102 = vector.load %arg12[%c0_135, %c0_136] : memref<97x512xf32, #tpu.memory_space<vmem>>, vector<97x512xf32>
    %103 = arith.truncf %102 : vector<97x512xf32> to vector<97x512xbf16>
    %c0_137 = arith.constant 0 : index
    %c0_138 = arith.constant 0 : index
    %104 = vector.load %arg4[%c0_137, %c0_138] : memref<512x64xbf16, #tpu.memory_space<vmem>>, vector<512x64xbf16>
    %cst_139 = arith.constant dense<0.000000e+00> : vector<97x64xf32>
    %105 = tpu.matmul %103, %104, %cst_139 {dimension_numbers = #tpu.dot_dimension_numbers<[1], [0], [0], [1], [0, 0, 1, 1], [], []>} : vector<97x512xbf16>, vector<512x64xbf16>, vector<97x64xf32> -> vector<97x64xf32>
    %c0_140 = arith.constant 0 : index
    %c0_141 = arith.constant 0 : index
    %106 = vector.load %arg5[%c0_140, %c0_141] : memref<1x64xf32, #tpu.memory_space<vmem>>, vector<1x64xf32>
    %107 = vector.broadcast %106 : vector<1x64xf32> to vector<97x64xf32>
    %108 = arith.addf %105, %107 : vector<97x64xf32>
    %cst_142 = arith.constant 0.000000e+00 : f32
    %109 = vector.broadcast %cst_142 : f32 to vector<97x64xf32>
    %110 = arith.maximumf %108, %109 : vector<97x64xf32>
    %c0_143 = arith.constant 0 : index
    %c0_144 = arith.constant 0 : index
    %111 = vector.load %arg13[%c0_143, %c0_144] : memref<97x64xf32, #tpu.memory_space<vmem>>, vector<97x64xf32>
    tpu.vector_store %arg13[%c0_143, %c0_144], %110 {strides = array<i32>} : memref<97x64xf32, #tpu.memory_space<vmem>>, vector<97x64xf32>,
    %c0_145 = arith.constant 0 : index
    %c0_146 = arith.constant 0 : index
    %112 = vector.load %arg13[%c0_145, %c0_146] : memref<97x64xf32, #tpu.memory_space<vmem>>, vector<73x64xf32>
    %c0_147 = arith.constant 0 : index
    %c0_148 = arith.constant 0 : index
    %113 = vector.load %arg14[%c0_147, %c0_148] : memref<73x576xf32, #tpu.memory_space<vmem>>, vector<73x64xf32>
    tpu.vector_store %arg14[%c0_147, %c0_148], %112 {strides = array<i32>} : memref<73x576xf32, #tpu.memory_space<vmem>>, vector<73x64xf32>,
    %c1_149 = arith.constant 1 : index
    %c0_150 = arith.constant 0 : index
    %114 = vector.load %arg13[%c1_149, %c0_150] : memref<97x64xf32, #tpu.memory_space<vmem>>, vector<73x64xf32>
    %c0_151 = arith.constant 0 : index
    %c64_152 = arith.constant 64 : index
    %115 = vector.load %arg14[%c0_151, %c64_152] : memref<73x576xf32, #tpu.memory_space<vmem>>, vector<73x64xf32>
    tpu.vector_store %arg14[%c0_151, %c64_152], %114 {strides = array<i32>} : memref<73x576xf32, #tpu.memory_space<vmem>>, vector<73x64xf32>,
    %c2_153 = arith.constant 2 : index
    %c0_154 = arith.constant 0 : index
    %116 = vector.load %arg13[%c2_153, %c0_154] : memref<97x64xf32, #tpu.memory_space<vmem>>, vector<73x64xf32>
    %c0_155 = arith.constant 0 : index
    %c128_156 = arith.constant 128 : index
    %117 = vector.load %arg14[%c0_155, %c128_156] : memref<73x576xf32, #tpu.memory_space<vmem>>, vector<73x64xf32>
    tpu.vector_store %arg14[%c0_155, %c128_156], %116 {strides = array<i32>} : memref<73x576xf32, #tpu.memory_space<vmem>>, vector<73x64xf32>,
    %c11_157 = arith.constant 11 : index
    %c0_158 = arith.constant 0 : index
    %118 = vector.load %arg13[%c11_157, %c0_158] : memref<97x64xf32, #tpu.memory_space<vmem>>, vector<73x64xf32>
    %c0_159 = arith.constant 0 : index
    %c192_160 = arith.constant 192 : index
    %119 = vector.load %arg14[%c0_159, %c192_160] : memref<73x576xf32, #tpu.memory_space<vmem>>, vector<73x64xf32>
    tpu.vector_store %arg14[%c0_159, %c192_160], %118 {strides = array<i32>} : memref<73x576xf32, #tpu.memory_space<vmem>>, vector<73x64xf32>,
    %c12_161 = arith.constant 12 : index
    %c0_162 = arith.constant 0 : index
    %120 = vector.load %arg13[%c12_161, %c0_162] : memref<97x64xf32, #tpu.memory_space<vmem>>, vector<73x64xf32>
    %c0_163 = arith.constant 0 : index
    %c256_164 = arith.constant 256 : index
    %121 = vector.load %arg14[%c0_163, %c256_164] : memref<73x576xf32, #tpu.memory_space<vmem>>, vector<73x64xf32>
    tpu.vector_store %arg14[%c0_163, %c256_164], %120 {strides = array<i32>} : memref<73x576xf32, #tpu.memory_space<vmem>>, vector<73x64xf32>,
    %c13 = arith.constant 13 : index
    %c0_165 = arith.constant 0 : index
    %122 = vector.load %arg13[%c13, %c0_165] : memref<97x64xf32, #tpu.memory_space<vmem>>, vector<73x64xf32>
    %c0_166 = arith.constant 0 : index
    %c320_167 = arith.constant 320 : index
    %123 = vector.load %arg14[%c0_166, %c320_167] : memref<73x576xf32, #tpu.memory_space<vmem>>, vector<73x64xf32>
    tpu.vector_store %arg14[%c0_166, %c320_167], %122 {strides = array<i32>} : memref<73x576xf32, #tpu.memory_space<vmem>>, vector<73x64xf32>,
    %c22 = arith.constant 22 : index
    %c0_168 = arith.constant 0 : index
    %124 = vector.load %arg13[%c22, %c0_168] : memref<97x64xf32, #tpu.memory_space<vmem>>, vector<73x64xf32>
    %c0_169 = arith.constant 0 : index
    %c384_170 = arith.constant 384 : index
    %125 = vector.load %arg14[%c0_169, %c384_170] : memref<73x576xf32, #tpu.memory_space<vmem>>, vector<73x64xf32>
    tpu.vector_store %arg14[%c0_169, %c384_170], %124 {strides = array<i32>} : memref<73x576xf32, #tpu.memory_space<vmem>>, vector<73x64xf32>,
    %c23 = arith.constant 23 : index
    %c0_171 = arith.constant 0 : index
    %126 = vector.load %arg13[%c23, %c0_171] : memref<97x64xf32, #tpu.memory_space<vmem>>, vector<73x64xf32>
    %c0_172 = arith.constant 0 : index
    %c448_173 = arith.constant 448 : index
    %127 = vector.load %arg14[%c0_172, %c448_173] : memref<73x576xf32, #tpu.memory_space<vmem>>, vector<73x64xf32>
    tpu.vector_store %arg14[%c0_172, %c448_173], %126 {strides = array<i32>} : memref<73x576xf32, #tpu.memory_space<vmem>>, vector<73x64xf32>,
    %c24 = arith.constant 24 : index
    %c0_174 = arith.constant 0 : index
    %128 = vector.load %arg13[%c24, %c0_174] : memref<97x64xf32, #tpu.memory_space<vmem>>, vector<73x64xf32>
    %c0_175 = arith.constant 0 : index
    %c512 = arith.constant 512 : index
    %129 = vector.load %arg14[%c0_175, %c512] : memref<73x576xf32, #tpu.memory_space<vmem>>, vector<73x64xf32>
    tpu.vector_store %arg14[%c0_175, %c512], %128 {strides = array<i32>} : memref<73x576xf32, #tpu.memory_space<vmem>>, vector<73x64xf32>,
    %c0_176 = arith.constant 0 : index
    %c0_177 = arith.constant 0 : index
    %130 = vector.load %arg14[%c0_176, %c0_177] : memref<73x576xf32, #tpu.memory_space<vmem>>, vector<73x576xf32>
    %131 = arith.truncf %130 : vector<73x576xf32> to vector<73x576xbf16>
    %c0_178 = arith.constant 0 : index
    %c0_179 = arith.constant 0 : index
    %132 = vector.load %arg6[%c0_178, %c0_179] : memref<576x64xbf16, #tpu.memory_space<vmem>>, vector<576x64xbf16>
    %cst_180 = arith.constant dense<0.000000e+00> : vector<73x64xf32>
    %133 = tpu.matmul %131, %132, %cst_180 {dimension_numbers = #tpu.dot_dimension_numbers<[1], [0], [0], [1], [0, 0, 1, 1], [], []>} : vector<73x576xbf16>, vector<576x64xbf16>, vector<73x64xf32> -> vector<73x64xf32>
    %c0_181 = arith.constant 0 : index
    %c0_182 = arith.constant 0 : index
    %134 = vector.load %arg7[%c0_181, %c0_182] : memref<1x64xf32, #tpu.memory_space<vmem>>, vector<1x64xf32>
    %135 = vector.broadcast %134 : vector<1x64xf32> to vector<73x64xf32>
    %136 = arith.addf %133, %135 : vector<73x64xf32>
    %cst_183 = arith.constant 0.000000e+00 : f32
    %137 = vector.broadcast %cst_183 : f32 to vector<73x64xf32>
    %138 = arith.maximumf %136, %137 : vector<73x64xf32>
    %139 = vector.extract_strided_slice %138 {offsets = [0, 0], sizes = [7, 64], strides = [1, 1]} : vector<73x64xf32> to vector<7x64xf32>
    %c0_184 = arith.constant 0 : index
    %c0_185 = arith.constant 0 : index
    %c0_186 = arith.constant 0 : index
    %140 = vector.load %arg8[%c0_184, %c0_185, %c0_186] : memref<1x49x64xf32, #tpu.memory_space<vmem>>, vector<1x7x64xf32>
    %141 = vector.shape_cast %140 : vector<1x7x64xf32> to vector<7x64xf32>
    %142 = vector.shape_cast %139 : vector<7x64xf32> to vector<1x7x64xf32>
    tpu.vector_store %arg8[%c0_184, %c0_185, %c0_186], %142 {strides = array<i32>} : memref<1x49x64xf32, #tpu.memory_space<vmem>>, vector<1x7x64xf32>,
    %143 = vector.extract_strided_slice %138 {offsets = [11, 0], sizes = [7, 64], strides = [1, 1]} : vector<73x64xf32> to vector<7x64xf32>
    %c0_187 = arith.constant 0 : index
    %c7 = arith.constant 7 : index
    %c0_188 = arith.constant 0 : index
    %144 = vector.load %arg8[%c0_187, %c7, %c0_188] : memref<1x49x64xf32, #tpu.memory_space<vmem>>, vector<1x7x64xf32>
    %145 = vector.shape_cast %144 : vector<1x7x64xf32> to vector<7x64xf32>
    %146 = vector.shape_cast %143 : vector<7x64xf32> to vector<1x7x64xf32>
    tpu.vector_store %arg8[%c0_187, %c7, %c0_188], %146 {strides = array<i32>} : memref<1x49x64xf32, #tpu.memory_space<vmem>>, vector<1x7x64xf32>,
    %147 = vector.extract_strided_slice %138 {offsets = [22, 0], sizes = [7, 64], strides = [1, 1]} : vector<73x64xf32> to vector<7x64xf32>
    %c0_189 = arith.constant 0 : index
    %c14 = arith.constant 14 : index
    %c0_190 = arith.constant 0 : index
    %148 = vector.load %arg8[%c0_189, %c14, %c0_190] : memref<1x49x64xf32, #tpu.memory_space<vmem>>, vector<1x7x64xf32>
    %149 = vector.shape_cast %148 : vector<1x7x64xf32> to vector<7x64xf32>
    %150 = vector.shape_cast %147 : vector<7x64xf32> to vector<1x7x64xf32>
    tpu.vector_store %arg8[%c0_189, %c14, %c0_190], %150 {strides = array<i32>} : memref<1x49x64xf32, #tpu.memory_space<vmem>>, vector<1x7x64xf32>,
    %151 = vector.extract_strided_slice %138 {offsets = [33, 0], sizes = [7, 64], strides = [1, 1]} : vector<73x64xf32> to vector<7x64xf32>
    %c0_191 = arith.constant 0 : index
    %c21 = arith.constant 21 : index
    %c0_192 = arith.constant 0 : index
    %152 = vector.load %arg8[%c0_191, %c21, %c0_192] : memref<1x49x64xf32, #tpu.memory_space<vmem>>, vector<1x7x64xf32>
    %153 = vector.shape_cast %152 : vector<1x7x64xf32> to vector<7x64xf32>
    %154 = vector.shape_cast %151 : vector<7x64xf32> to vector<1x7x64xf32>
    tpu.vector_store %arg8[%c0_191, %c21, %c0_192], %154 {strides = array<i32>} : memref<1x49x64xf32, #tpu.memory_space<vmem>>, vector<1x7x64xf32>,
    %155 = vector.extract_strided_slice %138 {offsets = [44, 0], sizes = [7, 64], strides = [1, 1]} : vector<73x64xf32> to vector<7x64xf32>
    %c0_193 = arith.constant 0 : index
    %c28 = arith.constant 28 : index
    %c0_194 = arith.constant 0 : index
    %156 = vector.load %arg8[%c0_193, %c28, %c0_194] : memref<1x49x64xf32, #tpu.memory_space<vmem>>, vector<1x7x64xf32>
    %157 = vector.shape_cast %156 : vector<1x7x64xf32> to vector<7x64xf32>
    %158 = vector.shape_cast %155 : vector<7x64xf32> to vector<1x7x64xf32>
    tpu.vector_store %arg8[%c0_193, %c28, %c0_194], %158 {strides = array<i32>} : memref<1x49x64xf32, #tpu.memory_space<vmem>>, vector<1x7x64xf32>,
    %159 = vector.extract_strided_slice %138 {offsets = [55, 0], sizes = [7, 64], strides = [1, 1]} : vector<73x64xf32> to vector<7x64xf32>
    %c0_195 = arith.constant 0 : index
    %c35 = arith.constant 35 : index
    %c0_196 = arith.constant 0 : index
    %160 = vector.load %arg8[%c0_195, %c35, %c0_196] : memref<1x49x64xf32, #tpu.memory_space<vmem>>, vector<1x7x64xf32>
    %161 = vector.shape_cast %160 : vector<1x7x64xf32> to vector<7x64xf32>
    %162 = vector.shape_cast %159 : vector<7x64xf32> to vector<1x7x64xf32>
    tpu.vector_store %arg8[%c0_195, %c35, %c0_196], %162 {strides = array<i32>} : memref<1x49x64xf32, #tpu.memory_space<vmem>>, vector<1x7x64xf32>,
    %163 = vector.extract_strided_slice %138 {offsets = [66, 0], sizes = [7, 64], strides = [1, 1]} : vector<73x64xf32> to vector<7x64xf32>
    %c0_197 = arith.constant 0 : index
    %c42 = arith.constant 42 : index
    %c0_198 = arith.constant 0 : index
    %164 = vector.load %arg8[%c0_197, %c42, %c0_198] : memref<1x49x64xf32, #tpu.memory_space<vmem>>, vector<1x7x64xf32>
    %165 = vector.shape_cast %164 : vector<1x7x64xf32> to vector<7x64xf32>
    %166 = vector.shape_cast %163 : vector<7x64xf32> to vector<1x7x64xf32>
    tpu.vector_store %arg8[%c0_197, %c42, %c0_198], %166 {strides = array<i32>} : memref<1x49x64xf32, #tpu.memory_space<vmem>>, vector<1x7x64xf32>,
    return
  }
  func.func @transform_0(%arg0: i32) -> (i32, i32, i32, i32) {
    %c0_i32 = arith.constant 0 : i32
    %c0_i32_0 = arith.constant 0 : i32
    %c0_i32_1 = arith.constant 0 : i32
    %c0_i32_2 = arith.constant 0 : i32
    return %arg0, %c0_i32, %c0_i32_0, %c0_i32_1 : i32, i32, i32, i32
  }
  func.func @transform_1(%arg0: i32) -> (i32, i32) {
    %c0_i32 = arith.constant 0 : i32
    %c0_i32_0 = arith.constant 0 : i32
    %c0_i32_1 = arith.constant 0 : i32
    return %c0_i32, %c0_i32_0 : i32, i32
  }
  func.func @transform_2(%arg0: i32) -> (i32, i32) {
    %c0_i32 = arith.constant 0 : i32
    %c0_i32_0 = arith.constant 0 : i32
    %c0_i32_1 = arith.constant 0 : i32
    return %c0_i32, %c0_i32_0 : i32, i32
  }
  func.func @transform_3(%arg0: i32) -> (i32, i32) {
    %c0_i32 = arith.constant 0 : i32
    %c0_i32_0 = arith.constant 0 : i32
    %c0_i32_1 = arith.constant 0 : i32
    return %c0_i32, %c0_i32_0 : i32, i32
  }
  func.func @transform_4(%arg0: i32) -> (i32, i32) {
    %c0_i32 = arith.constant 0 : i32
    %c0_i32_0 = arith.constant 0 : i32
    %c0_i32_1 = arith.constant 0 : i32
    return %c0_i32, %c0_i32_0 : i32, i32
  }
  func.func @transform_5(%arg0: i32) -> (i32, i32) {
    %c0_i32 = arith.constant 0 : i32
    %c0_i32_0 = arith.constant 0 : i32
    %c0_i32_1 = arith.constant 0 : i32
    return %c0_i32, %c0_i32_0 : i32, i32
  }
  func.func @transform_6(%arg0: i32) -> (i32, i32) {
    %c0_i32 = arith.constant 0 : i32
    %c0_i32_0 = arith.constant 0 : i32
    %c0_i32_1 = arith.constant 0 : i32
    return %c0_i32, %c0_i32_0 : i32, i32
  }
  func.func @transform_7(%arg0: i32) -> (i32, i32, i32) {
    %c0_i32 = arith.constant 0 : i32
    %c0_i32_0 = arith.constant 0 : i32
    %c0_i32_1 = arith.constant 0 : i32
    return %arg0, %c0_i32, %c0_i32_0 : i32, i32, i32
  }
}

</mosaic_0001>

<llo_original>
// kernel: dqn_base_forward.1
$region0: #{dqn_base_forward.1}
  #allocation0 [shape = 'u32[]', space=smem, size = 0x4, offset = 0x4, fixed_abs, tag = 'smem constant byte address 0x4 - core index']
  #allocation1 [shape = 'u32[144,128]{1,0:T(1,128)}', space=vmem, size = 0x12000, scoped, tag = 'internal scratch']
  #allocation2 [shape = 'f32[4,121,64]{2,1,0:T(8,128)}', space=vmem, size = 0x40000, scoped, tag = 'scratch operand']
  #allocation3 [shape = 'f32[440,256]{1,0:T(8,128)}', space=vmem, size = 0x6e000, scoped, tag = 'scratch operand']
  #allocation4 [shape = 'f32[440,32]{1,0:T(8,128)}', space=vmem, size = 0x37000, scoped, tag = 'scratch operand']
  #allocation5 [shape = 'f32[97,512]{1,0:T(8,128)}', space=vmem, size = 0x34000, scoped, tag = 'scratch operand']
  #allocation6 [shape = 'f32[97,64]{1,0:T(8,128)}', space=vmem, size = 0xd000, scoped, tag = 'scratch operand']
  #allocation7 [shape = 'f32[73,576]{1,0:T(8,128)}', space=vmem, size = 0x32000, scoped, tag = 'scratch operand']
  %s0 = inlined_call_operand.vmem [shape: u8[2,4,121,64], index: 0, kind: input, shape index: {}]
  %s1 = inlined_call_operand.vmem [shape: bf16[256,32], index: 1, kind: input, shape index: {}]
  %s2 = inlined_call_operand.vmem [shape: f32[1,32], index: 2, kind: input, shape index: {}]
  %s3 = inlined_call_operand.vmem [shape: bf16[512,64], index: 3, kind: input, shape index: {}]
  %s4 = inlined_call_operand.vmem [shape: f32[1,64], index: 4, kind: input, shape index: {}]
  %s5 = inlined_call_operand.vmem [shape: bf16[576,64], index: 5, kind: input, shape index: {}]
  %s6 = inlined_call_operand.vmem [shape: f32[1,64], index: 6, kind: input, shape index: {}]
  %s7 = inlined_call_operand.vmem [shape: f32[2,49,64], index: 7, kind: output, shape index: {}]
  %s8 = sld [smem:[#allocation0]]
  $region61: #{dqn_base_forward.1} parent=0
    _
  %s10 = ssub.s32 1, %s8
  %s11 = scalar_select 0, %s10, %s8
  loop: start=0, step=1, limit=4
  $region2: #{dqn_base_forward.1} parent=0 // loop_pre_header
    _
  $region3: #{dqn_base_forward.1} parent=0 // loop_header
    %s13 = sphi 0, %s17
    %p14 = scmp.ge.s32.totalorder %s13, 4
    %s23 = sphi 0, %s25
    %s26 = sphi 0, %s23
    %s27 = sphi 0, %s26
    %s43 = sphi 0, %s27
    %s47 = sphi 0, %s47
    %s49 = sphi 0, %s47
    %s50 = sphi 0, %s49
    %s64 = sphi 0, %s50
    %s68 = sphi 0, %s68
    %s70 = sphi 0, %s68
    %s71 = sphi 0, %s70
    %s85 = sphi 0, %s71
    %s89 = sphi 0, %s89
    %s91 = sphi 0, %s89
    %s92 = sphi 0, %s91
    %s106 = sphi 0, %s92
    %s110 = sphi 0, %s110
    %s112 = sphi 0, %s110
    %s113 = sphi 0, %s112
    %s127 = sphi 0, %s113
    %s131 = sphi 0, %s131
    %s133 = sphi 0, %s131
    %s134 = sphi 0, %s133
    %s148 = sphi 0, %s134
    %s152 = sphi 0, %s152
    %s154 = sphi 0, %s152
    %s155 = sphi 0, %s154
    %s169 = sphi 0, %s155
    %s175 = sphi 0, %s177
    %s178 = sphi 0, %s175
    %s179 = sphi 0, %s178
    %s195 = sphi 0, %s179
  $region4: #{dqn_base_forward.1} parent=0 // loop_header_branch
    %16 = sbr.rel (%p14) target = $region8
  $region5: #{dqn_base_forward.1} parent=0 // loop_body
    %s18 = ssub.s32 %s13, 1
    %s19 = ssub.s32 %s13, 2
    %s20 = sadd.s32 %s13, 1
    %s21 = ssub.s32 %s13, %s20
    %p22 = scmp.eq.s32.totalorder %s21, 0
    %s24 = sadd.s32 %s23, 1
    %s25 = scalar_select %p22, %s23, %s24
    %p28 = pneg %p22
    %p29 = scmp.eq.s32.totalorder %s13, 1
    %p30 = por %p28, %p29
    %p31 = scmp.ne.s32.totalorder %s23, %s26
    %p32 = scmp.eq.s32.totalorder %s13, 0
    %p33 = por %p31, %p32
    %p34 = scmp.ne.s32.totalorder %s23, %s26
    %p35 = scmp.eq.s32.totalorder %s18, 1
    %p36 = por %p34, %p35
    %p37 = scmp.ne.s32.totalorder %s26, %s27
    %p38 = scmp.eq.s32.totalorder %s18, 0
    %p39 = por %p37, %p38
    %p40 = scmp.ne.s32.totalorder %s26, %s27
    %p41 = scmp.eq.s32.totalorder %s19, 1
    %p42 = por %p40, %p41
    %p44 = scmp.ne.s32.totalorder %s27, %s43
    %p45 = scmp.eq.s32.totalorder %s19, 0
    %p46 = por %p44, %p45
    %s48 = sadd.s32 %s47, 1
    %p51 = scmp.eq.s32.totalorder %s13, 1
    %p52 = scmp.ne.s32.totalorder %s47, %s49
    %p53 = scmp.eq.s32.totalorder %s13, 0
    %p54 = por %p52, %p53
    %p55 = scmp.ne.s32.totalorder %s47, %s49
    %p56 = scmp.eq.s32.totalorder %s18, 1
    %p57 = por %p55, %p56
    %p58 = scmp.ne.s32.totalorder %s49, %s50
    %p59 = scmp.eq.s32.totalorder %s18, 0
    %p60 = por %p58, %p59
    %p61 = scmp.ne.s32.totalorder %s49, %s50
    %p62 = scmp.eq.s32.totalorder %s19, 1
    %p63 = por %p61, %p62
    %p65 = scmp.ne.s32.totalorder %s50, %s64
    %p66 = scmp.eq.s32.totalorder %s19, 0
    %p67 = por %p65, %p66
    %s69 = sadd.s32 %s68, 1
    %p72 = scmp.eq.s32.totalorder %s13, 1
    %p73 = scmp.ne.s32.totalorder %s68, %s70
    %p74 = scmp.eq.s32.totalorder %s13, 0
    %p75 = por %p73, %p74
    %p76 = scmp.ne.s32.totalorder %s68, %s70
    %p77 = scmp.eq.s32.totalorder %s18, 1
    %p78 = por %p76, %p77
    %p79 = scmp.ne.s32.totalorder %s70, %s71
    %p80 = scmp.eq.s32.totalorder %s18, 0
    %p81 = por %p79, %p80
    %p82 = scmp.ne.s32.totalorder %s70, %s71
    %p83 = scmp.eq.s32.totalorder %s19, 1
    %p84 = por %p82, %p83
    %p86 = scmp.ne.s32.totalorder %s71, %s85
    %p87 = scmp.eq.s32.totalorder %s19, 0
    %p88 = por %p86, %p87
    %s90 = sadd.s32 %s89, 1
    %p93 = scmp.eq.s32.totalorder %s13, 1
    %p94 = scmp.ne.s32.totalorder %s89, %s91
    %p95 = scmp.eq.s32.totalorder %s13, 0
    %p96 = por %p94, %p95
    %p97 = scmp.ne.s32.totalorder %s89, %s91
    %p98 = scmp.eq.s32.totalorder %s18, 1
    %p99 = por %p97, %p98
    %p100 = scmp.ne.s32.totalorder %s91, %s92
    %p101 = scmp.eq.s32.totalorder %s18, 0
    %p102 = por %p100, %p101
    %p103 = scmp.ne.s32.totalorder %s91, %s92
    %p104 = scmp.eq.s32.totalorder %s19, 1
    %p105 = por %p103, %p104
    %p107 = scmp.ne.s32.totalorder %s92, %s106
    %p108 = scmp.eq.s32.totalorder %s19, 0
    %p109 = por %p107, %p108
    %s111 = sadd.s32 %s110, 1
    %p114 = scmp.eq.s32.totalorder %s13, 1
    %p115 = scmp.ne.s32.totalorder %s110, %s112
    %p116 = scmp.eq.s32.totalorder %s13, 0
    %p117 = por %p115, %p116
    %p118 = scmp.ne.s32.totalorder %s110, %s112
    %p119 = scmp.eq.s32.totalorder %s18, 1
    %p120 = por %p118, %p119
    %p121 = scmp.ne.s32.totalorder %s112, %s113
    %p122 = scmp.eq.s32.totalorder %s18, 0
    %p123 = por %p121, %p122
    %p124 = scmp.ne.s32.totalorder %s112, %s113
    %p125 = scmp.eq.s32.totalorder %s19, 1
    %p126 = por %p124, %p125
    %p128 = scmp.ne.s32.totalorder %s113, %s127
    %p129 = scmp.eq.s32.totalorder %s19, 0
    %p130 = por %p128, %p129
    %s132 = sadd.s32 %s131, 1
    %p135 = scmp.eq.s32.totalorder %s13, 1
    %p136 = scmp.ne.s32.totalorder %s131, %s133
    %p137 = scmp.eq.s32.totalorder %s13, 0
    %p138 = por %p136, %p137
    %p139 = scmp.ne.s32.totalorder %s131, %s133
    %p140 = scmp.eq.s32.totalorder %s18, 1
    %p141 = por %p139, %p140
    %p142 = scmp.ne.s32.totalorder %s133, %s134
    %p143 = scmp.eq.s32.totalorder %s18, 0
    %p144 = por %p142, %p143
    %p145 = scmp.ne.s32.totalorder %s133, %s134
    %p146 = scmp.eq.s32.totalorder %s19, 1
    %p147 = por %p145, %p146
    %p149 = scmp.ne.s32.totalorder %s134, %s148
    %p150 = scmp.eq.s32.totalorder %s19, 0
    %p151 = por %p149, %p150
    %s153 = sadd.s32 %s152, 1
    %p156 = scmp.eq.s32.totalorder %s13, 1
    %p157 = scmp.ne.s32.totalorder %s152, %s154
    %p158 = scmp.eq.s32.totalorder %s13, 0
    %p159 = por %p157, %p158
    %p160 = scmp.ne.s32.totalorder %s152, %s154
    %p161 = scmp.eq.s32.totalorder %s18, 1
    %p162 = por %p160, %p161
    %p163 = scmp.ne.s32.totalorder %s154, %s155
    %p164 = scmp.eq.s32.totalorder %s18, 0
    %p165 = por %p163, %p164
    %p166 = scmp.ne.s32.totalorder %s154, %s155
    %p167 = scmp.eq.s32.totalorder %s19, 1
    %p168 = por %p166, %p167
    %p170 = scmp.ne.s32.totalorder %s155, %s169
    %p171 = scmp.eq.s32.totalorder %s19, 0
    %p172 = por %p170, %p171
    %s173 = ssub.s32 %s13, %s20
    %p174 = scmp.eq.s32.totalorder %s173, 0
    %s176 = sadd.s32 %s175, 1
    %s177 = scalar_select %p174, %s175, %s176
    %p180 = pneg %p174
    %p181 = scmp.eq.s32.totalorder %s13, 1
    %p182 = por %p180, %p181
    %p183 = scmp.ne.s32.totalorder %s175, %s178
    %p184 = scmp.eq.s32.totalorder %s13, 0
    %p185 = por %p183, %p184
    %p186 = scmp.ne.s32.totalorder %s175, %s178
    %p187 = scmp.eq.s32.totalorder %s18, 1
    %p188 = por %p186, %p187
    %p189 = scmp.ne.s32.totalorder %s178, %s179
    %p190 = scmp.eq.s32.totalorder %s18, 0
    %p191 = por %p189, %p190
    %p192 = scmp.ne.s32.totalorder %s178, %s179
    %p193 = scmp.eq.s32.totalorder %s19, 1
    %p194 = por %p192, %p193
    %p196 = scmp.ne.s32.totalorder %s179, %s195
    %p197 = scmp.eq.s32.totalorder %s19, 0
    %p198 = por %p196, %p197
    %p199 = scmp.le.s32.totalorder 1, %s13
    %p200 = scmp.lt.s32.totalorder %s13, 3
    %p201 = pnand %p199, %p200
    %p202 = pneg %p201
    // Predicated region
    $region9: #{dqn_base_forward.1} parent=5 // pred_check
      _
    $region10: #{dqn_base_forward.1} parent=5 // pred_check_branch
      %204 = sbr.rel (%p201) target = $region12
    $region11: #{dqn_base_forward.1} parent=5 // pred_region
      %s205 = ssub.s32 %s13, 1
      // Predicated region
      $region13: #{dqn_base_forward.1} parent=11 // pred_check
        %p206 = pneg %p60
      $region14: #{dqn_base_forward.1} parent=11 // pred_check_branch
        %208 = sbr.rel (%p206) target = $region16
      $region15: #{dqn_base_forward.1} parent=11 // pred_region
        _
      $region16: #{dqn_base_forward.1} parent=11 // pred_fallthru
        _
      // Predicated region
      $region17: #{dqn_base_forward.1} parent=11 // pred_check
        %p209 = pneg %p81
      $region18: #{dqn_base_forward.1} parent=11 // pred_check_branch
        %211 = sbr.rel (%p209) target = $region20
      $region19: #{dqn_base_forward.1} parent=11 // pred_region
        _
      $region20: #{dqn_base_forward.1} parent=11 // pred_fallthru
        _
      // Predicated region
      $region21: #{dqn_base_forward.1} parent=11 // pred_check
        %p212 = pneg %p102
      $region22: #{dqn_base_forward.1} parent=11 // pred_check_branch
        %214 = sbr.rel (%p212) target = $region24
      $region23: #{dqn_base_forward.1} parent=11 // pred_region
        _
      $region24: #{dqn_base_forward.1} parent=11 // pred_fallthru
        _
      // Predicated region
      $region25: #{dqn_base_forward.1} parent=11 // pred_check
        %p215 = pneg %p123
      $region26: #{dqn_base_forward.1} parent=11 // pred_check_branch
        %217 = sbr.rel (%p215) target = $region28
      $region27: #{dqn_base_forward.1} parent=11 // pred_region
        _
      $region28: #{dqn_base_forward.1} parent=11 // pred_fallthru
        _
      // Predicated region
      $region29: #{dqn_base_forward.1} parent=11 // pred_check
        %p218 = pneg %p144
      $region30: #{dqn_base_forward.1} parent=11 // pred_check_branch
        %220 = sbr.rel (%p218) target = $region32
      $region31: #{dqn_base_forward.1} parent=11 // pred_region
        _
      $region32: #{dqn_base_forward.1} parent=11 // pred_fallthru
        _
      // Predicated region
      $region33: #{dqn_base_forward.1} parent=11 // pred_check
        %p221 = pneg %p165
      $region34: #{dqn_base_forward.1} parent=11 // pred_check_branch
        %223 = sbr.rel (%p221) target = $region36
      $region35: #{dqn_base_forward.1} parent=11 // pred_region
        _
      $region36: #{dqn_base_forward.1} parent=11 // pred_fallthru
        _
    $region12: #{dqn_base_forward.1} parent=5 // pred_fallthru
      _
    %p224 = scmp.lt.s32.totalorder %s13, 2
    // Predicated region
    $region37: #{dqn_base_forward.1} parent=5 // pred_check
      %p225 = pneg %p224
    $region38: #{dqn_base_forward.1} parent=5 // pred_check_branch
      %227 = sbr.rel (%p225) target = $region40
    $region39: #{dqn_base_forward.1} parent=5 // pred_region
      // Predicated region
      $region41: #{dqn_base_forward.1} parent=39 // pred_check
        %p228 = pneg %p33
      $region42: #{dqn_base_forward.1} parent=39 // pred_check_branch
        %230 = sbr.rel (%p228) target = $region44
      $region43: #{dqn_base_forward.1} parent=39 // pred_region
        %p231 = scmp.lt.s32.totalorder %s13, 1
        %s232 = scalar_select %p231, %s13, 1
        %s233 = smul.addr %s232, 64
        %s234 = smul.addr %s233, 2
        %s235 = scalar_lea.vmem %s0, %s234
      $region44: #{dqn_base_forward.1} parent=39 // pred_fallthru
        _
    $region40: #{dqn_base_forward.1} parent=5 // pred_fallthru
      _
    %p236 = scmp.le.s32.totalorder 1, %s13
    %p237 = scmp.lt.s32.totalorder %s13, 3
    %p238 = pnand %p236, %p237
    %p239 = pneg %p238
    // Predicated region
    $region45: #{dqn_base_forward.1} parent=5 // pred_check
      _
    $region46: #{dqn_base_forward.1} parent=5 // pred_check_branch
      %241 = sbr.rel (%p238) target = $region48
    $region47: #{dqn_base_forward.1} parent=5 // pred_region
      %s242 = ssub.s32 %s13, 1
      %p243 = scmp.lt.s32.totalorder %s18, 1
      %s244 = scalar_select %p243, %s18, 1
      %s245 = smul.addr %s244, 64
      %s246 = smul.addr %s245, 2
      %s247 = scalar_lea.vmem %s0, %s246
      %p248 = pneg %p39
      %p249 = pneg %p36
      %p250 = pneg %p60
      %p251 = pneg %p57
      %p252 = pneg %p81
      %p253 = pneg %p78
      %p254 = pneg %p102
      %p255 = pneg %p99
      %p256 = pneg %p123
      %p257 = pneg %p120
      %p258 = pneg %p144
      %p259 = pneg %p141
      %p260 = pneg %p165
      %p261 = pneg %p162
      %p262 = pneg %p191
      %p263 = pneg %p188
      %p264 = scmp.lt.s32.totalorder %s18, 1
      %s265 = scalar_select %p264, %s18, 1
      %s266 = smul.addr %s265, 7
      %s267 = smul.addr %s266, 8
      %s268 = scalar_lea.vmem %s7, %s267
      %p269 = scmp.lt.s32.totalorder %s18, 1
      %s270 = scalar_select %p269, %s18, 1
      %s271 = smul.addr %s270, 64
      %s272 = smul.addr %s271, 2
      %s273 = scalar_lea.vmem %s0, %s272
      %p274 = scmp.lt.s32.totalorder %s18, 1
      %s275 = scalar_select %p274, %s18, 1
      %s276 = smul.addr %s275, 7
      %s277 = smul.addr %s276, 8
      %s278 = scalar_lea.vmem %s7, %s277
      %v280 = vld [vmem:[%s273] sm:$0x3]
      %v281 = vld [vmem:[%s273 + $0x2] sm:$0x3]
      %v282 = vld [vmem:[%s273 + $0x4] sm:$0x3]
      %v283 = vld [vmem:[%s273 + $0x6] sm:$0x3]
      %v284 = vld [vmem:[%s273 + $0x8] sm:$0x3]
      %v285 = vld [vmem:[%s273 + $0xa] sm:$0x3]
      %v286 = vld [vmem:[%s273 + $0xc] sm:$0x3]
      %v287 = vld [vmem:[%s273 + $0xe] sm:$0x3]
      %v288 = vld [vmem:[%s273 + $0x10] sm:$0x3]
      %v289 = vld [vmem:[%s273 + $0x12] sm:$0x3]
      %v290 = vld [vmem:[%s273 + $0x14] sm:$0x3]
      %v291 = vld [vmem:[%s273 + $0x16] sm:$0x3]
      %v292 = vld [vmem:[%s273 + $0x18] sm:$0x3]
      %v293 = vld [vmem:[%s273 + $0x1a] sm:$0x3]
      %v294 = vld [vmem:[%s273 + $0x1c] sm:$0x3]
      %v295 = vld [vmem:[%s273 + $0x1e] sm:$0x1]
      %v296 = vld [vmem:[%s273 + $0x20] sm:$0x3]
      %v297 = vld [vmem:[%s273 + $0x22] sm:$0x3]
      %v298 = vld [vmem:[%s273 + $0x24] sm:$0x3]
      %v299 = vld [vmem:[%s273 + $0x26] sm:$0x3]
      %v300 = vld [vmem:[%s273 + $0x28] sm:$0x3]
      %v301 = vld [vmem:[%s273 + $0x2a] sm:$0x3]
      %v302 = vld [vmem:[%s273 + $0x2c] sm:$0x3]
      %v303 = vld [vmem:[%s273 + $0x2e] sm:$0x3]
      %v304 = vld [vmem:[%s273 + $0x30] sm:$0x3]
      %v305 = vld [vmem:[%s273 + $0x32] sm:$0x3]
      %v306 = vld [vmem:[%s273 + $0x34] sm:$0x3]
      %v307 = vld [vmem:[%s273 + $0x36] sm:$0x3]
      %v308 = vld [vmem:[%s273 + $0x38] sm:$0x3]
      %v309 = vld [vmem:[%s273 + $0x3a] sm:$0x3]
      %v310 = vld [vmem:[%s273 + $0x3c] sm:$0x3]
      %v311 = vld [vmem:[%s273 + $0x3e] sm:$0x1]
      %v312 = vld [vmem:[%s273 + $0x40] sm:$0x3]
      %v313 = vld [vmem:[%s273 + $0x42] sm:$0x3]
      %v314 = vld [vmem:[%s273 + $0x44] sm:$0x3]
      %v315 = vld [vmem:[%s273 + $0x46] sm:$0x3]
      %v316 = vld [vmem:[%s273 + $0x48] sm:$0x3]
      %v317 = vld [vmem:[%s273 + $0x4a] sm:$0x3]
      %v318 = vld [vmem:[%s273 + $0x4c] sm:$0x3]
      %v319 = vld [vmem:[%s273 + $0x4e] sm:$0x3]
      %v320 = vld [vmem:[%s273 + $0x50] sm:$0x3]
      %v321 = vld [vmem:[%s273 + $0x52] sm:$0x3]
      %v322 = vld [vmem:[%s273 + $0x54] sm:$0x3]
      %v323 = vld [vmem:[%s273 + $0x56] sm:$0x3]
      %v324 = vld [vmem:[%s273 + $0x58] sm:$0x3]
      %v325 = vld [vmem:[%s273 + $0x5a] sm:$0x3]
      %v326 = vld [vmem:[%s273 + $0x5c] sm:$0x3]
      %v327 = vld [vmem:[%s273 + $0x5e] sm:$0x1]
      %v328 = vld [vmem:[%s273 + $0x60] sm:$0x3]
      %v329 = vld [vmem:[%s273 + $0x62] sm:$0x3]
      %v330 = vld [vmem:[%s273 + $0x64] sm:$0x3]
      %v331 = vld [vmem:[%s273 + $0x66] sm:$0x3]
      %v332 = vld [vmem:[%s273 + $0x68] sm:$0x3]
      %v333 = vld [vmem:[%s273 + $0x6a] sm:$0x3]
      %v334 = vld [vmem:[%s273 + $0x6c] sm:$0x3]
      %v335 = vld [vmem:[%s273 + $0x6e] sm:$0x3]
      %v336 = vld [vmem:[%s273 + $0x70] sm:$0x3]
      %v337 = vld [vmem:[%s273 + $0x72] sm:$0x3]
      %v338 = vld [vmem:[%s273 + $0x74] sm:$0x3]
      %v339 = vld [vmem:[%s273 + $0x76] sm:$0x3]
      %v340 = vld [vmem:[%s273 + $0x78] sm:$0x3]
      %v341 = vld [vmem:[%s273 + $0x7a] sm:$0x3]
      %v342 = vld [vmem:[%s273 + $0x7c] sm:$0x3]
      %v343 = vld [vmem:[%s273 + $0x7e] sm:$0x1]
      %v344 = vunpack.c.0.s8 %v280
      %v345 = vunpack.c.0.s8 %v281
      %v346 = vunpack.c.0.s8 %v282
      %v347 = vunpack.c.0.s8 %v283
      %v348 = vunpack.c.0.s8 %v284
      %v349 = vunpack.c.0.s8 %v285
      %v350 = vunpack.c.0.s8 %v286
      %v351 = vunpack.c.0.s8 %v287
      %v352 = vunpack.c.0.s8 %v288
      %v353 = vunpack.c.0.s8 %v289
      %v354 = vunpack.c.0.s8 %v290
      %v355 = vunpack.c.0.s8 %v291
      %v356 = vunpack.c.0.s8 %v292
      %v357 = vunpack.c.0.s8 %v293
      %v358 = vunpack.c.0.s8 %v294
      %v359 = vunpack.c.0.s8 %v295
      %v360 = vunpack.c.0.s8 %v296
      %v361 = vunpack.c.0.s8 %v297
      %v362 = vunpack.c.0.s8 %v298
      %v363 = vunpack.c.0.s8 %v299
      %v364 = vunpack.c.0.s8 %v300
      %v365 = vunpack.c.0.s8 %v301
      %v366 = vunpack.c.0.s8 %v302
      %v367 = vunpack.c.0.s8 %v303
      %v368 = vunpack.c.0.s8 %v304
      %v369 = vunpack.c.0.s8 %v305
      %v370 = vunpack.c.0.s8 %v306
      %v371 = vunpack.c.0.s8 %v307
      %v372 = vunpack.c.0.s8 %v308
      %v373 = vunpack.c.0.s8 %v309
      %v374 = vunpack.c.0.s8 %v310
      %v375 = vunpack.c.0.s8 %v311
      %v376 = vunpack.c.0.s8 %v312
      %v377 = vunpack.c.0.s8 %v313
      %v378 = vunpack.c.0.s8 %v314
      %v379 = vunpack.c.0.s8 %v315
      %v380 = vunpack.c.0.s8 %v316
      %v381 = vunpack.c.0.s8 %v317
      %v382 = vunpack.c.0.s8 %v318
      %v383 = vunpack.c.0.s8 %v319
      %v384 = vunpack.c.0.s8 %v320
      %v385 = vunpack.c.0.s8 %v321
      %v386 = vunpack.c.0.s8 %v322
      %v387 = vunpack.c.0.s8 %v323
      %v388 = vunpack.c.0.s8 %v324
      %v389 = vunpack.c.0.s8 %v325
      %v390 = vunpack.c.0.s8 %v326
      %v391 = vunpack.c.0.s8 %v327
      %v392 = vunpack.c.0.s8 %v328
      %v393 = vunpack.c.0.s8 %v329
      %v394 = vunpack.c.0.s8 %v330
      %v395 = vunpack.c.0.s8 %v331
      %v396 = vunpack.c.0.s8 %v332
      %v397 = vunpack.c.0.s8 %v333
      %v398 = vunpack.c.0.s8 %v334
      %v399 = vunpack.c.0.s8 %v335
      %v400 = vunpack.c.0.s8 %v336
      %v401 = vunpack.c.0.s8 %v337
      %v402 = vunpack.c.0.s8 %v338
      %v403 = vunpack.c.0.s8 %v339
      %v404 = vunpack.c.0.s8 %v340
      %v405 = vunpack.c.0.s8 %v341
      %v406 = vunpack.c.0.s8 %v342
      %v407 = vunpack.c.0.s8 %v343
      %v408 = vand.u32 %v344, 255
      %v409 = vand.u32 %v345, 255
      %v410 = vand.u32 %v346, 255
      %v411 = vand.u32 %v347, 255
      %v412 = vand.u32 %v348, 255
      %v413 = vand.u32 %v349, 255
      %v414 = vand.u32 %v350, 255
      %v415 = vand.u32 %v351, 255
      %v416 = vand.u32 %v352, 255
      %v417 = vand.u32 %v353, 255
      %v418 = vand.u32 %v354, 255
      %v419 = vand.u32 %v355, 255
      %v420 = vand.u32 %v356, 255
      %v421 = vand.u32 %v357, 255
      %v422 = vand.u32 %v358, 255
      %v423 = vand.u32 %v359, 255
      %v424 = vand.u32 %v360, 255
      %v425 = vand.u32 %v361, 255
      %v426 = vand.u32 %v362, 255
      %v427 = vand.u32 %v363, 255
      %v428 = vand.u32 %v364, 255
      %v429 = vand.u32 %v365, 255
      %v430 = vand.u32 %v366, 255
      %v431 = vand.u32 %v367, 255
      %v432 = vand.u32 %v368, 255
      %v433 = vand.u32 %v369, 255
      %v434 = vand.u32 %v370, 255
      %v435 = vand.u32 %v371, 255
      %v436 = vand.u32 %v372, 255
      %v437 = vand.u32 %v373, 255
      %v438 = vand.u32 %v374, 255
      %v439 = vand.u32 %v375, 255
      %v440 = vand.u32 %v376, 255
      %v441 = vand.u32 %v377, 255
      %v442 = vand.u32 %v378, 255
      %v443 = vand.u32 %v379, 255
      %v444 = vand.u32 %v380, 255
      %v445 = vand.u32 %v381, 255
      %v446 = vand.u32 %v382, 255
      %v447 = vand.u32 %v383, 255
      %v448 = vand.u32 %v384, 255
      %v449 = vand.u32 %v385, 255
      %v450 = vand.u32 %v386, 255
      %v451 = vand.u32 %v387, 255
      %v452 = vand.u32 %v388, 255
      %v453 = vand.u32 %v389, 255
      %v454 = vand.u32 %v390, 255
      %v455 = vand.u32 %v391, 255
      %v456 = vand.u32 %v392, 255
      %v457 = vand.u32 %v393, 255
      %v458 = vand.u32 %v394, 255
      %v459 = vand.u32 %v395, 255
      %v460 = vand.u32 %v396, 255
      %v461 = vand.u32 %v397, 255
      %v462 = vand.u32 %v398, 255
      %v463 = vand.u32 %v399, 255
      %v464 = vand.u32 %v400, 255
      %v465 = vand.u32 %v401, 255
      %v466 = vand.u32 %v402, 255
      %v467 = vand.u32 %v403, 255
      %v468 = vand.u32 %v404, 255
      %v469 = vand.u32 %v405, 255
      %v470 = vand.u32 %v406, 255
      %v471 = vand.u32 %v407, 255
      %v472 = vcvt.s32.f32 %v408
      %v473 = vcvt.s32.f32 %v409
      %v474 = vcvt.s32.f32 %v410
      %v475 = vcvt.s32.f32 %v411
      %v476 = vcvt.s32.f32 %v412
      %v477 = vcvt.s32.f32 %v413
      %v478 = vcvt.s32.f32 %v414
      %v479 = vcvt.s32.f32 %v415
      %v480 = vcvt.s32.f32 %v416
      %v481 = vcvt.s32.f32 %v417
      %v482 = vcvt.s32.f32 %v418
      %v483 = vcvt.s32.f32 %v419
      %v484 = vcvt.s32.f32 %v420
      %v485 = vcvt.s32.f32 %v421
      %v486 = vcvt.s32.f32 %v422
      %v487 = vcvt.s32.f32 %v423
      %v488 = vcvt.s32.f32 %v424
      %v489 = vcvt.s32.f32 %v425
      %v490 = vcvt.s32.f32 %v426
      %v491 = vcvt.s32.f32 %v427
      %v492 = vcvt.s32.f32 %v428
      %v493 = vcvt.s32.f32 %v429
      %v494 = vcvt.s32.f32 %v430
      %v495 = vcvt.s32.f32 %v431
      %v496 = vcvt.s32.f32 %v432
      %v497 = vcvt.s32.f32 %v433
      %v498 = vcvt.s32.f32 %v434
      %v499 = vcvt.s32.f32 %v435
      %v500 = vcvt.s32.f32 %v436
      %v501 = vcvt.s32.f32 %v437
      %v502 = vcvt.s32.f32 %v438
      %v503 = vcvt.s32.f32 %v439
      %v504 = vcvt.s32.f32 %v440
      %v505 = vcvt.s32.f32 %v441
      %v506 = vcvt.s32.f32 %v442
      %v507 = vcvt.s32.f32 %v443
      %v508 = vcvt.s32.f32 %v444
      %v509 = vcvt.s32.f32 %v445
      %v510 = vcvt.s32.f32 %v446
      %v511 = vcvt.s32.f32 %v447
      %v512 = vcvt.s32.f32 %v448
      %v513 = vcvt.s32.f32 %v449
      %v514 = vcvt.s32.f32 %v450
      %v515 = vcvt.s32.f32 %v451
      %v516 = vcvt.s32.f32 %v452
      %v517 = vcvt.s32.f32 %v453
      %v518 = vcvt.s32.f32 %v454
      %v519 = vcvt.s32.f32 %v455
      %v520 = vcvt.s32.f32 %v456
      %v521 = vcvt.s32.f32 %v457
      %v522 = vcvt.s32.f32 %v458
      %v523 = vcvt.s32.f32 %v459
      %v524 = vcvt.s32.f32 %v460
      %v525 = vcvt.s32.f32 %v461
      %v526 = vcvt.s32.f32 %v462
      %v527 = vcvt.s32.f32 %v463
      %v528 = vcvt.s32.f32 %v464
      %v529 = vcvt.s32.f32 %v465
      %v530 = vcvt.s32.f32 %v466
      %v531 = vcvt.s32.f32 %v467
      %v532 = vcvt.s32.f32 %v468
      %v533 = vcvt.s32.f32 %v469
      %v534 = vcvt.s32.f32 %v470
      %v535 = vcvt.s32.f32 %v471
      %vm536 = vcmask 523264
      %537 = vst.msk [vmem:[#allocation2] sm:$0xff] %vm536, %v472
      %538 = vst.msk [vmem:[#allocation2 + $0x8] sm:$0xff] %vm536, %v473
      %539 = vst.msk [vmem:[#allocation2 + $0x10] sm:$0xff] %vm536, %v474
      %540 = vst.msk [vmem:[#allocation2 + $0x18] sm:$0xff] %vm536, %v475
      %541 = vst.msk [vmem:[#allocation2 + $0x20] sm:$0xff] %vm536, %v476
      %542 = vst.msk [vmem:[#allocation2 + $0x28] sm:$0xff] %vm536, %v477
      %543 = vst.msk [vmem:[#allocation2 + $0x30] sm:$0xff] %vm536, %v478
      %544 = vst.msk [vmem:[#allocation2 + $0x38] sm:$0xff] %vm536, %v479
      %545 = vst.msk [vmem:[#allocation2 + $0x40] sm:$0xff] %vm536, %v480
      %546 = vst.msk [vmem:[#allocation2 + $0x48] sm:$0xff] %vm536, %v481
      %547 = vst.msk [vmem:[#allocation2 + $0x50] sm:$0xff] %vm536, %v482
      %548 = vst.msk [vmem:[#allocation2 + $0x58] sm:$0xff] %vm536, %v483
      %549 = vst.msk [vmem:[#allocation2 + $0x60] sm:$0xff] %vm536, %v484
      %550 = vst.msk [vmem:[#allocation2 + $0x68] sm:$0xff] %vm536, %v485
      %551 = vst.msk [vmem:[#allocation2 + $0x70] sm:$0xff] %vm536, %v486
      %vm552 = vcmask 516096
      %553 = vst.msk [vmem:[#allocation2 + $0x78] sm:$0x1] %vm552, %v487
      %554 = vst.msk [vmem:[#allocation2 + $0x80] sm:$0xff] %vm536, %v488
      %555 = vst.msk [vmem:[#allocation2 + $0x88] sm:$0xff] %vm536, %v489
      %556 = vst.msk [vmem:[#allocation2 + $0x90] sm:$0xff] %vm536, %v490
      %557 = vst.msk [vmem:[#allocation2 + $0x98] sm:$0xff] %vm536, %v491
      %558 = vst.msk [vmem:[#allocation2 + $0xa0] sm:$0xff] %vm536, %v492
      %559 = vst.msk [vmem:[#allocation2 + $0xa8] sm:$0xff] %vm536, %v493
      %560 = vst.msk [vmem:[#allocation2 + $0xb0] sm:$0xff] %vm536, %v494
      %561 = vst.msk [vmem:[#allocation2 + $0xb8] sm:$0xff] %vm536, %v495
      %562 = vst.msk [vmem:[#allocation2 + $0xc0] sm:$0xff] %vm536, %v496
      %563 = vst.msk [vmem:[#allocation2 + $0xc8] sm:$0xff] %vm536, %v497
      %564 = vst.msk [vmem:[#allocation2 + $0xd0] sm:$0xff] %vm536, %v498
      %565 = vst.msk [vmem:[#allocation2 + $0xd8] sm:$0xff] %vm536, %v499
      %566 = vst.msk [vmem:[#allocation2 + $0xe0] sm:$0xff] %vm536, %v500
      %567 = vst.msk [vmem:[#allocation2 + $0xe8] sm:$0xff] %vm536, %v501
      %568 = vst.msk [vmem:[#allocation2 + $0xf0] sm:$0xff] %vm536, %v502
      %569 = vst.msk [vmem:[#allocation2 + $0xf8] sm:$0x1] %vm552, %v503
      %570 = vst.msk [vmem:[#allocation2 + $0x100] sm:$0xff] %vm536, %v504
      %571 = vst.msk [vmem:[#allocation2 + $0x108] sm:$0xff] %vm536, %v505
      %572 = vst.msk [vmem:[#allocation2 + $0x110] sm:$0xff] %vm536, %v506
      %573 = vst.msk [vmem:[#allocation2 + $0x118] sm:$0xff] %vm536, %v507
      %574 = vst.msk [vmem:[#allocation2 + $0x120] sm:$0xff] %vm536, %v508
      %575 = vst.msk [vmem:[#allocation2 + $0x128] sm:$0xff] %vm536, %v509
      %576 = vst.msk [vmem:[#allocation2 + $0x130] sm:$0xff] %vm536, %v510
      %577 = vst.msk [vmem:[#allocation2 + $0x138] sm:$0xff] %vm536, %v511
      %578 = vst.msk [vmem:[#allocation2 + $0x140] sm:$0xff] %vm536, %v512
      %579 = vst.msk [vmem:[#allocation2 + $0x148] sm:$0xff] %vm536, %v513
      %580 = vst.msk [vmem:[#allocation2 + $0x150] sm:$0xff] %vm536, %v514
      %581 = vst.msk [vmem:[#allocation2 + $0x158] sm:$0xff] %vm536, %v515
      %582 = vst.msk [vmem:[#allocation2 + $0x160] sm:$0xff] %vm536, %v516
      %583 = vst.msk [vmem:[#allocation2 + $0x168] sm:$0xff] %vm536, %v517
      %584 = vst.msk [vmem:[#allocation2 + $0x170] sm:$0xff] %vm536, %v518
      %585 = vst.msk [vmem:[#allocation2 + $0x178] sm:$0x1] %vm552, %v519
      %586 = vst.msk [vmem:[#allocation2 + $0x180] sm:$0xff] %vm536, %v520
      %587 = vst.msk [vmem:[#allocation2 + $0x188] sm:$0xff] %vm536, %v521
      %588 = vst.msk [vmem:[#allocation2 + $0x190] sm:$0xff] %vm536, %v522
      %589 = vst.msk [vmem:[#allocation2 + $0x198] sm:$0xff] %vm536, %v523
      %590 = vst.msk [vmem:[#allocation2 + $0x1a0] sm:$0xff] %vm536, %v524
      %591 = vst.msk [vmem:[#allocation2 + $0x1a8] sm:$0xff] %vm536, %v525
      %592 = vst.msk [vmem:[#allocation2 + $0x1b0] sm:$0xff] %vm536, %v526
      %593 = vst.msk [vmem:[#allocation2 + $0x1b8] sm:$0xff] %vm536, %v527
      %594 = vst.msk [vmem:[#allocation2 + $0x1c0] sm:$0xff] %vm536, %v528
      %595 = vst.msk [vmem:[#allocation2 + $0x1c8] sm:$0xff] %vm536, %v529
      %596 = vst.msk [vmem:[#allocation2 + $0x1d0] sm:$0xff] %vm536, %v530
      %597 = vst.msk [vmem:[#allocation2 + $0x1d8] sm:$0xff] %vm536, %v531
      %598 = vst.msk [vmem:[#allocation2 + $0x1e0] sm:$0xff] %vm536, %v532
      %599 = vst.msk [vmem:[#allocation2 + $0x1e8] sm:$0xff] %vm536, %v533
      %600 = vst.msk [vmem:[#allocation2 + $0x1f0] sm:$0xff] %vm536, %v534
      %601 = vst.msk [vmem:[#allocation2 + $0x1f8] sm:$0x1] %vm552, %v535
      %v602 = vlaneseq
      %vm603 = vcmp.ge.s32.totalorder %v602, 0
      %vm604 = vcmp.lt.s32.totalorder %v602, 256
      %vm605 = vmand %vm603, %vm604
      %s606 = scalar_lea.vmem [#allocation3], 213
      %607 = vst.msk [vmem:[%s606] ss:$8 sm:$0x3] %vm605, 0.0
      %608 = vst.msk [vmem:[%s606] ss:$8 sm:$0x0] %vm605, 0.0
      %v609 = vld [vmem:[#allocation2] sm:$0xff]
      %v610 = vld [vmem:[#allocation2 + $0x8] sm:$0xff]
      %v611 = vld [vmem:[#allocation2 + $0x10] sm:$0xff]
      %v612 = vld [vmem:[#allocation2 + $0x18] sm:$0xff]
      %v613 = vld [vmem:[#allocation2 + $0x20] sm:$0xff]
      %v614 = vld [vmem:[#allocation2 + $0x28] sm:$0xff]
      %v615 = vld [vmem:[#allocation2 + $0x30] sm:$0xff]
      %v616 = vld [vmem:[#allocation2 + $0x38] sm:$0xff]
      %v617 = vld [vmem:[#allocation2 + $0x40] sm:$0xff]
      %v618 = vld [vmem:[#allocation2 + $0x48] sm:$0xff]
      %v619 = vld [vmem:[#allocation2 + $0x50] sm:$0xff]
      %v620 = vld [vmem:[#allocation2 + $0x58] sm:$0xff]
      %v621 = vld [vmem:[#allocation2 + $0x60] sm:$0xff]
      %v622 = vld [vmem:[#allocation2 + $0x68] sm:$0x1f]
      %623 = vst.msk [vmem:[#allocation3] sm:$0xff] %vm536, %v609
      %624 = vst.msk [vmem:[#allocation3 + $0x10] sm:$0xff] %vm536, %v610
      %625 = vst.msk [vmem:[#allocation3 + $0x20] sm:$0xff] %vm536, %v611
      %626 = vst.msk [vmem:[#allocation3 + $0x30] sm:$0xff] %vm536, %v612
      %627 = vst.msk [vmem:[#allocation3 + $0x40] sm:$0xff] %vm536, %v613
      %628 = vst.msk [vmem:[#allocation3 + $0x50] sm:$0xff] %vm536, %v614
      %629 = vst.msk [vmem:[#allocation3 + $0x60] sm:$0xff] %vm536, %v615
      %630 = vst.msk [vmem:[#allocation3 + $0x70] sm:$0xff] %vm536, %v616
      %631 = vst.msk [vmem:[#allocation3 + $0x80] sm:$0xff] %vm536, %v617
      %632 = vst.msk [vmem:[#allocation3 + $0x90] sm:$0xff] %vm536, %v618
      %633 = vst.msk [vmem:[#allocation3 + $0xa0] sm:$0xff] %vm536, %v619
      %634 = vst.msk [vmem:[#allocation3 + $0xb0] sm:$0xff] %vm536, %v620
      %635 = vst.msk [vmem:[#allocation3 + $0xc0] sm:$0xff] %vm536, %v621
      %vm636 = vcmask 520192
      %637 = vst.msk [vmem:[#allocation3 + $0xd0] sm:$0x1f] %vm636, %v622
      %s638 = scalar_lea.vmem [#allocation2], 128
      %v639 = vld [vmem:[%s638] sm:$0xff]
      %v640 = vld [vmem:[%s638 + $0x8] sm:$0xff]
      %v641 = vld [vmem:[%s638 + $0x10] sm:$0xff]
      %v642 = vld [vmem:[%s638 + $0x18] sm:$0xff]
      %v643 = vld [vmem:[%s638 + $0x20] sm:$0xff]
      %v644 = vld [vmem:[%s638 + $0x28] sm:$0xff]
      %v645 = vld [vmem:[%s638 + $0x30] sm:$0xff]
      %v646 = vld [vmem:[%s638 + $0x38] sm:$0xff]
      %v647 = vld [vmem:[%s638 + $0x40] sm:$0xff]
      %v648 = vld [vmem:[%s638 + $0x48] sm:$0xff]
      %v649 = vld [vmem:[%s638 + $0x50] sm:$0xff]
      %v650 = vld [vmem:[%s638 + $0x58] sm:$0xff]
      %v651 = vld [vmem:[%s638 + $0x60] sm:$0xff]
      %v652 = vld [vmem:[%s638 + $0x68] sm:$0x1f]
      %667 = vrot.lane.b32.xlu0 %v639, 64
      %v668 = vpop.permute.xlu0 %667
      %669 = vrot.lane.b32.xlu0 %v640, 64
      %v670 = vpop.permute.xlu0 %669
      %671 = vrot.lane.b32.xlu0 %v641, 64
      %v672 = vpop.permute.xlu0 %671
      %673 = vrot.lane.b32.xlu0 %v642, 64
      %v674 = vpop.permute.xlu0 %673
      %675 = vrot.lane.b32.xlu0 %v643, 64
      %v676 = vpop.permute.xlu0 %675
      %677 = vrot.lane.b32.xlu0 %v644, 64
      %v678 = vpop.permute.xlu0 %677
      %679 = vrot.lane.b32.xlu0 %v645, 64
      %v680 = vpop.permute.xlu0 %679
      %681 = vrot.lane.b32.xlu0 %v646, 64
      %v682 = vpop.permute.xlu0 %681
      %683 = vrot.lane.b32.xlu0 %v647, 64
      %v684 = vpop.permute.xlu0 %683
      %685 = vrot.lane.b32.xlu0 %v648, 64
      %v686 = vpop.permute.xlu0 %685
      %687 = vrot.lane.b32.xlu0 %v649, 64
      %v688 = vpop.permute.xlu0 %687
      %689 = vrot.lane.b32.xlu0 %v650, 64
      %v690 = vpop.permute.xlu0 %689
      %691 = vrot.lane.b32.xlu0 %v651, 64
      %v692 = vpop.permute.xlu0 %691
      %693 = vrot.lane.b32.xlu0 %v652, 64
      %v694 = vpop.permute.xlu0 %693
      %vm709 = vcmask 1048064
      %710 = vst.msk [vmem:[#allocation3] sm:$0xff] %vm709, %v668
      %711 = vst.msk [vmem:[#allocation3 + $0x10] sm:$0xff] %vm709, %v670
      %712 = vst.msk [vmem:[#allocation3 + $0x20] sm:$0xff] %vm709, %v672
      %713 = vst.msk [vmem:[#allocation3 + $0x30] sm:$0xff] %vm709, %v674
      %714 = vst.msk [vmem:[#allocation3 + $0x40] sm:$0xff] %vm709, %v676
      %715 = vst.msk [vmem:[#allocation3 + $0x50] sm:$0xff] %vm709, %v678
      %716 = vst.msk [vmem:[#allocation3 + $0x60] sm:$0xff] %vm709, %v680
      %717 = vst.msk [vmem:[#allocation3 + $0x70] sm:$0xff] %vm709, %v682
      %718 = vst.msk [vmem:[#allocation3 + $0x80] sm:$0xff] %vm709, %v684
      %719 = vst.msk [vmem:[#allocation3 + $0x90] sm:$0xff] %vm709, %v686
      %720 = vst.msk [vmem:[#allocation3 + $0xa0] sm:$0xff] %vm709, %v688
      %721 = vst.msk [vmem:[#allocation3 + $0xb0] sm:$0xff] %vm709, %v690
      %722 = vst.msk [vmem:[#allocation3 + $0xc0] sm:$0xff] %vm709, %v692
      %vm723 = vcmask 1044992
      %724 = vst.msk [vmem:[#allocation3 + $0xd0] sm:$0x1f] %vm723, %v694
      %s725 = scalar_lea.vmem [#allocation2], 256
      %v726 = vld [vmem:[%s725] sm:$0xff]
      %v727 = vld [vmem:[%s725 + $0x8] sm:$0xff]
      %v728 = vld [vmem:[%s725 + $0x10] sm:$0xff]
      %v729 = vld [vmem:[%s725 + $0x18] sm:$0xff]
      %v730 = vld [vmem:[%s725 + $0x20] sm:$0xff]
      %v731 = vld [vmem:[%s725 + $0x28] sm:$0xff]
      %v732 = vld [vmem:[%s725 + $0x30] sm:$0xff]
      %v733 = vld [vmem:[%s725 + $0x38] sm:$0xff]
      %v734 = vld [vmem:[%s725 + $0x40] sm:$0xff]
      %v735 = vld [vmem:[%s725 + $0x48] sm:$0xff]
      %v736 = vld [vmem:[%s725 + $0x50] sm:$0xff]
      %v737 = vld [vmem:[%s725 + $0x58] sm:$0xff]
      %v738 = vld [vmem:[%s725 + $0x60] sm:$0xff]
      %v739 = vld [vmem:[%s725 + $0x68] sm:$0x1f]
      %740 = vst.msk [vmem:[#allocation3 + $0x8] sm:$0xff] %vm536, %v726
      %741 = vst.msk [vmem:[#allocation3 + $0x18] sm:$0xff] %vm536, %v727
      %742 = vst.msk [vmem:[#allocation3 + $0x28] sm:$0xff] %vm536, %v728
      %743 = vst.msk [vmem:[#allocation3 + $0x38] sm:$0xff] %vm536, %v729
      %744 = vst.msk [vmem:[#allocation3 + $0x48] sm:$0xff] %vm536, %v730
      %745 = vst.msk [vmem:[#allocation3 + $0x58] sm:$0xff] %vm536, %v731
      %746 = vst.msk [vmem:[#allocation3 + $0x68] sm:$0xff] %vm536, %v732
      %747 = vst.msk [vmem:[#allocation3 + $0x78] sm:$0xff] %vm536, %v733
      %748 = vst.msk [vmem:[#allocation3 + $0x88] sm:$0xff] %vm536, %v734
      %749 = vst.msk [vmem:[#allocation3 + $0x98] sm:$0xff] %vm536, %v735
      %750 = vst.msk [vmem:[#allocation3 + $0xa8] sm:$0xff] %vm536, %v736
      %751 = vst.msk [vmem:[#allocation3 + $0xb8] sm:$0xff] %vm536, %v737
      %752 = vst.msk [vmem:[#allocation3 + $0xc8] sm:$0xff] %vm536, %v738
      %753 = vst.msk [vmem:[#allocation3 + $0xd8] sm:$0x1f] %vm636, %v739
      %s754 = scalar_lea.vmem [#allocation2], 384
      %v755 = vld [vmem:[%s754] sm:$0xff]
      %v756 = vld [vmem:[%s754 + $0x8] sm:$0xff]
      %v757 = vld [vmem:[%s754 + $0x10] sm:$0xff]
      %v758 = vld [vmem:[%s754 + $0x18] sm:$0xff]
      %v759 = vld [vmem:[%s754 + $0x20] sm:$0xff]
      %v760 = vld [vmem:[%s754 + $0x28] sm:$0xff]
      %v761 = vld [vmem:[%s754 + $0x30] sm:$0xff]
      %v762 = vld [vmem:[%s754 + $0x38] sm:$0xff]
      %v763 = vld [vmem:[%s754 + $0x40] sm:$0xff]
      %v764 = vld [vmem:[%s754 + $0x48] sm:$0xff]
      %v765 = vld [vmem:[%s754 + $0x50] sm:$0xff]
      %v766 = vld [vmem:[%s754 + $0x58] sm:$0xff]
      %v767 = vld [vmem:[%s754 + $0x60] sm:$0xff]
      %v768 = vld [vmem:[%s754 + $0x68] sm:$0x1f]
      %783 = vrot.lane.b32.xlu0 %v755, 64
      %v784 = vpop.permute.xlu0 %783
      %785 = vrot.lane.b32.xlu0 %v756, 64
      %v786 = vpop.permute.xlu0 %785
      %787 = vrot.lane.b32.xlu0 %v757, 64
      %v788 = vpop.permute.xlu0 %787
      %789 = vrot.lane.b32.xlu0 %v758, 64
      %v790 = vpop.permute.xlu0 %789
      %791 = vrot.lane.b32.xlu0 %v759, 64
      %v792 = vpop.permute.xlu0 %791
      %793 = vrot.lane.b32.xlu0 %v760, 64
      %v794 = vpop.permute.xlu0 %793
      %795 = vrot.lane.b32.xlu0 %v761, 64
      %v796 = vpop.permute.xlu0 %795
      %797 = vrot.lane.b32.xlu0 %v762, 64
      %v798 = vpop.permute.xlu0 %797
      %799 = vrot.lane.b32.xlu0 %v763, 64
      %v800 = vpop.permute.xlu0 %799
      %801 = vrot.lane.b32.xlu0 %v764, 64
      %v802 = vpop.permute.xlu0 %801
      %803 = vrot.lane.b32.xlu0 %v765, 64
      %v804 = vpop.permute.xlu0 %803
      %805 = vrot.lane.b32.xlu0 %v766, 64
      %v806 = vpop.permute.xlu0 %805
      %807 = vrot.lane.b32.xlu0 %v767, 64
      %v808 = vpop.permute.xlu0 %807
      %809 = vrot.lane.b32.xlu0 %v768, 64
      %v810 = vpop.permute.xlu0 %809
      %825 = vst.msk [vmem:[#allocation3 + $0x8] sm:$0xff] %vm709, %v784
      %826 = vst.msk [vmem:[#allocation3 + $0x18] sm:$0xff] %vm709, %v786
      %827 = vst.msk [vmem:[#allocation3 + $0x28] sm:$0xff] %vm709, %v788
      %828 = vst.msk [vmem:[#allocation3 + $0x38] sm:$0xff] %vm709, %v790
      %829 = vst.msk [vmem:[#allocation3 + $0x48] sm:$0xff] %vm709, %v792
      %830 = vst.msk [vmem:[#allocation3 + $0x58] sm:$0xff] %vm709, %v794
      %831 = vst.msk [vmem:[#allocation3 + $0x68] sm:$0xff] %vm709, %v796
      %832 = vst.msk [vmem:[#allocation3 + $0x78] sm:$0xff] %vm709, %v798
      %833 = vst.msk [vmem:[#allocation3 + $0x88] sm:$0xff] %vm709, %v800
      %834 = vst.msk [vmem:[#allocation3 + $0x98] sm:$0xff] %vm709, %v802
      %835 = vst.msk [vmem:[#allocation3 + $0xa8] sm:$0xff] %vm709, %v804
      %836 = vst.msk [vmem:[#allocation3 + $0xb8] sm:$0xff] %vm709, %v806
      %837 = vst.msk [vmem:[#allocation3 + $0xc8] sm:$0xff] %vm709, %v808
      %838 = vst.msk [vmem:[#allocation3 + $0xd8] sm:$0x1f] %vm723, %v810
      %s839 = scalar_lea.vmem [#allocation3], 435
      %840 = vst.msk [vmem:[%s839] ss:$8 sm:$0x3] %vm605, 0.0
      %841 = vst.msk [vmem:[%s839] ss:$8 sm:$0x0] %vm605, 0.0
      %v842 = vld [vmem:[%s638] sm:$0xff]
      %v843 = vld [vmem:[%s638 + $0x8] sm:$0xff]
      %v844 = vld [vmem:[%s638 + $0x10] sm:$0xff]
      %v845 = vld [vmem:[%s638 + $0x18] sm:$0xff]
      %v846 = vld [vmem:[%s638 + $0x20] sm:$0xff]
      %v847 = vld [vmem:[%s638 + $0x28] sm:$0xff]
      %v848 = vld [vmem:[%s638 + $0x30] sm:$0xff]
      %v849 = vld [vmem:[%s638 + $0x38] sm:$0xff]
      %v850 = vld [vmem:[%s638 + $0x40] sm:$0xff]
      %v851 = vld [vmem:[%s638 + $0x48] sm:$0xff]
      %v852 = vld [vmem:[%s638 + $0x50] sm:$0xff]
      %v853 = vld [vmem:[%s638 + $0x58] sm:$0xff]
      %v854 = vld [vmem:[%s638 + $0x60] sm:$0xff]
      %v855 = vld [vmem:[%s638 + $0x68] sm:$0x1f]
      %vm870 = vcmask 1045504
      %v871 = vrot.slane %v842, 2
      %v872 = vrot.slane %v843, 2
      %v873 = vsel %vm870, %v871, %v872
      %v874 = vrot.slane %v844, 2
      %v875 = vsel %vm870, %v872, %v874
      %v876 = vrot.slane %v845, 2
      %v877 = vsel %vm870, %v874, %v876
      %v878 = vrot.slane %v846, 2
      %v879 = vsel %vm870, %v876, %v878
      %v880 = vrot.slane %v847, 2
      %v881 = vsel %vm870, %v878, %v880
      %v882 = vrot.slane %v848, 2
      %v883 = vsel %vm870, %v880, %v882
      %v884 = vrot.slane %v849, 2
      %v885 = vsel %vm870, %v882, %v884
      %v886 = vrot.slane %v850, 2
      %v887 = vsel %vm870, %v884, %v886
      %v888 = vrot.slane %v851, 2
      %v889 = vsel %vm870, %v886, %v888
      %v890 = vrot.slane %v852, 2
      %v891 = vsel %vm870, %v888, %v890
      %v892 = vrot.slane %v853, 2
      %v893 = vsel %vm870, %v890, %v892
      %v894 = vrot.slane %v854, 2
      %v895 = vsel %vm870, %v892, %v894
      %v896 = vrot.slane %v855, 2
      %v897 = vsel %vm870, %v894, %v896
      %vm913 = vcmask 523270
      %914 = vst.msk [vmem:[#allocation3 + $0xd0] sm:$0xc0] %vm913, %v871
      %915 = vst.msk [vmem:[#allocation3 + $0xe0] sm:$0xff] %vm536, %v873
      %916 = vst.msk [vmem:[#allocation3 + $0xf0] sm:$0xff] %vm536, %v875
      %917 = vst.msk [vmem:[#allocation3 + $0x100] sm:$0xff] %vm536, %v877
      %918 = vst.msk [vmem:[#allocation3 + $0x110] sm:$0xff] %vm536, %v879
      %919 = vst.msk [vmem:[#allocation3 + $0x120] sm:$0xff] %vm536, %v881
      %920 = vst.msk [vmem:[#allocation3 + $0x130] sm:$0xff] %vm536, %v883
      %921 = vst.msk [vmem:[#allocation3 + $0x140] sm:$0xff] %vm536, %v885
      %922 = vst.msk [vmem:[#allocation3 + $0x150] sm:$0xff] %vm536, %v887
      %923 = vst.msk [vmem:[#allocation3 + $0x160] sm:$0xff] %vm536, %v889
      %924 = vst.msk [vmem:[#allocation3 + $0x170] sm:$0xff] %vm536, %v891
      %925 = vst.msk [vmem:[#allocation3 + $0x180] sm:$0xff] %vm536, %v893
      %926 = vst.msk [vmem:[#allocation3 + $0x190] sm:$0xff] %vm536, %v895
      %927 = vst.msk [vmem:[#allocation3 + $0x1a0] sm:$0xff] %vm536, %v897
      %vm928 = vcmask 518144
      %929 = vst.msk [vmem:[#allocation3 + $0x1b0] sm:$0x7] %vm928, %v896
      %v930 = vld [vmem:[#allocation2 + $0x1] sm:$0xff]
      %v931 = vld [vmem:[#allocation2 + $0x9] sm:$0xff]
      %v932 = vld [vmem:[#allocation2 + $0x11] sm:$0xff]
      %v933 = vld [vmem:[#allocation2 + $0x19] sm:$0xff]
      %v934 = vld [vmem:[#allocation2 + $0x21] sm:$0xff]
      %v935 = vld [vmem:[#allocation2 + $0x29] sm:$0xff]
      %v936 = vld [vmem:[#allocation2 + $0x31] sm:$0xff]
      %v937 = vld [vmem:[#allocation2 + $0x39] sm:$0xff]
      %v938 = vld [vmem:[#allocation2 + $0x41] sm:$0xff]
      %v939 = vld [vmem:[#allocation2 + $0x49] sm:$0xff]
      %v940 = vld [vmem:[#allocation2 + $0x51] sm:$0xff]
      %v941 = vld [vmem:[#allocation2 + $0x59] sm:$0xff]
      %v942 = vld [vmem:[#allocation2 + $0x61] sm:$0xff]
      %v943 = vld [vmem:[#allocation2 + $0x69] sm:$0x1f]
      %v958 = vrot.slane %v930, 2
      %v959 = vrot.slane %v931, 2
      %v960 = vsel %vm870, %v958, %v959
      %v961 = vrot.slane %v932, 2
      %v962 = vsel %vm870, %v959, %v961
      %v963 = vrot.slane %v933, 2
      %v964 = vsel %vm870, %v961, %v963
      %v965 = vrot.slane %v934, 2
      %v966 = vsel %vm870, %v963, %v965
      %v967 = vrot.slane %v935, 2
      %v968 = vsel %vm870, %v965, %v967
      %v969 = vrot.slane %v936, 2
      %v970 = vsel %vm870, %v967, %v969
      %v971 = vrot.slane %v937, 2
      %v972 = vsel %vm870, %v969, %v971
      %v973 = vrot.slane %v938, 2
      %v974 = vsel %vm870, %v971, %v973
      %v975 = vrot.slane %v939, 2
      %v976 = vsel %vm870, %v973, %v975
      %v977 = vrot.slane %v940, 2
      %v978 = vsel %vm870, %v975, %v977
      %v979 = vrot.slane %v941, 2
      %v980 = vsel %vm870, %v977, %v979
      %v981 = vrot.slane %v942, 2
      %v982 = vsel %vm870, %v979, %v981
      %v983 = vrot.slane %v943, 2
      %v984 = vsel %vm870, %v981, %v983
      %985 = vrot.lane.b32.xlu0 %v958, 64
      %v986 = vpop.permute.xlu0 %985
      %987 = vrot.lane.b32.xlu0 %v960, 64
      %v988 = vpop.permute.xlu0 %987
      %989 = vrot.lane.b32.xlu0 %v962, 64
      %v990 = vpop.permute.xlu0 %989
      %991 = vrot.lane.b32.xlu0 %v964, 64
      %v992 = vpop.permute.xlu0 %991
      %993 = vrot.lane.b32.xlu0 %v966, 64
      %v994 = vpop.permute.xlu0 %993
      %995 = vrot.lane.b32.xlu0 %v968, 64
      %v996 = vpop.permute.xlu0 %995
      %997 = vrot.lane.b32.xlu0 %v970, 64
      %v998 = vpop.permute.xlu0 %997
      %999 = vrot.lane.b32.xlu0 %v972, 64
      %v1000 = vpop.permute.xlu0 %999
      %1001 = vrot.lane.b32.xlu0 %v974, 64
      %v1002 = vpop.permute.xlu0 %1001
      %1003 = vrot.lane.b32.xlu0 %v976, 64
      %v1004 = vpop.permute.xlu0 %1003
      %1005 = vrot.lane.b32.xlu0 %v978, 64
      %v1006 = vpop.permute.xlu0 %1005
      %1007 = vrot.lane.b32.xlu0 %v980, 64
      %v1008 = vpop.permute.xlu0 %1007
      %1009 = vrot.lane.b32.xlu0 %v982, 64
      %v1010 = vpop.permute.xlu0 %1009
      %1011 = vrot.lane.b32.xlu0 %v984, 64
      %v1012 = vpop.permute.xlu0 %1011
      %1013 = vrot.lane.b32.xlu0 %v983, 64
      %v1014 = vpop.permute.xlu0 %1013
      %vm1030 = vcmask 1048070
      %1031 = vst.msk [vmem:[#allocation3 + $0xd0] sm:$0xc0] %vm1030, %v986
      %1032 = vst.msk [vmem:[#allocation3 + $0xe0] sm:$0xff] %vm709, %v988
      %1033 = vst.msk [vmem:[#allocation3 + $0xf0] sm:$0xff] %vm709, %v990
      %1034 = vst.msk [vmem:[#allocation3 + $0x100] sm:$0xff] %vm709, %v992
      %1035 = vst.msk [vmem:[#allocation3 + $0x110] sm:$0xff] %vm709, %v994
      %1036 = vst.msk [vmem:[#allocation3 + $0x120] sm:$0xff] %vm709, %v996
      %1037 = vst.msk [vmem:[#allocation3 + $0x130] sm:$0xff] %vm709, %v998
      %1038 = vst.msk [vmem:[#allocation3 + $0x140] sm:$0xff] %vm709, %v1000
      %1039 = vst.msk [vmem:[#allocation3 + $0x150] sm:$0xff] %vm709, %v1002
      %1040 = vst.msk [vmem:[#allocation3 + $0x160] sm:$0xff] %vm709, %v1004
      %1041 = vst.msk [vmem:[#allocation3 + $0x170] sm:$0xff] %vm709, %v1006
      %1042 = vst.msk [vmem:[#allocation3 + $0x180] sm:$0xff] %vm709, %v1008
      %1043 = vst.msk [vmem:[#allocation3 + $0x190] sm:$0xff] %vm709, %v1010
      %1044 = vst.msk [vmem:[#allocation3 + $0x1a0] sm:$0xff] %vm709, %v1012
      %vm1045 = vcmask 1042944
      %1046 = vst.msk [vmem:[#allocation3 + $0x1b0] sm:$0x7] %vm1045, %v1014
      %v1047 = vld [vmem:[%s754] sm:$0xff]
      %v1048 = vld [vmem:[%s754 + $0x8] sm:$0xff]
      %v1049 = vld [vmem:[%s754 + $0x10] sm:$0xff]
      %v1050 = vld [vmem:[%s754 + $0x18] sm:$0xff]
      %v1051 = vld [vmem:[%s754 + $0x20] sm:$0xff]
      %v1052 = vld [vmem:[%s754 + $0x28] sm:$0xff]
      %v1053 = vld [vmem:[%s754 + $0x30] sm:$0xff]
      %v1054 = vld [vmem:[%s754 + $0x38] sm:$0xff]
      %v1055 = vld [vmem:[%s754 + $0x40] sm:$0xff]
      %v1056 = vld [vmem:[%s754 + $0x48] sm:$0xff]
      %v1057 = vld [vmem:[%s754 + $0x50] sm:$0xff]
      %v1058 = vld [vmem:[%s754 + $0x58] sm:$0xff]
      %v1059 = vld [vmem:[%s754 + $0x60] sm:$0xff]
      %v1060 = vld [vmem:[%s754 + $0x68] sm:$0x1f]
      %v1075 = vrot.slane %v1047, 2
      %v1076 = vrot.slane %v1048, 2
      %v1077 = vsel %vm870, %v1075, %v1076
      %v1078 = vrot.slane %v1049, 2
      %v1079 = vsel %vm870, %v1076, %v1078
      %v1080 = vrot.slane %v1050, 2
      %v1081 = vsel %vm870, %v1078, %v1080
      %v1082 = vrot.slane %v1051, 2
      %v1083 = vsel %vm870, %v1080, %v1082
      %v1084 = vrot.slane %v1052, 2
      %v1085 = vsel %vm870, %v1082, %v1084
      %v1086 = vrot.slane %v1053, 2
      %v1087 = vsel %vm870, %v1084, %v1086
      %v1088 = vrot.slane %v1054, 2
      %v1089 = vsel %vm870, %v1086, %v1088
      %v1090 = vrot.slane %v1055, 2
      %v1091 = vsel %vm870, %v1088, %v1090
      %v1092 = vrot.slane %v1056, 2
      %v1093 = vsel %vm870, %v1090, %v1092
      %v1094 = vrot.slane %v1057, 2
      %v1095 = vsel %vm870, %v1092, %v1094
      %v1096 = vrot.slane %v1058, 2
      %v1097 = vsel %vm870, %v1094, %v1096
      %v1098 = vrot.slane %v1059, 2
      %v1099 = vsel %vm870, %v1096, %v1098
      %v1100 = vrot.slane %v1060, 2
      %v1101 = vsel %vm870, %v1098, %v1100
      %1117 = vst.msk [vmem:[#allocation3 + $0xd8] sm:$0xc0] %vm913, %v1075
      %1118 = vst.msk [vmem:[#allocation3 + $0xe8] sm:$0xff] %vm536, %v1077
      %1119 = vst.msk [vmem:[#allocation3 + $0xf8] sm:$0xff] %vm536, %v1079
      %1120 = vst.msk [vmem:[#allocation3 + $0x108] sm:$0xff] %vm536, %v1081
      %1121 = vst.msk [vmem:[#allocation3 + $0x118] sm:$0xff] %vm536, %v1083
      %1122 = vst.msk [vmem:[#allocation3 + $0x128] sm:$0xff] %vm536, %v1085
      %1123 = vst.msk [vmem:[#allocation3 + $0x138] sm:$0xff] %vm536, %v1087
      %1124 = vst.msk [vmem:[#allocation3 + $0x148] sm:$0xff] %vm536, %v1089
      %1125 = vst.msk [vmem:[#allocation3 + $0x158] sm:$0xff] %vm536, %v1091
      %1126 = vst.msk [vmem:[#allocation3 + $0x168] sm:$0xff] %vm536, %v1093
      %1127 = vst.msk [vmem:[#allocation3 + $0x178] sm:$0xff] %vm536, %v1095
      %1128 = vst.msk [vmem:[#allocation3 + $0x188] sm:$0xff] %vm536, %v1097
      %1129 = vst.msk [vmem:[#allocation3 + $0x198] sm:$0xff] %vm536, %v1099
      %1130 = vst.msk [vmem:[#allocation3 + $0x1a8] sm:$0xff] %vm536, %v1101
      %1131 = vst.msk [vmem:[#allocation3 + $0x1b8] sm:$0x7] %vm928, %v1100
      %v1132 = vld [vmem:[%s725 + $0x1] sm:$0xff]
      %v1133 = vld [vmem:[%s725 + $0x9] sm:$0xff]
      %v1134 = vld [vmem:[%s725 + $0x11] sm:$0xff]
      %v1135 = vld [vmem:[%s725 + $0x19] sm:$0xff]
      %v1136 = vld [vmem:[%s725 + $0x21] sm:$0xff]
      %v1137 = vld [vmem:[%s725 + $0x29] sm:$0xff]
      %v1138 = vld [vmem:[%s725 + $0x31] sm:$0xff]
      %v1139 = vld [vmem:[%s725 + $0x39] sm:$0xff]
      %v1140 = vld [vmem:[%s725 + $0x41] sm:$0xff]
      %v1141 = vld [vmem:[%s725 + $0x49] sm:$0xff]
      %v1142 = vld [vmem:[%s725 + $0x51] sm:$0xff]
      %v1143 = vld [vmem:[%s725 + $0x59] sm:$0xff]
      %v1144 = vld [vmem:[%s725 + $0x61] sm:$0xff]
      %v1145 = vld [vmem:[%s725 + $0x69] sm:$0x1f]
      %v1160 = vrot.slane %v1132, 2
      %v1161 = vrot.slane %v1133, 2
      %v1162 = vsel %vm870, %v1160, %v1161
      %v1163 = vrot.slane %v1134, 2
      %v1164 = vsel %vm870, %v1161, %v1163
      %v1165 = vrot.slane %v1135, 2
      %v1166 = vsel %vm870, %v1163, %v1165
      %v1167 = vrot.slane %v1136, 2
      %v1168 = vsel %vm870, %v1165, %v1167
      %v1169 = vrot.slane %v1137, 2
      %v1170 = vsel %vm870, %v1167, %v1169
      %v1171 = vrot.slane %v1138, 2
      %v1172 = vsel %vm870, %v1169, %v1171
      %v1173 = vrot.slane %v1139, 2
      %v1174 = vsel %vm870, %v1171, %v1173
      %v1175 = vrot.slane %v1140, 2
      %v1176 = vsel %vm870, %v1173, %v1175
      %v1177 = vrot.slane %v1141, 2
      %v1178 = vsel %vm870, %v1175, %v1177
      %v1179 = vrot.slane %v1142, 2
      %v1180 = vsel %vm870, %v1177, %v1179
      %v1181 = vrot.slane %v1143, 2
      %v1182 = vsel %vm870, %v1179, %v1181
      %v1183 = vrot.slane %v1144, 2
      %v1184 = vsel %vm870, %v1181, %v1183
      %v1185 = vrot.slane %v1145, 2
      %v1186 = vsel %vm870, %v1183, %v1185
      %1187 = vrot.lane.b32.xlu0 %v1160, 64
      %v1188 = vpop.permute.xlu0 %1187
      %1189 = vrot.lane.b32.xlu0 %v1162, 64
      %v1190 = vpop.permute.xlu0 %1189
      %1191 = vrot.lane.b32.xlu0 %v1164, 64
      %v1192 = vpop.permute.xlu0 %1191
      %1193 = vrot.lane.b32.xlu0 %v1166, 64
      %v1194 = vpop.permute.xlu0 %1193
      %1195 = vrot.lane.b32.xlu0 %v1168, 64
      %v1196 = vpop.permute.xlu0 %1195
      %1197 = vrot.lane.b32.xlu0 %v1170, 64
      %v1198 = vpop.permute.xlu0 %1197
      %1199 = vrot.lane.b32.xlu0 %v1172, 64
      %v1200 = vpop.permute.xlu0 %1199
      %1201 = vrot.lane.b32.xlu0 %v1174, 64
      %v1202 = vpop.permute.xlu0 %1201
      %1203 = vrot.lane.b32.xlu0 %v1176, 64
      %v1204 = vpop.permute.xlu0 %1203
      %1205 = vrot.lane.b32.xlu0 %v1178, 64
      %v1206 = vpop.permute.xlu0 %1205
      %1207 = vrot.lane.b32.xlu0 %v1180, 64
      %v1208 = vpop.permute.xlu0 %1207
      %1209 = vrot.lane.b32.xlu0 %v1182, 64
      %v1210 = vpop.permute.xlu0 %1209
      %1211 = vrot.lane.b32.xlu0 %v1184, 64
      %v1212 = vpop.permute.xlu0 %1211
      %1213 = vrot.lane.b32.xlu0 %v1186, 64
      %v1214 = vpop.permute.xlu0 %1213
      %1215 = vrot.lane.b32.xlu0 %v1185, 64
      %v1216 = vpop.permute.xlu0 %1215
      %1232 = vst.msk [vmem:[#allocation3 + $0xd8] sm:$0xc0] %vm1030, %v1188
      %1233 = vst.msk [vmem:[#allocation3 + $0xe8] sm:$0xff] %vm709, %v1190
      %1234 = vst.msk [vmem:[#allocation3 + $0xf8] sm:$0xff] %vm709, %v1192
      %1235 = vst.msk [vmem:[#allocation3 + $0x108] sm:$0xff] %vm709, %v1194
      %1236 = vst.msk [vmem:[#allocation3 + $0x118] sm:$0xff] %vm709, %v1196
      %1237 = vst.msk [vmem:[#allocation3 + $0x128] sm:$0xff] %vm709, %v1198
      %1238 = vst.msk [vmem:[#allocation3 + $0x138] sm:$0xff] %vm709, %v1200
      %1239 = vst.msk [vmem:[#allocation3 + $0x148] sm:$0xff] %vm709, %v1202
      %1240 = vst.msk [vmem:[#allocation3 + $0x158] sm:$0xff] %vm709, %v1204
      %1241 = vst.msk [vmem:[#allocation3 + $0x168] sm:$0xff] %vm709, %v1206
      %1242 = vst.msk [vmem:[#allocation3 + $0x178] sm:$0xff] %vm709, %v1208
      %1243 = vst.msk [vmem:[#allocation3 + $0x188] sm:$0xff] %vm709, %v1210
      %1244 = vst.msk [vmem:[#allocation3 + $0x198] sm:$0xff] %vm709, %v1212
      %1245 = vst.msk [vmem:[#allocation3 + $0x1a8] sm:$0xff] %vm709, %v1214
      %1246 = vst.msk [vmem:[#allocation3 + $0x1b8] sm:$0x7] %vm1045, %v1216
      %s1247 = scalar_lea.vmem [#allocation3], 657
      %1248 = vst.msk [vmem:[%s1247] ss:$8 sm:$0x3] %vm605, 0.0
      %1249 = vst.msk [vmem:[%s1247] ss:$8 sm:$0x0] %vm605, 0.0
      %v1250 = vld [vmem:[%s725] sm:$0xff]
      %v1251 = vld [vmem:[%s725 + $0x8] sm:$0xff]
      %v1252 = vld [vmem:[%s725 + $0x10] sm:$0xff]
      %v1253 = vld [vmem:[%s725 + $0x18] sm:$0xff]
      %v1254 = vld [vmem:[%s725 + $0x20] sm:$0xff]
      %v1255 = vld [vmem:[%s725 + $0x28] sm:$0xff]
      %v1256 = vld [vmem:[%s725 + $0x30] sm:$0xff]
      %v1257 = vld [vmem:[%s725 + $0x38] sm:$0xff]
      %v1258 = vld [vmem:[%s725 + $0x40] sm:$0xff]
      %v1259 = vld [vmem:[%s725 + $0x48] sm:$0xff]
      %v1260 = vld [vmem:[%s725 + $0x50] sm:$0xff]
      %v1261 = vld [vmem:[%s725 + $0x58] sm:$0xff]
      %v1262 = vld [vmem:[%s725 + $0x60] sm:$0xff]
      %v1263 = vld [vmem:[%s725 + $0x68] sm:$0x1f]
      %vm1278 = vcmask 1043456
      %v1279 = vrot.slane %v1250, 4
      %v1280 = vrot.slane %v1251, 4
      %v1281 = vsel %vm1278, %v1279, %v1280
      %v1282 = vrot.slane %v1252, 4
      %v1283 = vsel %vm1278, %v1280, %v1282
      %v1284 = vrot.slane %v1253, 4
      %v1285 = vsel %vm1278, %v1282, %v1284
      %v1286 = vrot.slane %v1254, 4
      %v1287 = vsel %vm1278, %v1284, %v1286
      %v1288 = vrot.slane %v1255, 4
      %v1289 = vsel %vm1278, %v1286, %v1288
      %v1290 = vrot.slane %v1256, 4
      %v1291 = vsel %vm1278, %v1288, %v1290
      %v1292 = vrot.slane %v1257, 4
      %v1293 = vsel %vm1278, %v1290, %v1292
      %v1294 = vrot.slane %v1258, 4
      %v1295 = vsel %vm1278, %v1292, %v1294
      %v1296 = vrot.slane %v1259, 4
      %v1297 = vsel %vm1278, %v1294, %v1296
      %v1298 = vrot.slane %v1260, 4
      %v1299 = vsel %vm1278, %v1296, %v1298
      %v1300 = vrot.slane %v1261, 4
      %v1301 = vsel %vm1278, %v1298, %v1300
      %v1302 = vrot.slane %v1262, 4
      %v1303 = vsel %vm1278, %v1300, %v1302
      %v1304 = vrot.slane %v1263, 4
      %v1305 = vsel %vm1278, %v1302, %v1304
      %vm1321 = vcmask 523268
      %1322 = vst.msk [vmem:[#allocation3 + $0x1b0] sm:$0xf0] %vm1321, %v1279
      %1323 = vst.msk [vmem:[#allocation3 + $0x1c0] sm:$0xff] %vm536, %v1281
      %1324 = vst.msk [vmem:[#allocation3 + $0x1d0] sm:$0xff] %vm536, %v1283
      %1325 = vst.msk [vmem:[#allocation3 + $0x1e0] sm:$0xff] %vm536, %v1285
      %1326 = vst.msk [vmem:[#allocation3 + $0x1f0] sm:$0xff] %vm536, %v1287
      %1327 = vst.msk [vmem:[#allocation3 + $0x200] sm:$0xff] %vm536, %v1289
      %1328 = vst.msk [vmem:[#allocation3 + $0x210] sm:$0xff] %vm536, %v1291
      %1329 = vst.msk [vmem:[#allocation3 + $0x220] sm:$0xff] %vm536, %v1293
      %1330 = vst.msk [vmem:[#allocation3 + $0x230] sm:$0xff] %vm536, %v1295
      %1331 = vst.msk [vmem:[#allocation3 + $0x240] sm:$0xff] %vm536, %v1297
      %1332 = vst.msk [vmem:[#allocation3 + $0x250] sm:$0xff] %vm536, %v1299
      %1333 = vst.msk [vmem:[#allocation3 + $0x260] sm:$0xff] %vm536, %v1301
      %1334 = vst.msk [vmem:[#allocation3 + $0x270] sm:$0xff] %vm536, %v1303
      %1335 = vst.msk [vmem:[#allocation3 + $0x280] sm:$0xff] %vm536, %v1305
      %1336 = vst.msk [vmem:[#allocation3 + $0x290] sm:$0x1] %vm552, %v1304
      %v1337 = vld [vmem:[%s754] sm:$0xff]
      %v1338 = vld [vmem:[%s754 + $0x8] sm:$0xff]
      %v1339 = vld [vmem:[%s754 + $0x10] sm:$0xff]
      %v1340 = vld [vmem:[%s754 + $0x18] sm:$0xff]
      %v1341 = vld [vmem:[%s754 + $0x20] sm:$0xff]
      %v1342 = vld [vmem:[%s754 + $0x28] sm:$0xff]
      %v1343 = vld [vmem:[%s754 + $0x30] sm:$0xff]
      %v1344 = vld [vmem:[%s754 + $0x38] sm:$0xff]
      %v1345 = vld [vmem:[%s754 + $0x40] sm:$0xff]
      %v1346 = vld [vmem:[%s754 + $0x48] sm:$0xff]
      %v1347 = vld [vmem:[%s754 + $0x50] sm:$0xff]
      %v1348 = vld [vmem:[%s754 + $0x58] sm:$0xff]
      %v1349 = vld [vmem:[%s754 + $0x60] sm:$0xff]
      %v1350 = vld [vmem:[%s754 + $0x68] sm:$0x1f]
      %v1365 = vrot.slane %v1337, 4
      %v1366 = vrot.slane %v1338, 4
      %v1367 = vsel %vm1278, %v1365, %v1366
      %v1368 = vrot.slane %v1339, 4
      %v1369 = vsel %vm1278, %v1366, %v1368
      %v1370 = vrot.slane %v1340, 4
      %v1371 = vsel %vm1278, %v1368, %v1370
      %v1372 = vrot.slane %v1341, 4
      %v1373 = vsel %vm1278, %v1370, %v1372
      %v1374 = vrot.slane %v1342, 4
      %v1375 = vsel %vm1278, %v1372, %v1374
      %v1376 = vrot.slane %v1343, 4
      %v1377 = vsel %vm1278, %v1374, %v1376
      %v1378 = vrot.slane %v1344, 4
      %v1379 = vsel %vm1278, %v1376, %v1378
      %v1380 = vrot.slane %v1345, 4
      %v1381 = vsel %vm1278, %v1378, %v1380
      %v1382 = vrot.slane %v1346, 4
      %v1383 = vsel %vm1278, %v1380, %v1382
      %v1384 = vrot.slane %v1347, 4
      %v1385 = vsel %vm1278, %v1382, %v1384
      %v1386 = vrot.slane %v1348, 4
      %v1387 = vsel %vm1278, %v1384, %v1386
      %v1388 = vrot.slane %v1349, 4
      %v1389 = vsel %vm1278, %v1386, %v1388
      %v1390 = vrot.slane %v1350, 4
      %v1391 = vsel %vm1278, %v1388, %v1390
      %1392 = vrot.lane.b32.xlu0 %v1365, 64
      %v1393 = vpop.permute.xlu0 %1392
      %1394 = vrot.lane.b32.xlu0 %v1367, 64
      %v1395 = vpop.permute.xlu0 %1394
      %1396 = vrot.lane.b32.xlu0 %v1369, 64
      %v1397 = vpop.permute.xlu0 %1396
      %1398 = vrot.lane.b32.xlu0 %v1371, 64
      %v1399 = vpop.permute.xlu0 %1398
      %1400 = vrot.lane.b32.xlu0 %v1373, 64
      %v1401 = vpop.permute.xlu0 %1400
      %1402 = vrot.lane.b32.xlu0 %v1375, 64
      %v1403 = vpop.permute.xlu0 %1402
      %1404 = vrot.lane.b32.xlu0 %v1377, 64
      %v1405 = vpop.permute.xlu0 %1404
      %1406 = vrot.lane.b32.xlu0 %v1379, 64
      %v1407 = vpop.permute.xlu0 %1406
      %1408 = vrot.lane.b32.xlu0 %v1381, 64
      %v1409 = vpop.permute.xlu0 %1408
      %1410 = vrot.lane.b32.xlu0 %v1383, 64
      %v1411 = vpop.permute.xlu0 %1410
      %1412 = vrot.lane.b32.xlu0 %v1385, 64
      %v1413 = vpop.permute.xlu0 %1412
      %1414 = vrot.lane.b32.xlu0 %v1387, 64
      %v1415 = vpop.permute.xlu0 %1414
      %1416 = vrot.lane.b32.xlu0 %v1389, 64
      %v1417 = vpop.permute.xlu0 %1416
      %1418 = vrot.lane.b32.xlu0 %v1391, 64
      %v1419 = vpop.permute.xlu0 %1418
      %1420 = vrot.lane.b32.xlu0 %v1390, 64
      %v1421 = vpop.permute.xlu0 %1420
      %vm1437 = vcmask 1048068
      %1438 = vst.msk [vmem:[#allocation3 + $0x1b0] sm:$0xf0] %vm1437, %v1393
      %1439 = vst.msk [vmem:[#allocation3 + $0x1c0] sm:$0xff] %vm709, %v1395
      %1440 = vst.msk [vmem:[#allocation3 + $0x1d0] sm:$0xff] %vm709, %v1397
      %1441 = vst.msk [vmem:[#allocation3 + $0x1e0] sm:$0xff] %vm709, %v1399
      %1442 = vst.msk [vmem:[#allocation3 + $0x1f0] sm:$0xff] %vm709, %v1401
      %1443 = vst.msk [vmem:[#allocation3 + $0x200] sm:$0xff] %vm709, %v1403
      %1444 = vst.msk [vmem:[#allocation3 + $0x210] sm:$0xff] %vm709, %v1405
      %1445 = vst.msk [vmem:[#allocation3 + $0x220] sm:$0xff] %vm709, %v1407
      %1446 = vst.msk [vmem:[#allocation3 + $0x230] sm:$0xff] %vm709, %v1409
      %1447 = vst.msk [vmem:[#allocation3 + $0x240] sm:$0xff] %vm709, %v1411
      %1448 = vst.msk [vmem:[#allocation3 + $0x250] sm:$0xff] %vm709, %v1413
      %1449 = vst.msk [vmem:[#allocation3 + $0x260] sm:$0xff] %vm709, %v1415
      %1450 = vst.msk [vmem:[#allocation3 + $0x270] sm:$0xff] %vm709, %v1417
      %1451 = vst.msk [vmem:[#allocation3 + $0x280] sm:$0xff] %vm709, %v1419
      %vm1452 = vcmask 1040896
      %1453 = vst.msk [vmem:[#allocation3 + $0x290] sm:$0x1] %vm1452, %v1421
      %v1454 = vld [vmem:[#allocation2 + $0xb] sm:$0xff]
      %v1455 = vld [vmem:[#allocation2 + $0x13] sm:$0xff]
      %v1456 = vld [vmem:[#allocation2 + $0x1b] sm:$0xff]
      %v1457 = vld [vmem:[#allocation2 + $0x23] sm:$0xff]
      %v1458 = vld [vmem:[#allocation2 + $0x2b] sm:$0xff]
      %v1459 = vld [vmem:[#allocation2 + $0x33] sm:$0xff]
      %v1460 = vld [vmem:[#allocation2 + $0x3b] sm:$0xff]
      %v1461 = vld [vmem:[#allocation2 + $0x43] sm:$0xff]
      %v1462 = vld [vmem:[#allocation2 + $0x4b] sm:$0xff]
      %v1463 = vld [vmem:[#allocation2 + $0x53] sm:$0xff]
      %v1464 = vld [vmem:[#allocation2 + $0x5b] sm:$0xff]
      %v1465 = vld [vmem:[#allocation2 + $0x63] sm:$0xff]
      %v1466 = vld [vmem:[#allocation2 + $0x6b] sm:$0xff]
      %v1467 = vld [vmem:[#allocation2 + $0x73] sm:$0x1f]
      %v1482 = vrot.slane %v1454, 4
      %v1483 = vrot.slane %v1455, 4
      %v1484 = vsel %vm1278, %v1482, %v1483
      %v1485 = vrot.slane %v1456, 4
      %v1486 = vsel %vm1278, %v1483, %v1485
      %v1487 = vrot.slane %v1457, 4
      %v1488 = vsel %vm1278, %v1485, %v1487
      %v1489 = vrot.slane %v1458, 4
      %v1490 = vsel %vm1278, %v1487, %v1489
      %v1491 = vrot.slane %v1459, 4
      %v1492 = vsel %vm1278, %v1489, %v1491
      %v1493 = vrot.slane %v1460, 4
      %v1494 = vsel %vm1278, %v1491, %v1493
      %v1495 = vrot.slane %v1461, 4
      %v1496 = vsel %vm1278, %v1493, %v1495
      %v1497 = vrot.slane %v1462, 4
      %v1498 = vsel %vm1278, %v1495, %v1497
      %v1499 = vrot.slane %v1463, 4
      %v1500 = vsel %vm1278, %v1497, %v1499
      %v1501 = vrot.slane %v1464, 4
      %v1502 = vsel %vm1278, %v1499, %v1501
      %v1503 = vrot.slane %v1465, 4
      %v1504 = vsel %vm1278, %v1501, %v1503
      %v1505 = vrot.slane %v1466, 4
      %v1506 = vsel %vm1278, %v1503, %v1505
      %v1507 = vrot.slane %v1467, 4
      %v1508 = vsel %vm1278, %v1505, %v1507
      %1524 = vst.msk [vmem:[#allocation3 + $0x1b8] sm:$0xf0] %vm1321, %v1482
      %1525 = vst.msk [vmem:[#allocation3 + $0x1c8] sm:$0xff] %vm536, %v1484
      %1526 = vst.msk [vmem:[#allocation3 + $0x1d8] sm:$0xff] %vm536, %v1486
      %1527 = vst.msk [vmem:[#allocation3 + $0x1e8] sm:$0xff] %vm536, %v1488
      %1528 = vst.msk [vmem:[#allocation3 + $0x1f8] sm:$0xff] %vm536, %v1490
      %1529 = vst.msk [vmem:[#allocation3 + $0x208] sm:$0xff] %vm536, %v1492
      %1530 = vst.msk [vmem:[#allocation3 + $0x218] sm:$0xff] %vm536, %v1494
      %1531 = vst.msk [vmem:[#allocation3 + $0x228] sm:$0xff] %vm536, %v1496
      %1532 = vst.msk [vmem:[#allocation3 + $0x238] sm:$0xff] %vm536, %v1498
      %1533 = vst.msk [vmem:[#allocation3 + $0x248] sm:$0xff] %vm536, %v1500
      %1534 = vst.msk [vmem:[#allocation3 + $0x258] sm:$0xff] %vm536, %v1502
      %1535 = vst.msk [vmem:[#allocation3 + $0x268] sm:$0xff] %vm536, %v1504
      %1536 = vst.msk [vmem:[#allocation3 + $0x278] sm:$0xff] %vm536, %v1506
      %1537 = vst.msk [vmem:[#allocation3 + $0x288] sm:$0xff] %vm536, %v1508
      %1538 = vst.msk [vmem:[#allocation3 + $0x298] sm:$0x1] %vm552, %v1507
      %v1539 = vld [vmem:[%s638 + $0xb] sm:$0xff]
      %v1540 = vld [vmem:[%s638 + $0x13] sm:$0xff]
      %v1541 = vld [vmem:[%s638 + $0x1b] sm:$0xff]
      %v1542 = vld [vmem:[%s638 + $0x23] sm:$0xff]
      %v1543 = vld [vmem:[%s638 + $0x2b] sm:$0xff]
      %v1544 = vld [vmem:[%s638 + $0x33] sm:$0xff]
      %v1545 = vld [vmem:[%s638 + $0x3b] sm:$0xff]
      %v1546 = vld [vmem:[%s638 + $0x43] sm:$0xff]
      %v1547 = vld [vmem:[%s638 + $0x4b] sm:$0xff]
      %v1548 = vld [vmem:[%s638 + $0x53] sm:$0xff]
      %v1549 = vld [vmem:[%s638 + $0x5b] sm:$0xff]
      %v1550 = vld [vmem:[%s638 + $0x63] sm:$0xff]
      %v1551 = vld [vmem:[%s638 + $0x6b] sm:$0xff]
      %v1552 = vld [vmem:[%s638 + $0x73] sm:$0x1f]
      %v1567 = vrot.slane %v1539, 4
      %v1568 = vrot.slane %v1540, 4
      %v1569 = vsel %vm1278, %v1567, %v1568
      %v1570 = vrot.slane %v1541, 4
      %v1571 = vsel %vm1278, %v1568, %v1570
      %v1572 = vrot.slane %v1542, 4
      %v1573 = vsel %vm1278, %v1570, %v1572
      %v1574 = vrot.slane %v1543, 4
      %v1575 = vsel %vm1278, %v1572, %v1574
      %v1576 = vrot.slane %v1544, 4
      %v1577 = vsel %vm1278, %v1574, %v1576
      %v1578 = vrot.slane %v1545, 4
      %v1579 = vsel %vm1278, %v1576, %v1578
      %v1580 = vrot.slane %v1546, 4
      %v1581 = vsel %vm1278, %v1578, %v1580
      %v1582 = vrot.slane %v1547, 4
      %v1583 = vsel %vm1278, %v1580, %v1582
      %v1584 = vrot.slane %v1548, 4
      %v1585 = vsel %vm1278, %v1582, %v1584
      %v1586 = vrot.slane %v1549, 4
      %v1587 = vsel %vm1278, %v1584, %v1586
      %v1588 = vrot.slane %v1550, 4
      %v1589 = vsel %vm1278, %v1586, %v1588
      %v1590 = vrot.slane %v1551, 4
      %v1591 = vsel %vm1278, %v1588, %v1590
      %v1592 = vrot.slane %v1552, 4
      %v1593 = vsel %vm1278, %v1590, %v1592
      %1594 = vrot.lane.b32.xlu0 %v1567, 64
      %v1595 = vpop.permute.xlu0 %1594
      %1596 = vrot.lane.b32.xlu0 %v1569, 64
      %v1597 = vpop.permute.xlu0 %1596
      %1598 = vrot.lane.b32.xlu0 %v1571, 64
      %v1599 = vpop.permute.xlu0 %1598
      %1600 = vrot.lane.b32.xlu0 %v1573, 64
      %v1601 = vpop.permute.xlu0 %1600
      %1602 = vrot.lane.b32.xlu0 %v1575, 64
      %v1603 = vpop.permute.xlu0 %1602
      %1604 = vrot.lane.b32.xlu0 %v1577, 64
      %v1605 = vpop.permute.xlu0 %1604
      %1606 = vrot.lane.b32.xlu0 %v1579, 64
      %v1607 = vpop.permute.xlu0 %1606
      %1608 = vrot.lane.b32.xlu0 %v1581, 64
      %v1609 = vpop.permute.xlu0 %1608
      %1610 = vrot.lane.b32.xlu0 %v1583, 64
      %v1611 = vpop.permute.xlu0 %1610
      %1612 = vrot.lane.b32.xlu0 %v1585, 64
      %v1613 = vpop.permute.xlu0 %1612
      %1614 = vrot.lane.b32.xlu0 %v1587, 64
      %v1615 = vpop.permute.xlu0 %1614
      %1616 = vrot.lane.b32.xlu0 %v1589, 64
      %v1617 = vpop.permute.xlu0 %1616
      %1618 = vrot.lane.b32.xlu0 %v1591, 64
      %v1619 = vpop.permute.xlu0 %1618
      %1620 = vrot.lane.b32.xlu0 %v1593, 64
      %v1621 = vpop.permute.xlu0 %1620
      %1622 = vrot.lane.b32.xlu0 %v1592, 64
      %v1623 = vpop.permute.xlu0 %1622
      %1639 = vst.msk [vmem:[#allocation3 + $0x1b8] sm:$0xf0] %vm1437, %v1595
      %1640 = vst.msk [vmem:[#allocation3 + $0x1c8] sm:$0xff] %vm709, %v1597
      %1641 = vst.msk [vmem:[#allocation3 + $0x1d8] sm:$0xff] %vm709, %v1599
      %1642 = vst.msk [vmem:[#allocation3 + $0x1e8] sm:$0xff] %vm709, %v1601
      %1643 = vst.msk [vmem:[#allocation3 + $0x1f8] sm:$0xff] %vm709, %v1603
      %1644 = vst.msk [vmem:[#allocation3 + $0x208] sm:$0xff] %vm709, %v1605
      %1645 = vst.msk [vmem:[#allocation3 + $0x218] sm:$0xff] %vm709, %v1607
      %1646 = vst.msk [vmem:[#allocation3 + $0x228] sm:$0xff] %vm709, %v1609
      %1647 = vst.msk [vmem:[#allocation3 + $0x238] sm:$0xff] %vm709, %v1611
      %1648 = vst.msk [vmem:[#allocation3 + $0x248] sm:$0xff] %vm709, %v1613
      %1649 = vst.msk [vmem:[#allocation3 + $0x258] sm:$0xff] %vm709, %v1615
      %1650 = vst.msk [vmem:[#allocation3 + $0x268] sm:$0xff] %vm709, %v1617
      %1651 = vst.msk [vmem:[#allocation3 + $0x278] sm:$0xff] %vm709, %v1619
      %1652 = vst.msk [vmem:[#allocation3 + $0x288] sm:$0xff] %vm709, %v1621
      %1653 = vst.msk [vmem:[#allocation3 + $0x298] sm:$0x1] %vm1452, %v1623
      %s1654 = scalar_lea.vmem [#allocation3], 871
      %1655 = vst.msk [vmem:[%s1654] ss:$8 sm:$0x3] %vm605, 0.0
      %1656 = vst.msk [vmem:[%s1654] ss:$8 sm:$0x0] %vm605, 0.0
      %v1657 = vld [vmem:[%s754] sm:$0xff]
      %v1658 = vld [vmem:[%s754 + $0x8] sm:$0xff]
      %v1659 = vld [vmem:[%s754 + $0x10] sm:$0xff]
      %v1660 = vld [vmem:[%s754 + $0x18] sm:$0xff]
      %v1661 = vld [vmem:[%s754 + $0x20] sm:$0xff]
      %v1662 = vld [vmem:[%s754 + $0x28] sm:$0xff]
      %v1663 = vld [vmem:[%s754 + $0x30] sm:$0xff]
      %v1664 = vld [vmem:[%s754 + $0x38] sm:$0xff]
      %v1665 = vld [vmem:[%s754 + $0x40] sm:$0xff]
      %v1666 = vld [vmem:[%s754 + $0x48] sm:$0xff]
      %v1667 = vld [vmem:[%s754 + $0x50] sm:$0xff]
      %v1668 = vld [vmem:[%s754 + $0x58] sm:$0xff]
      %v1669 = vld [vmem:[%s754 + $0x60] sm:$0xff]
      %v1670 = vld [vmem:[%s754 + $0x68] sm:$0x1f]
      %vm1685 = vcmask 1041408
      %v1686 = vrot.slane %v1657, 6
      %v1687 = vrot.slane %v1658, 6
      %v1688 = vsel %vm1685, %v1686, %v1687
      %v1689 = vrot.slane %v1659, 6
      %v1690 = vsel %vm1685, %v1687, %v1689
      %v1691 = vrot.slane %v1660, 6
      %v1692 = vsel %vm1685, %v1689, %v1691
      %v1693 = vrot.slane %v1661, 6
      %v1694 = vsel %vm1685, %v1691, %v1693
      %v1695 = vrot.slane %v1662, 6
      %v1696 = vsel %vm1685, %v1693, %v1695
      %v1697 = vrot.slane %v1663, 6
      %v1698 = vsel %vm1685, %v1695, %v1697
      %v1699 = vrot.slane %v1664, 6
      %v1700 = vsel %vm1685, %v1697, %v1699
      %v1701 = vrot.slane %v1665, 6
      %v1702 = vsel %vm1685, %v1699, %v1701
      %v1703 = vrot.slane %v1666, 6
      %v1704 = vsel %vm1685, %v1701, %v1703
      %v1705 = vrot.slane %v1667, 6
      %v1706 = vsel %vm1685, %v1703, %v1705
      %v1707 = vrot.slane %v1668, 6
      %v1708 = vsel %vm1685, %v1705, %v1707
      %v1709 = vrot.slane %v1669, 6
      %v1710 = vsel %vm1685, %v1707, %v1709
      %v1711 = vrot.slane %v1670, 6
      %v1712 = vsel %vm1685, %v1709, %v1711
      %vm1727 = vcmask 523266
      %1728 = vst.msk [vmem:[#allocation3 + $0x290] sm:$0xfc] %vm1727, %v1686
      %1729 = vst.msk [vmem:[#allocation3 + $0x2a0] sm:$0xff] %vm536, %v1688
      %1730 = vst.msk [vmem:[#allocation3 + $0x2b0] sm:$0xff] %vm536, %v1690
      %1731 = vst.msk [vmem:[#allocation3 + $0x2c0] sm:$0xff] %vm536, %v1692
      %1732 = vst.msk [vmem:[#allocation3 + $0x2d0] sm:$0xff] %vm536, %v1694
      %1733 = vst.msk [vmem:[#allocation3 + $0x2e0] sm:$0xff] %vm536, %v1696
      %1734 = vst.msk [vmem:[#allocation3 + $0x2f0] sm:$0xff] %vm536, %v1698
      %1735 = vst.msk [vmem:[#allocation3 + $0x300] sm:$0xff] %vm536, %v1700
      %1736 = vst.msk [vmem:[#allocation3 + $0x310] sm:$0xff] %vm536, %v1702
      %1737 = vst.msk [vmem:[#allocation3 + $0x320] sm:$0xff] %vm536, %v1704
      %1738 = vst.msk [vmem:[#allocation3 + $0x330] sm:$0xff] %vm536, %v1706
      %1739 = vst.msk [vmem:[#allocation3 + $0x340] sm:$0xff] %vm536, %v1708
      %1740 = vst.msk [vmem:[#allocation3 + $0x350] sm:$0xff] %vm536, %v1710
      %vm1741 = vcmask 522240
      %1742 = vst.msk [vmem:[#allocation3 + $0x360] sm:$0x7f] %vm1741, %v1712
      %v1743 = vld [vmem:[%s725 + $0x1] sm:$0xff]
      %v1744 = vld [vmem:[%s725 + $0x9] sm:$0xff]
      %v1745 = vld [vmem:[%s725 + $0x11] sm:$0xff]
      %v1746 = vld [vmem:[%s725 + $0x19] sm:$0xff]
      %v1747 = vld [vmem:[%s725 + $0x21] sm:$0xff]
      %v1748 = vld [vmem:[%s725 + $0x29] sm:$0xff]
      %v1749 = vld [vmem:[%s725 + $0x31] sm:$0xff]
      %v1750 = vld [vmem:[%s725 + $0x39] sm:$0xff]
      %v1751 = vld [vmem:[%s725 + $0x41] sm:$0xff]
      %v1752 = vld [vmem:[%s725 + $0x49] sm:$0xff]
      %v1753 = vld [vmem:[%s725 + $0x51] sm:$0xff]
      %v1754 = vld [vmem:[%s725 + $0x59] sm:$0xff]
      %v1755 = vld [vmem:[%s725 + $0x61] sm:$0xff]
      %v1756 = vld [vmem:[%s725 + $0x69] sm:$0x1f]
      %v1771 = vrot.slane %v1743, 6
      %v1772 = vrot.slane %v1744, 6
      %v1773 = vsel %vm1685, %v1771, %v1772
      %v1774 = vrot.slane %v1745, 6
      %v1775 = vsel %vm1685, %v1772, %v1774
      %v1776 = vrot.slane %v1746, 6
      %v1777 = vsel %vm1685, %v1774, %v1776
      %v1778 = vrot.slane %v1747, 6
      %v1779 = vsel %vm1685, %v1776, %v1778
      %v1780 = vrot.slane %v1748, 6
      %v1781 = vsel %vm1685, %v1778, %v1780
      %v1782 = vrot.slane %v1749, 6
      %v1783 = vsel %vm1685, %v1780, %v1782
      %v1784 = vrot.slane %v1750, 6
      %v1785 = vsel %vm1685, %v1782, %v1784
      %v1786 = vrot.slane %v1751, 6
      %v1787 = vsel %vm1685, %v1784, %v1786
      %v1788 = vrot.slane %v1752, 6
      %v1789 = vsel %vm1685, %v1786, %v1788
      %v1790 = vrot.slane %v1753, 6
      %v1791 = vsel %vm1685, %v1788, %v1790
      %v1792 = vrot.slane %v1754, 6
      %v1793 = vsel %vm1685, %v1790, %v1792
      %v1794 = vrot.slane %v1755, 6
      %v1795 = vsel %vm1685, %v1792, %v1794
      %v1796 = vrot.slane %v1756, 6
      %v1797 = vsel %vm1685, %v1794, %v1796
      %1798 = vrot.lane.b32.xlu0 %v1771, 64
      %v1799 = vpop.permute.xlu0 %1798
      %1800 = vrot.lane.b32.xlu0 %v1773, 64
      %v1801 = vpop.permute.xlu0 %1800
      %1802 = vrot.lane.b32.xlu0 %v1775, 64
      %v1803 = vpop.permute.xlu0 %1802
      %1804 = vrot.lane.b32.xlu0 %v1777, 64
      %v1805 = vpop.permute.xlu0 %1804
      %1806 = vrot.lane.b32.xlu0 %v1779, 64
      %v1807 = vpop.permute.xlu0 %1806
      %1808 = vrot.lane.b32.xlu0 %v1781, 64
      %v1809 = vpop.permute.xlu0 %1808
      %1810 = vrot.lane.b32.xlu0 %v1783, 64
      %v1811 = vpop.permute.xlu0 %1810
      %1812 = vrot.lane.b32.xlu0 %v1785, 64
      %v1813 = vpop.permute.xlu0 %1812
      %1814 = vrot.lane.b32.xlu0 %v1787, 64
      %v1815 = vpop.permute.xlu0 %1814
      %1816 = vrot.lane.b32.xlu0 %v1789, 64
      %v1817 = vpop.permute.xlu0 %1816
      %1818 = vrot.lane.b32.xlu0 %v1791, 64
      %v1819 = vpop.permute.xlu0 %1818
      %1820 = vrot.lane.b32.xlu0 %v1793, 64
      %v1821 = vpop.permute.xlu0 %1820
      %1822 = vrot.lane.b32.xlu0 %v1795, 64
      %v1823 = vpop.permute.xlu0 %1822
      %1824 = vrot.lane.b32.xlu0 %v1797, 64
      %v1825 = vpop.permute.xlu0 %1824
      %vm1840 = vcmask 1048066
      %1841 = vst.msk [vmem:[#allocation3 + $0x290] sm:$0xfc] %vm1840, %v1799
      %1842 = vst.msk [vmem:[#allocation3 + $0x2a0] sm:$0xff] %vm709, %v1801
      %1843 = vst.msk [vmem:[#allocation3 + $0x2b0] sm:$0xff] %vm709, %v1803
      %1844 = vst.msk [vmem:[#allocation3 + $0x2c0] sm:$0xff] %vm709, %v1805
      %1845 = vst.msk [vmem:[#allocation3 + $0x2d0] sm:$0xff] %vm709, %v1807
      %1846 = vst.msk [vmem:[#allocation3 + $0x2e0] sm:$0xff] %vm709, %v1809
      %1847 = vst.msk [vmem:[#allocation3 + $0x2f0] sm:$0xff] %vm709, %v1811
      %1848 = vst.msk [vmem:[#allocation3 + $0x300] sm:$0xff] %vm709, %v1813
      %1849 = vst.msk [vmem:[#allocation3 + $0x310] sm:$0xff] %vm709, %v1815
      %1850 = vst.msk [vmem:[#allocation3 + $0x320] sm:$0xff] %vm709, %v1817
      %1851 = vst.msk [vmem:[#allocation3 + $0x330] sm:$0xff] %vm709, %v1819
      %1852 = vst.msk [vmem:[#allocation3 + $0x340] sm:$0xff] %vm709, %v1821
      %1853 = vst.msk [vmem:[#allocation3 + $0x350] sm:$0xff] %vm709, %v1823
      %vm1854 = vcmask 1047040
      %1855 = vst.msk [vmem:[#allocation3 + $0x360] sm:$0x7f] %vm1854, %v1825
      %v1856 = vld [vmem:[%s638 + $0xb] sm:$0xff]
      %v1857 = vld [vmem:[%s638 + $0x13] sm:$0xff]
      %v1858 = vld [vmem:[%s638 + $0x1b] sm:$0xff]
      %v1859 = vld [vmem:[%s638 + $0x23] sm:$0xff]
      %v1860 = vld [vmem:[%s638 + $0x2b] sm:$0xff]
      %v1861 = vld [vmem:[%s638 + $0x33] sm:$0xff]
      %v1862 = vld [vmem:[%s638 + $0x3b] sm:$0xff]
      %v1863 = vld [vmem:[%s638 + $0x43] sm:$0xff]
      %v1864 = vld [vmem:[%s638 + $0x4b] sm:$0xff]
      %v1865 = vld [vmem:[%s638 + $0x53] sm:$0xff]
      %v1866 = vld [vmem:[%s638 + $0x5b] sm:$0xff]
      %v1867 = vld [vmem:[%s638 + $0x63] sm:$0xff]
      %v1868 = vld [vmem:[%s638 + $0x6b] sm:$0xff]
      %v1869 = vld [vmem:[%s638 + $0x73] sm:$0x1f]
      %v1884 = vrot.slane %v1856, 6
      %v1885 = vrot.slane %v1857, 6
      %v1886 = vsel %vm1685, %v1884, %v1885
      %v1887 = vrot.slane %v1858, 6
      %v1888 = vsel %vm1685, %v1885, %v1887
      %v1889 = vrot.slane %v1859, 6
      %v1890 = vsel %vm1685, %v1887, %v1889
      %v1891 = vrot.slane %v1860, 6
      %v1892 = vsel %vm1685, %v1889, %v1891
      %v1893 = vrot.slane %v1861, 6
      %v1894 = vsel %vm1685, %v1891, %v1893
      %v1895 = vrot.slane %v1862, 6
      %v1896 = vsel %vm1685, %v1893, %v1895
      %v1897 = vrot.slane %v1863, 6
      %v1898 = vsel %vm1685, %v1895, %v1897
      %v1899 = vrot.slane %v1864, 6
      %v1900 = vsel %vm1685, %v1897, %v1899
      %v1901 = vrot.slane %v1865, 6
      %v1902 = vsel %vm1685, %v1899, %v1901
      %v1903 = vrot.slane %v1866, 6
      %v1904 = vsel %vm1685, %v1901, %v1903
      %v1905 = vrot.slane %v1867, 6
      %v1906 = vsel %vm1685, %v1903, %v1905
      %v1907 = vrot.slane %v1868, 6
      %v1908 = vsel %vm1685, %v1905, %v1907
      %v1909 = vrot.slane %v1869, 6
      %v1910 = vsel %vm1685, %v1907, %v1909
      %1925 = vst.msk [vmem:[#allocation3 + $0x298] sm:$0xfc] %vm1727, %v1884
      %1926 = vst.msk [vmem:[#allocation3 + $0x2a8] sm:$0xff] %vm536, %v1886
      %1927 = vst.msk [vmem:[#allocation3 + $0x2b8] sm:$0xff] %vm536, %v1888
      %1928 = vst.msk [vmem:[#allocation3 + $0x2c8] sm:$0xff] %vm536, %v1890
      %1929 = vst.msk [vmem:[#allocation3 + $0x2d8] sm:$0xff] %vm536, %v1892
      %1930 = vst.msk [vmem:[#allocation3 + $0x2e8] sm:$0xff] %vm536, %v1894
      %1931 = vst.msk [vmem:[#allocation3 + $0x2f8] sm:$0xff] %vm536, %v1896
      %1932 = vst.msk [vmem:[#allocation3 + $0x308] sm:$0xff] %vm536, %v1898
      %1933 = vst.msk [vmem:[#allocation3 + $0x318] sm:$0xff] %vm536, %v1900
      %1934 = vst.msk [vmem:[#allocation3 + $0x328] sm:$0xff] %vm536, %v1902
      %1935 = vst.msk [vmem:[#allocation3 + $0x338] sm:$0xff] %vm536, %v1904
      %1936 = vst.msk [vmem:[#allocation3 + $0x348] sm:$0xff] %vm536, %v1906
      %1937 = vst.msk [vmem:[#allocation3 + $0x358] sm:$0xff] %vm536, %v1908
      %1938 = vst.msk [vmem:[#allocation3 + $0x368] sm:$0x7f] %vm1741, %v1910
      %v1939 = vld [vmem:[#allocation2 + $0xc] sm:$0xff]
      %v1940 = vld [vmem:[#allocation2 + $0x14] sm:$0xff]
      %v1941 = vld [vmem:[#allocation2 + $0x1c] sm:$0xff]
      %v1942 = vld [vmem:[#allocation2 + $0x24] sm:$0xff]
      %v1943 = vld [vmem:[#allocation2 + $0x2c] sm:$0xff]
      %v1944 = vld [vmem:[#allocation2 + $0x34] sm:$0xff]
      %v1945 = vld [vmem:[#allocation2 + $0x3c] sm:$0xff]
      %v1946 = vld [vmem:[#allocation2 + $0x44] sm:$0xff]
      %v1947 = vld [vmem:[#allocation2 + $0x4c] sm:$0xff]
      %v1948 = vld [vmem:[#allocation2 + $0x54] sm:$0xff]
      %v1949 = vld [vmem:[#allocation2 + $0x5c] sm:$0xff]
      %v1950 = vld [vmem:[#allocation2 + $0x64] sm:$0xff]
      %v1951 = vld [vmem:[#allocation2 + $0x6c] sm:$0xff]
      %v1952 = vld [vmem:[#allocation2 + $0x74] sm:$0x1f]
      %v1967 = vrot.slane %v1939, 6
      %v1968 = vrot.slane %v1940, 6
      %v1969 = vsel %vm1685, %v1967, %v1968
      %v1970 = vrot.slane %v1941, 6
      %v1971 = vsel %vm1685, %v1968, %v1970
      %v1972 = vrot.slane %v1942, 6
      %v1973 = vsel %vm1685, %v1970, %v1972
      %v1974 = vrot.slane %v1943, 6
      %v1975 = vsel %vm1685, %v1972, %v1974
      %v1976 = vrot.slane %v1944, 6
      %v1977 = vsel %vm1685, %v1974, %v1976
      %v1978 = vrot.slane %v1945, 6
      %v1979 = vsel %vm1685, %v1976, %v1978
      %v1980 = vrot.slane %v1946, 6
      %v1981 = vsel %vm1685, %v1978, %v1980
      %v1982 = vrot.slane %v1947, 6
      %v1983 = vsel %vm1685, %v1980, %v1982
      %v1984 = vrot.slane %v1948, 6
      %v1985 = vsel %vm1685, %v1982, %v1984
      %v1986 = vrot.slane %v1949, 6
      %v1987 = vsel %vm1685, %v1984, %v1986
      %v1988 = vrot.slane %v1950, 6
      %v1989 = vsel %vm1685, %v1986, %v1988
      %v1990 = vrot.slane %v1951, 6
      %v1991 = vsel %vm1685, %v1988, %v1990
      %v1992 = vrot.slane %v1952, 6
      %v1993 = vsel %vm1685, %v1990, %v1992
      %1994 = vrot.lane.b32.xlu0 %v1967, 64
      %v1995 = vpop.permute.xlu0 %1994
      %1996 = vrot.lane.b32.xlu0 %v1969, 64
      %v1997 = vpop.permute.xlu0 %1996
      %1998 = vrot.lane.b32.xlu0 %v1971, 64
      %v1999 = vpop.permute.xlu0 %1998
      %2000 = vrot.lane.b32.xlu0 %v1973, 64
      %v2001 = vpop.permute.xlu0 %2000
      %2002 = vrot.lane.b32.xlu0 %v1975, 64
      %v2003 = vpop.permute.xlu0 %2002
      %2004 = vrot.lane.b32.xlu0 %v1977, 64
      %v2005 = vpop.permute.xlu0 %2004
      %2006 = vrot.lane.b32.xlu0 %v1979, 64
      %v2007 = vpop.permute.xlu0 %2006
      %2008 = vrot.lane.b32.xlu0 %v1981, 64
      %v2009 = vpop.permute.xlu0 %2008
      %2010 = vrot.lane.b32.xlu0 %v1983, 64
      %v2011 = vpop.permute.xlu0 %2010
      %2012 = vrot.lane.b32.xlu0 %v1985, 64
      %v2013 = vpop.permute.xlu0 %2012
      %2014 = vrot.lane.b32.xlu0 %v1987, 64
      %v2015 = vpop.permute.xlu0 %2014
      %2016 = vrot.lane.b32.xlu0 %v1989, 64
      %v2017 = vpop.permute.xlu0 %2016
      %2018 = vrot.lane.b32.xlu0 %v1991, 64
      %v2019 = vpop.permute.xlu0 %2018
      %2020 = vrot.lane.b32.xlu0 %v1993, 64
      %v2021 = vpop.permute.xlu0 %2020
      %2036 = vst.msk [vmem:[#allocation3 + $0x298] sm:$0xfc] %vm1840, %v1995
      %2037 = vst.msk [vmem:[#allocation3 + $0x2a8] sm:$0xff] %vm709, %v1997
      %2038 = vst.msk [vmem:[#allocation3 + $0x2b8] sm:$0xff] %vm709, %v1999
      %2039 = vst.msk [vmem:[#allocation3 + $0x2c8] sm:$0xff] %vm709, %v2001
      %2040 = vst.msk [vmem:[#allocation3 + $0x2d8] sm:$0xff] %vm709, %v2003
      %2041 = vst.msk [vmem:[#allocation3 + $0x2e8] sm:$0xff] %vm709, %v2005
      %2042 = vst.msk [vmem:[#allocation3 + $0x2f8] sm:$0xff] %vm709, %v2007
      %2043 = vst.msk [vmem:[#allocation3 + $0x308] sm:$0xff] %vm709, %v2009
      %2044 = vst.msk [vmem:[#allocation3 + $0x318] sm:$0xff] %vm709, %v2011
      %2045 = vst.msk [vmem:[#allocation3 + $0x328] sm:$0xff] %vm709, %v2013
      %2046 = vst.msk [vmem:[#allocation3 + $0x338] sm:$0xff] %vm709, %v2015
      %2047 = vst.msk [vmem:[#allocation3 + $0x348] sm:$0xff] %vm709, %v2017
      %2048 = vst.msk [vmem:[#allocation3 + $0x358] sm:$0xff] %vm709, %v2019
      %2049 = vst.msk [vmem:[#allocation3 + $0x368] sm:$0x7f] %vm1854, %v2021
      %v2050 = vld [vmem:[#allocation3] sm:$0xff]
      %v2051 = vld [vmem:[#allocation3 + $0x8] sm:$0xff]
      %v2052 = vld [vmem:[#allocation3 + $0x10] sm:$0xff]
      %v2053 = vld [vmem:[#allocation3 + $0x18] sm:$0xff]
      %v2054 = vld [vmem:[#allocation3 + $0x20] sm:$0xff]
      %v2055 = vld [vmem:[#allocation3 + $0x28] sm:$0xff]
      %v2056 = vld [vmem:[#allocation3 + $0x30] sm:$0xff]
      %v2057 = vld [vmem:[#allocation3 + $0x38] sm:$0xff]
      %v2058 = vld [vmem:[#allocation3 + $0x40] sm:$0xff]
      %v2059 = vld [vmem:[#allocation3 + $0x48] sm:$0xff]
      %v2060 = vld [vmem:[#allocation3 + $0x50] sm:$0xff]
      %v2061 = vld [vmem:[#allocation3 + $0x58] sm:$0xff]
      %v2062 = vld [vmem:[#allocation3 + $0x60] sm:$0xff]
      %v2063 = vld [vmem:[#allocation3 + $0x68] sm:$0xff]
      %v2064 = vld [vmem:[#allocation3 + $0x70] sm:$0xff]
      %v2065 = vld [vmem:[#allocation3 + $0x78] sm:$0xff]
      %v2066 = vld [vmem:[#allocation3 + $0x80] sm:$0xff]
      %v2067 = vld [vmem:[#allocation3 + $0x88] sm:$0xff]
      %v2068 = vld [vmem:[#allocation3 + $0x90] sm:$0xff]
      %v2069 = vld [vmem:[#allocation3 + $0x98] sm:$0xff]
      %v2070 = vld [vmem:[#allocation3 + $0xa0] sm:$0xff]
      %v2071 = vld [vmem:[#allocation3 + $0xa8] sm:$0xff]
      %v2072 = vld [vmem:[#allocation3 + $0xb0] sm:$0xff]
      %v2073 = vld [vmem:[#allocation3 + $0xb8] sm:$0xff]
      %v2074 = vld [vmem:[#allocation3 + $0xc0] sm:$0xff]
      %v2075 = vld [vmem:[#allocation3 + $0xc8] sm:$0xff]
      %v2076 = vld [vmem:[#allocation3 + $0xd0] sm:$0xff]
      %v2077 = vld [vmem:[#allocation3 + $0xd8] sm:$0xff]
      %v2078 = vld [vmem:[#allocation3 + $0xe0] sm:$0xff]
      %v2079 = vld [vmem:[#allocation3 + $0xe8] sm:$0xff]
      %v2080 = vld [vmem:[#allocation3 + $0xf0] sm:$0xff]
      %v2081 = vld [vmem:[#allocation3 + $0xf8] sm:$0xff]
      %v2082 = vld [vmem:[#allocation3 + $0x100] sm:$0xff]
      %v2083 = vld [vmem:[#allocation3 + $0x108] sm:$0xff]
      %v2084 = vld [vmem:[#allocation3 + $0x110] sm:$0xff]
      %v2085 = vld [vmem:[#allocation3 + $0x118] sm:$0xff]
      %v2086 = vld [vmem:[#allocation3 + $0x120] sm:$0xff]
      %v2087 = vld [vmem:[#allocation3 + $0x128] sm:$0xff]
      %v2088 = vld [vmem:[#allocation3 + $0x130] sm:$0xff]
      %v2089 = vld [vmem:[#allocation3 + $0x138] sm:$0xff]
      %v2090 = vld [vmem:[#allocation3 + $0x140] sm:$0xff]
      %v2091 = vld [vmem:[#allocation3 + $0x148] sm:$0xff]
      %v2092 = vld [vmem:[#allocation3 + $0x150] sm:$0xff]
      %v2093 = vld [vmem:[#allocation3 + $0x158] sm:$0xff]
      %v2094 = vld [vmem:[#allocation3 + $0x160] sm:$0xff]
      %v2095 = vld [vmem:[#allocation3 + $0x168] sm:$0xff]
      %v2096 = vld [vmem:[#allocation3 + $0x170] sm:$0xff]
      %v2097 = vld [vmem:[#allocation3 + $0x178] sm:$0xff]
      %v2098 = vld [vmem:[#allocation3 + $0x180] sm:$0xff]
      %v2099 = vld [vmem:[#allocation3 + $0x188] sm:$0xff]
      %v2100 = vld [vmem:[#allocation3 + $0x190] sm:$0xff]
      %v2101 = vld [vmem:[#allocation3 + $0x198] sm:$0xff]
      %v2102 = vld [vmem:[#allocation3 + $0x1a0] sm:$0xff]
      %v2103 = vld [vmem:[#allocation3 + $0x1a8] sm:$0xff]
      %v2104 = vld [vmem:[#allocation3 + $0x1b0] sm:$0xff]
      %v2105 = vld [vmem:[#allocation3 + $0x1b8] sm:$0xff]
      %v2106 = vld [vmem:[#allocation3 + $0x1c0] sm:$0xff]
      %v2107 = vld [vmem:[#allocation3 + $0x1c8] sm:$0xff]
      %v2108 = vld [vmem:[#allocation3 + $0x1d0] sm:$0xff]
      %v2109 = vld [vmem:[#allocation3 + $0x1d8] sm:$0xff]
      %v2110 = vld [vmem:[#allocation3 + $0x1e0] sm:$0xff]
      %v2111 = vld [vmem:[#allocation3 + $0x1e8] sm:$0xff]
      %v2112 = vld [vmem:[#allocation3 + $0x1f0] sm:$0xff]
      %v2113 = vld [vmem:[#allocation3 + $0x1f8] sm:$0xff]
      %v2114 = vld [vmem:[#allocation3 + $0x200] sm:$0xff]
      %v2115 = vld [vmem:[#allocation3 + $0x208] sm:$0xff]
      %v2116 = vld [vmem:[#allocation3 + $0x210] sm:$0xff]
      %v2117 = vld [vmem:[#allocation3 + $0x218] sm:$0xff]
      %v2118 = vld [vmem:[#allocation3 + $0x220] sm:$0xff]
      %v2119 = vld [vmem:[#allocation3 + $0x228] sm:$0xff]
      %v2120 = vld [vmem:[#allocation3 + $0x230] sm:$0xff]
      %v2121 = vld [vmem:[#allocation3 + $0x238] sm:$0xff]
      %v2122 = vld [vmem:[#allocation3 + $0x240] sm:$0xff]
      %v2123 = vld [vmem:[#allocation3 + $0x248] sm:$0xff]
      %v2124 = vld [vmem:[#allocation3 + $0x250] sm:$0xff]
      %v2125 = vld [vmem:[#allocation3 + $0x258] sm:$0xff]
      %v2126 = vld [vmem:[#allocation3 + $0x260] sm:$0xff]
      %v2127 = vld [vmem:[#allocation3 + $0x268] sm:$0xff]
      %v2128 = vld [vmem:[#allocation3 + $0x270] sm:$0xff]
      %v2129 = vld [vmem:[#allocation3 + $0x278] sm:$0xff]
      %v2130 = vld [vmem:[#allocation3 + $0x280] sm:$0xff]
      %v2131 = vld [vmem:[#allocation3 + $0x288] sm:$0xff]
      %v2132 = vld [vmem:[#allocation3 + $0x290] sm:$0xff]
      %v2133 = vld [vmem:[#allocation3 + $0x298] sm:$0xff]
      %v2134 = vld [vmem:[#allocation3 + $0x2a0] sm:$0xff]
      %v2135 = vld [vmem:[#allocation3 + $0x2a8] sm:$0xff]
      %v2136 = vld [vmem:[#allocation3 + $0x2b0] sm:$0xff]
      %v2137 = vld [vmem:[#allocation3 + $0x2b8] sm:$0xff]
      %v2138 = vld [vmem:[#allocation3 + $0x2c0] sm:$0xff]
      %v2139 = vld [vmem:[#allocation3 + $0x2c8] sm:$0xff]
      %v2140 = vld [vmem:[#allocation3 + $0x2d0] sm:$0xff]
      %v2141 = vld [vmem:[#allocation3 + $0x2d8] sm:$0xff]
      %v2142 = vld [vmem:[#allocation3 + $0x2e0] sm:$0xff]
      %v2143 = vld [vmem:[#allocation3 + $0x2e8] sm:$0xff]
      %v2144 = vld [vmem:[#allocation3 + $0x2f0] sm:$0xff]
      %v2145 = vld [vmem:[#allocation3 + $0x2f8] sm:$0xff]
      %v2146 = vld [vmem:[#allocation3 + $0x300] sm:$0xff]
      %v2147 = vld [vmem:[#allocation3 + $0x308] sm:$0xff]
      %v2148 = vld [vmem:[#allocation3 + $0x310] sm:$0xff]
      %v2149 = vld [vmem:[#allocation3 + $0x318] sm:$0xff]
      %v2150 = vld [vmem:[#allocation3 + $0x320] sm:$0xff]
      %v2151 = vld [vmem:[#allocation3 + $0x328] sm:$0xff]
      %v2152 = vld [vmem:[#allocation3 + $0x330] sm:$0xff]
      %v2153 = vld [vmem:[#allocation3 + $0x338] sm:$0xff]
      %v2154 = vld [vmem:[#allocation3 + $0x340] sm:$0xff]
      %v2155 = vld [vmem:[#allocation3 + $0x348] sm:$0xff]
      %v2156 = vld [vmem:[#allocation3 + $0x350] sm:$0xff]
      %v2157 = vld [vmem:[#allocation3 + $0x358] sm:$0xff]
      %v2158 = vld [vmem:[#allocation3 + $0x360] sm:$0xff]
      %v2159 = vld [vmem:[#allocation3 + $0x368] sm:$0xff]
      %v2160 = vpack.c.bf16 %v2052, %v2050
      %v2161 = vpack.c.bf16 %v2053, %v2051
      %v2162 = vpack.c.bf16 %v2056, %v2054
      %v2163 = vpack.c.bf16 %v2057, %v2055
      %v2164 = vpack.c.bf16 %v2060, %v2058
      %v2165 = vpack.c.bf16 %v2061, %v2059
      %v2166 = vpack.c.bf16 %v2064, %v2062
      %v2167 = vpack.c.bf16 %v2065, %v2063
      %v2168 = vpack.c.bf16 %v2068, %v2066
      %v2169 = vpack.c.bf16 %v2069, %v2067
      %v2170 = vpack.c.bf16 %v2072, %v2070
      %v2171 = vpack.c.bf16 %v2073, %v2071
      %v2172 = vpack.c.bf16 %v2076, %v2074
      %v2173 = vpack.c.bf16 %v2077, %v2075
      %v2174 = vpack.c.bf16 %v2080, %v2078
      %v2175 = vpack.c.bf16 %v2081, %v2079
      %v2176 = vpack.c.bf16 %v2084, %v2082
      %v2177 = vpack.c.bf16 %v2085, %v2083
      %v2178 = vpack.c.bf16 %v2088, %v2086
      %v2179 = vpack.c.bf16 %v2089, %v2087
      %v2180 = vpack.c.bf16 %v2092, %v2090
      %v2181 = vpack.c.bf16 %v2093, %v2091
      %v2182 = vpack.c.bf16 %v2096, %v2094
      %v2183 = vpack.c.bf16 %v2097, %v2095
      %v2184 = vpack.c.bf16 %v2100, %v2098
      %v2185 = vpack.c.bf16 %v2101, %v2099
      %v2186 = vpack.c.bf16 %v2104, %v2102
      %v2187 = vpack.c.bf16 %v2105, %v2103
      %v2188 = vpack.c.bf16 %v2108, %v2106
      %v2189 = vpack.c.bf16 %v2109, %v2107
      %v2190 = vpack.c.bf16 %v2112, %v2110
      %v2191 = vpack.c.bf16 %v2113, %v2111
      %v2192 = vpack.c.bf16 %v2116, %v2114
      %v2193 = vpack.c.bf16 %v2117, %v2115
      %v2194 = vpack.c.bf16 %v2120, %v2118
      %v2195 = vpack.c.bf16 %v2121, %v2119
      %v2196 = vpack.c.bf16 %v2124, %v2122
      %v2197 = vpack.c.bf16 %v2125, %v2123
      %v2198 = vpack.c.bf16 %v2128, %v2126
      %v2199 = vpack.c.bf16 %v2129, %v2127
      %v2200 = vpack.c.bf16 %v2132, %v2130
      %v2201 = vpack.c.bf16 %v2133, %v2131
      %v2202 = vpack.c.bf16 %v2136, %v2134
      %v2203 = vpack.c.bf16 %v2137, %v2135
      %v2204 = vpack.c.bf16 %v2140, %v2138
      %v2205 = vpack.c.bf16 %v2141, %v2139
      %v2206 = vpack.c.bf16 %v2144, %v2142
      %v2207 = vpack.c.bf16 %v2145, %v2143
      %v2208 = vpack.c.bf16 %v2148, %v2146
      %v2209 = vpack.c.bf16 %v2149, %v2147
      %v2210 = vpack.c.bf16 %v2152, %v2150
      %v2211 = vpack.c.bf16 %v2153, %v2151
      %v2212 = vpack.c.bf16 %v2156, %v2154
      %v2213 = vpack.c.bf16 %v2157, %v2155
      %v2214 = vpack.c.bf16 %v2158, %v2158
      %v2215 = vpack.c.bf16 %v2159, %v2159
      %v2216 = vld [vmem:[%s1] sm:$0xf]
      %v2217 = vld [vmem:[%s1 + $0x4] sm:$0xf]
      %v2218 = vld [vmem:[%s1 + $0x8] sm:$0xf]
      %v2219 = vld [vmem:[%s1 + $0xc] sm:$0xf]
      %v2220 = vld [vmem:[%s1 + $0x10] sm:$0xf]
      %v2221 = vld [vmem:[%s1 + $0x14] sm:$0xf]
      %v2222 = vld [vmem:[%s1 + $0x18] sm:$0xf]
      %v2223 = vld [vmem:[%s1 + $0x1c] sm:$0xf]
      %v2224 = vld [vmem:[%s1 + $0x20] sm:$0xf]
      %v2225 = vld [vmem:[%s1 + $0x24] sm:$0xf]
      %v2226 = vld [vmem:[%s1 + $0x28] sm:$0xf]
      %v2227 = vld [vmem:[%s1 + $0x2c] sm:$0xf]
      %v2228 = vld [vmem:[%s1 + $0x30] sm:$0xf]
      %v2229 = vld [vmem:[%s1 + $0x34] sm:$0xf]
      %v2230 = vld [vmem:[%s1 + $0x38] sm:$0xf]
      %v2231 = vld [vmem:[%s1 + $0x3c] sm:$0xf]
      %v2232 = vld [vmem:[%s1 + $0x40] sm:$0xf]
      %v2233 = vld [vmem:[%s1 + $0x44] sm:$0xf]
      %v2234 = vld [vmem:[%s1 + $0x48] sm:$0xf]
      %v2235 = vld [vmem:[%s1 + $0x4c] sm:$0xf]
      %v2236 = vld [vmem:[%s1 + $0x50] sm:$0xf]
      %v2237 = vld [vmem:[%s1 + $0x54] sm:$0xf]
      %v2238 = vld [vmem:[%s1 + $0x58] sm:$0xf]
      %v2239 = vld [vmem:[%s1 + $0x5c] sm:$0xf]
      %v2240 = vld [vmem:[%s1 + $0x60] sm:$0xf]
      %v2241 = vld [vmem:[%s1 + $0x64] sm:$0xf]
      %v2242 = vld [vmem:[%s1 + $0x68] sm:$0xf]
      %v2243 = vld [vmem:[%s1 + $0x6c] sm:$0xf]
      %v2244 = vld [vmem:[%s1 + $0x70] sm:$0xf]
      %v2245 = vld [vmem:[%s1 + $0x74] sm:$0xf]
      %v2246 = vld [vmem:[%s1 + $0x78] sm:$0xf]
      %v2247 = vld [vmem:[%s1 + $0x7c] sm:$0xf]
      %v2248 = vld [vmem:[%s2] sm:$0x1]
      %v2250 = vlaneseq
      %v2251 = vshrl.u32 %v2250, 7
      %v2252 = vsub.s32 0, %v2251
      %v2253 = vrot.slane %v2248, %v2252
      %v2287 = vunpack.c.l.b16 %v2216
      %v2288 = vunpack.c.l.b16 %v2217
      %v2289 = vunpack.c.l.b16 %v2218
      %v2290 = vunpack.c.l.b16 %v2219
      %v2291 = vunpack.c.l.b16 %v2220
      %v2292 = vunpack.c.l.b16 %v2221
      %v2293 = vunpack.c.l.b16 %v2222
      %v2294 = vunpack.c.l.b16 %v2223
      %v2295 = vunpack.c.l.b16 %v2224
      %v2296 = vunpack.c.l.b16 %v2225
      %v2297 = vunpack.c.l.b16 %v2226
      %v2298 = vunpack.c.l.b16 %v2227
      %v2299 = vunpack.c.l.b16 %v2228
      %v2300 = vunpack.c.l.b16 %v2229
      %v2301 = vunpack.c.l.b16 %v2230
      %v2302 = vunpack.c.l.b16 %v2231
      %v2303 = vunpack.c.l.b16 %v2232
      %v2304 = vunpack.c.l.b16 %v2233
      %v2305 = vunpack.c.l.b16 %v2234
      %v2306 = vunpack.c.l.b16 %v2235
      %v2307 = vunpack.c.l.b16 %v2236
      %v2308 = vunpack.c.l.b16 %v2237
      %v2309 = vunpack.c.l.b16 %v2238
      %v2310 = vunpack.c.l.b16 %v2239
      %v2311 = vunpack.c.l.b16 %v2240
      %v2312 = vunpack.c.l.b16 %v2241
      %v2313 = vunpack.c.l.b16 %v2242
      %v2314 = vunpack.c.l.b16 %v2243
      %v2315 = vunpack.c.l.b16 %v2244
      %v2316 = vunpack.c.l.b16 %v2245
      %v2317 = vunpack.c.l.b16 %v2246
      %v2318 = vunpack.c.l.b16 %v2247
      %v2319 = vpack.c.b16 %v2288, %v2287
      %v2320 = vpack.c.b16 %v2290, %v2289
      %v2321 = vpack.c.b16 %v2292, %v2291
      %v2322 = vpack.c.b16 %v2294, %v2293
      %v2323 = vpack.c.b16 %v2296, %v2295
      %v2324 = vpack.c.b16 %v2298, %v2297
      %v2325 = vpack.c.b16 %v2300, %v2299
      %v2326 = vpack.c.b16 %v2302, %v2301
      %v2327 = vpack.c.b16 %v2304, %v2303
      %v2328 = vpack.c.b16 %v2306, %v2305
      %v2329 = vpack.c.b16 %v2308, %v2307
      %v2330 = vpack.c.b16 %v2310, %v2309
      %v2331 = vpack.c.b16 %v2312, %v2311
      %v2332 = vpack.c.b16 %v2314, %v2313
      %v2333 = vpack.c.b16 %v2316, %v2315
      %v2334 = vpack.c.b16 %v2318, %v2317
      %2351 = vmatprep.subr.bf16.mxu0 0
      %2352 = vmatpush1.bf16.msra.mxu0 %v2319
      %2353 = vmatprep.subr.bf16.mxu0 0
      %2354 = vmatpush1.bf16.msra.mxu0 %v2320
      %2355 = vmatprep.subr.bf16.mxu0 0
      %2356 = vmatpush1.bf16.msra.mxu0 %v2321
      %2357 = vmatprep.subr.bf16.mxu0 0
      %2358 = vmatpush1.bf16.msra.mxu0 %v2322
      %2359 = vmatprep.subr.bf16.mxu0 0
      %2360 = vmatpush1.bf16.msra.mxu0 %v2323
      %2361 = vmatprep.subr.bf16.mxu0 0
      %2362 = vmatpush1.bf16.msra.mxu0 %v2324
      %2363 = vmatprep.subr.bf16.mxu0 0
      %2364 = vmatpush1.bf16.msra.mxu0 %v2325
      %2365 = vmatprep.subr.bf16.mxu0 0
      %2366 = vmatpush1.bf16.msra.mxu0 %v2326
      %2367 = vmatprep.subr.bf16.mxu0 0
      %2368 = vmatpush1.bf16.msra.mxu0 %v2327
      %2369 = vmatprep.subr.bf16.mxu0 0
      %2370 = vmatpush1.bf16.msra.mxu0 %v2328
      %2371 = vmatprep.subr.bf16.mxu0 0
      %2372 = vmatpush1.bf16.msra.mxu0 %v2329
      %2373 = vmatprep.subr.bf16.mxu0 0
      %2374 = vmatpush1.bf16.msra.mxu0 %v2330
      %2375 = vmatprep.subr.bf16.mxu0 0
      %2376 = vmatpush1.bf16.msra.mxu0 %v2331
      %2377 = vmatprep.subr.bf16.mxu0 0
      %2378 = vmatpush1.bf16.msra.mxu0 %v2332
      %2379 = vmatprep.subr.bf16.mxu0 0
      %2380 = vmatpush1.bf16.msra.mxu0 %v2333
      %2381 = vmatprep.subr.bf16.mxu0 0
      %2382 = vmatpush1.bf16.msra.mxu0 %v2334
      %2383 = vmatprep.mubr.bf16.mxu0 %v2161
      %2384 = vmatmul.mubr.bf16.gmra.mrb[0].mxu0 %v2160
      %v2385 = vpop.f32.mrb[0].mxu0
      %v2386 = vadd.f32 %v2253, %v2385
      %v2387 = vpop.f32.mrb[0].mxu0
      %v2388 = vpop.f32.mrb[0].mxu0
      %v2389 = vadd.f32 %v2253, %v2388
      %v2390 = vpop.f32.mrb[0].mxu0
      %2391 = vmatprep.mubr.bf16.mxu0 %v2163
      %2392 = vmatmul.mubr.bf16.gmra.mrb[0].mxu0 %v2162
      %v2393 = vpop.f32.mrb[0].mxu0
      %v2394 = vadd.f32 %v2253, %v2393
      %v2395 = vpop.f32.mrb[0].mxu0
      %v2396 = vpop.f32.mrb[0].mxu0
      %v2397 = vadd.f32 %v2253, %v2396
      %v2398 = vpop.f32.mrb[0].mxu0
      %2399 = vmatprep.mubr.bf16.mxu0 %v2165
      %2400 = vmatmul.mubr.bf16.gmra.mrb[0].mxu0 %v2164
      %v2401 = vpop.f32.mrb[0].mxu0
      %v2402 = vadd.f32 %v2253, %v2401
      %v2403 = vpop.f32.mrb[0].mxu0
      %v2404 = vpop.f32.mrb[0].mxu0
      %v2405 = vadd.f32 %v2253, %v2404
      %v2406 = vpop.f32.mrb[0].mxu0
      %2407 = vmatprep.mubr.bf16.mxu0 %v2167
      %2408 = vmatmul.mubr.bf16.gmra.mrb[0].mxu0 %v2166
      %v2409 = vpop.f32.mrb[0].mxu0
      %v2410 = vadd.f32 %v2253, %v2409
      %v2411 = vpop.f32.mrb[0].mxu0
      %v2412 = vpop.f32.mrb[0].mxu0
      %v2413 = vadd.f32 %v2253, %v2412
      %v2414 = vpop.f32.mrb[0].mxu0
      %2415 = vmatprep.mubr.bf16.mxu0 %v2169
      %2416 = vmatmul.mubr.bf16.gmra.mrb[0].mxu0 %v2168
      %v2417 = vpop.f32.mrb[0].mxu0
      %v2418 = vadd.f32 %v2253, %v2417
      %v2419 = vpop.f32.mrb[0].mxu0
      %v2420 = vpop.f32.mrb[0].mxu0
      %v2421 = vadd.f32 %v2253, %v2420
      %v2422 = vpop.f32.mrb[0].mxu0
      %2423 = vmatprep.mubr.bf16.mxu0 %v2171
      %2424 = vmatmul.mubr.bf16.gmra.mrb[0].mxu0 %v2170
      %v2425 = vpop.f32.mrb[0].mxu0
      %v2426 = vadd.f32 %v2253, %v2425
      %v2427 = vpop.f32.mrb[0].mxu0
      %v2428 = vpop.f32.mrb[0].mxu0
      %v2429 = vadd.f32 %v2253, %v2428
      %v2430 = vpop.f32.mrb[0].mxu0
      %2431 = vmatprep.mubr.bf16.mxu0 %v2173
      %2432 = vmatmul.mubr.bf16.gmra.mrb[0].mxu0 %v2172
      %v2433 = vpop.f32.mrb[0].mxu0
      %v2434 = vadd.f32 %v2253, %v2433
      %v2435 = vpop.f32.mrb[0].mxu0
      %v2436 = vpop.f32.mrb[0].mxu0
      %v2437 = vadd.f32 %v2253, %v2436
      %v2438 = vpop.f32.mrb[0].mxu0
      %2439 = vmatprep.mubr.bf16.mxu0 %v2175
      %2440 = vmatmul.mubr.bf16.gmra.mrb[0].mxu0 %v2174
      %v2441 = vpop.f32.mrb[0].mxu0
      %v2442 = vadd.f32 %v2253, %v2441
      %v2443 = vpop.f32.mrb[0].mxu0
      %v2444 = vpop.f32.mrb[0].mxu0
      %v2445 = vadd.f32 %v2253, %v2444
      %v2446 = vpop.f32.mrb[0].mxu0
      %2447 = vmatprep.mubr.bf16.mxu0 %v2177
      %2448 = vmatmul.mubr.bf16.gmra.mrb[0].mxu0 %v2176
      %v2449 = vpop.f32.mrb[0].mxu0
      %v2450 = vadd.f32 %v2253, %v2449
      %v2451 = vpop.f32.mrb[0].mxu0
      %v2452 = vpop.f32.mrb[0].mxu0
      %v2453 = vadd.f32 %v2253, %v2452
      %v2454 = vpop.f32.mrb[0].mxu0
      %2455 = vmatprep.mubr.bf16.mxu0 %v2179
      %2456 = vmatmul.mubr.bf16.gmra.mrb[0].mxu0 %v2178
      %v2457 = vpop.f32.mrb[0].mxu0
      %v2458 = vadd.f32 %v2253, %v2457
      %v2459 = vpop.f32.mrb[0].mxu0
      %v2460 = vpop.f32.mrb[0].mxu0
      %v2461 = vadd.f32 %v2253, %v2460
      %v2462 = vpop.f32.mrb[0].mxu0
      %2463 = vmatprep.mubr.bf16.mxu0 %v2181
      %2464 = vmatmul.mubr.bf16.gmra.mrb[0].mxu0 %v2180
      %v2465 = vpop.f32.mrb[0].mxu0
      %v2466 = vadd.f32 %v2253, %v2465
      %v2467 = vpop.f32.mrb[0].mxu0
      %v2468 = vpop.f32.mrb[0].mxu0
      %v2469 = vadd.f32 %v2253, %v2468
      %v2470 = vpop.f32.mrb[0].mxu0
      %2471 = vmatprep.mubr.bf16.mxu0 %v2183
      %2472 = vmatmul.mubr.bf16.gmra.mrb[0].mxu0 %v2182
      %v2473 = vpop.f32.mrb[0].mxu0
      %v2474 = vadd.f32 %v2253, %v2473
      %v2475 = vpop.f32.mrb[0].mxu0
      %v2476 = vpop.f32.mrb[0].mxu0
      %v2477 = vadd.f32 %v2253, %v2476
      %v2478 = vpop.f32.mrb[0].mxu0
      %2479 = vmatprep.mubr.bf16.mxu0 %v2185
      %2480 = vmatmul.mubr.bf16.gmra.mrb[0].mxu0 %v2184
      %v2481 = vpop.f32.mrb[0].mxu0
      %v2482 = vadd.f32 %v2253, %v2481
      %v2483 = vpop.f32.mrb[0].mxu0
      %v2484 = vpop.f32.mrb[0].mxu0
      %v2485 = vadd.f32 %v2253, %v2484
      %v2486 = vpop.f32.mrb[0].mxu0
      %2487 = vmatprep.mubr.bf16.mxu0 %v2187
      %2488 = vmatmul.mubr.bf16.gmra.mrb[0].mxu0 %v2186
      %v2489 = vpop.f32.mrb[0].mxu0
      %v2490 = vadd.f32 %v2253, %v2489
      %v2491 = vpop.f32.mrb[0].mxu0
      %v2492 = vpop.f32.mrb[0].mxu0
      %v2493 = vadd.f32 %v2253, %v2492
      %v2494 = vpop.f32.mrb[0].mxu0
      %2495 = vmatprep.mubr.bf16.mxu0 %v2189
      %2496 = vmatmul.mubr.bf16.gmra.mrb[0].mxu0 %v2188
      %v2497 = vpop.f32.mrb[0].mxu0
      %v2498 = vadd.f32 %v2253, %v2497
      %v2499 = vpop.f32.mrb[0].mxu0
      %v2500 = vpop.f32.mrb[0].mxu0
      %v2501 = vadd.f32 %v2253, %v2500
      %v2502 = vpop.f32.mrb[0].mxu0
      %2503 = vmatprep.mubr.bf16.mxu0 %v2191
      %2504 = vmatmul.mubr.bf16.gmra.mrb[0].mxu0 %v2190
      %v2505 = vpop.f32.mrb[0].mxu0
      %v2506 = vadd.f32 %v2253, %v2505
      %v2507 = vpop.f32.mrb[0].mxu0
      %v2508 = vpop.f32.mrb[0].mxu0
      %v2509 = vadd.f32 %v2253, %v2508
      %v2510 = vpop.f32.mrb[0].mxu0
      %2511 = vmatprep.mubr.bf16.mxu0 %v2193
      %2512 = vmatmul.mubr.bf16.gmra.mrb[0].mxu0 %v2192
      %v2513 = vpop.f32.mrb[0].mxu0
      %v2514 = vadd.f32 %v2253, %v2513
      %v2515 = vpop.f32.mrb[0].mxu0
      %v2516 = vpop.f32.mrb[0].mxu0
      %v2517 = vadd.f32 %v2253, %v2516
      %v2518 = vpop.f32.mrb[0].mxu0
      %2519 = vmatprep.mubr.bf16.mxu0 %v2195
      %2520 = vmatmul.mubr.bf16.gmra.mrb[0].mxu0 %v2194
      %v2521 = vpop.f32.mrb[0].mxu0
      %v2522 = vadd.f32 %v2253, %v2521
      %v2523 = vpop.f32.mrb[0].mxu0
      %v2524 = vpop.f32.mrb[0].mxu0
      %v2525 = vadd.f32 %v2253, %v2524
      %v2526 = vpop.f32.mrb[0].mxu0
      %2527 = vmatprep.mubr.bf16.mxu0 %v2197
      %2528 = vmatmul.mubr.bf16.gmra.mrb[0].mxu0 %v2196
      %v2529 = vpop.f32.mrb[0].mxu0
      %v2530 = vadd.f32 %v2253, %v2529
      %v2531 = vpop.f32.mrb[0].mxu0
      %v2532 = vpop.f32.mrb[0].mxu0
      %v2533 = vadd.f32 %v2253, %v2532
      %v2534 = vpop.f32.mrb[0].mxu0
      %2535 = vmatprep.mubr.bf16.mxu0 %v2199
      %2536 = vmatmul.mubr.bf16.gmra.mrb[0].mxu0 %v2198
      %v2537 = vpop.f32.mrb[0].mxu0
      %v2538 = vadd.f32 %v2253, %v2537
      %v2539 = vpop.f32.mrb[0].mxu0
      %v2540 = vpop.f32.mrb[0].mxu0
      %v2541 = vadd.f32 %v2253, %v2540
      %v2542 = vpop.f32.mrb[0].mxu0
      %2543 = vmatprep.mubr.bf16.mxu0 %v2201
      %2544 = vmatmul.mubr.bf16.gmra.mrb[0].mxu0 %v2200
      %v2545 = vpop.f32.mrb[0].mxu0
      %v2546 = vadd.f32 %v2253, %v2545
      %v2547 = vpop.f32.mrb[0].mxu0
      %v2548 = vpop.f32.mrb[0].mxu0
      %v2549 = vadd.f32 %v2253, %v2548
      %v2550 = vpop.f32.mrb[0].mxu0
      %2551 = vmatprep.mubr.bf16.mxu0 %v2203
      %2552 = vmatmul.mubr.bf16.gmra.mrb[0].mxu0 %v2202
      %v2553 = vpop.f32.mrb[0].mxu0
      %v2554 = vadd.f32 %v2253, %v2553
      %v2555 = vpop.f32.mrb[0].mxu0
      %v2556 = vpop.f32.mrb[0].mxu0
      %v2557 = vadd.f32 %v2253, %v2556
      %v2558 = vpop.f32.mrb[0].mxu0
      %2559 = vmatprep.mubr.bf16.mxu0 %v2205
      %2560 = vmatmul.mubr.bf16.gmra.mrb[0].mxu0 %v2204
      %v2561 = vpop.f32.mrb[0].mxu0
      %v2562 = vadd.f32 %v2253, %v2561
      %v2563 = vpop.f32.mrb[0].mxu0
      %v2564 = vpop.f32.mrb[0].mxu0
      %v2565 = vadd.f32 %v2253, %v2564
      %v2566 = vpop.f32.mrb[0].mxu0
      %2567 = vmatprep.mubr.bf16.mxu0 %v2207
      %2568 = vmatmul.mubr.bf16.gmra.mrb[0].mxu0 %v2206
      %v2569 = vpop.f32.mrb[0].mxu0
      %v2570 = vadd.f32 %v2253, %v2569
      %v2571 = vpop.f32.mrb[0].mxu0
      %v2572 = vpop.f32.mrb[0].mxu0
      %v2573 = vadd.f32 %v2253, %v2572
      %v2574 = vpop.f32.mrb[0].mxu0
      %2575 = vmatprep.mubr.bf16.mxu0 %v2209
      %2576 = vmatmul.mubr.bf16.gmra.mrb[0].mxu0 %v2208
      %v2577 = vpop.f32.mrb[0].mxu0
      %v2578 = vadd.f32 %v2253, %v2577
      %v2579 = vpop.f32.mrb[0].mxu0
      %v2580 = vpop.f32.mrb[0].mxu0
      %v2581 = vadd.f32 %v2253, %v2580
      %v2582 = vpop.f32.mrb[0].mxu0
      %2583 = vmatprep.mubr.bf16.mxu0 %v2211
      %2584 = vmatmul.mubr.bf16.gmra.mrb[0].mxu0 %v2210
      %v2585 = vpop.f32.mrb[0].mxu0
      %v2586 = vadd.f32 %v2253, %v2585
      %v2587 = vpop.f32.mrb[0].mxu0
      %v2588 = vpop.f32.mrb[0].mxu0
      %v2589 = vadd.f32 %v2253, %v2588
      %v2590 = vpop.f32.mrb[0].mxu0
      %2591 = vmatprep.mubr.bf16.mxu0 %v2213
      %2592 = vmatmul.mubr.bf16.gmra.mrb[0].mxu0 %v2212
      %v2593 = vpop.f32.mrb[0].mxu0
      %v2594 = vadd.f32 %v2253, %v2593
      %v2595 = vpop.f32.mrb[0].mxu0
      %v2596 = vpop.f32.mrb[0].mxu0
      %v2597 = vadd.f32 %v2253, %v2596
      %v2598 = vpop.f32.mrb[0].mxu0
      %2599 = vmatprep.mubr.bf16.mxu0 %v2215
      %2600 = vmatmul.mubr.bf16.gmra.mrb[0].mxu0 %v2214
      %v2601 = vpop.f32.mrb[0].mxu0
      %v2602 = vadd.f32 %v2253, %v2601
      %v2603 = vpop.f32.mrb[0].mxu0
      %v2604 = vpop.f32.mrb[0].mxu0
      %v2605 = vpop.f32.mrb[0].mxu0
      %2606 = vdwg.mxu0
      %v2607 = vmax.f32 %v2386, 0.0
      %v2608 = vmax.f32 %v2389, 0.0
      %v2609 = vmax.f32 %v2394, 0.0
      %v2610 = vmax.f32 %v2397, 0.0
      %v2611 = vmax.f32 %v2402, 0.0
      %v2612 = vmax.f32 %v2405, 0.0
      %v2613 = vmax.f32 %v2410, 0.0
      %v2614 = vmax.f32 %v2413, 0.0
      %v2615 = vmax.f32 %v2418, 0.0
      %v2616 = vmax.f32 %v2421, 0.0
      %v2617 = vmax.f32 %v2426, 0.0
      %v2618 = vmax.f32 %v2429, 0.0
      %v2619 = vmax.f32 %v2434, 0.0
      %v2620 = vmax.f32 %v2437, 0.0
      %v2621 = vmax.f32 %v2442, 0.0
      %v2622 = vmax.f32 %v2445, 0.0
      %v2623 = vmax.f32 %v2450, 0.0
      %v2624 = vmax.f32 %v2453, 0.0
      %v2625 = vmax.f32 %v2458, 0.0
      %v2626 = vmax.f32 %v2461, 0.0
      %v2627 = vmax.f32 %v2466, 0.0
      %v2628 = vmax.f32 %v2469, 0.0
      %v2629 = vmax.f32 %v2474, 0.0
      %v2630 = vmax.f32 %v2477, 0.0
      %v2631 = vmax.f32 %v2482, 0.0
      %v2632 = vmax.f32 %v2485, 0.0
      %v2633 = vmax.f32 %v2490, 0.0
      %v2634 = vmax.f32 %v2493, 0.0
      %v2635 = vmax.f32 %v2498, 0.0
      %v2636 = vmax.f32 %v2501, 0.0
      %v2637 = vmax.f32 %v2506, 0.0
      %v2638 = vmax.f32 %v2509, 0.0
      %v2639 = vmax.f32 %v2514, 0.0
      %v2640 = vmax.f32 %v2517, 0.0
      %v2641 = vmax.f32 %v2522, 0.0
      %v2642 = vmax.f32 %v2525, 0.0
      %v2643 = vmax.f32 %v2530, 0.0
      %v2644 = vmax.f32 %v2533, 0.0
      %v2645 = vmax.f32 %v2538, 0.0
      %v2646 = vmax.f32 %v2541, 0.0
      %v2647 = vmax.f32 %v2546, 0.0
      %v2648 = vmax.f32 %v2549, 0.0
      %v2649 = vmax.f32 %v2554, 0.0
      %v2650 = vmax.f32 %v2557, 0.0
      %v2651 = vmax.f32 %v2562, 0.0
      %v2652 = vmax.f32 %v2565, 0.0
      %v2653 = vmax.f32 %v2570, 0.0
      %v2654 = vmax.f32 %v2573, 0.0
      %v2655 = vmax.f32 %v2578, 0.0
      %v2656 = vmax.f32 %v2581, 0.0
      %v2657 = vmax.f32 %v2586, 0.0
      %v2658 = vmax.f32 %v2589, 0.0
      %v2659 = vmax.f32 %v2594, 0.0
      %v2660 = vmax.f32 %v2597, 0.0
      %v2661 = vmax.f32 %v2602, 0.0
      %vm2662 = vcmask 261120
      %2663 = vst.msk [vmem:[#allocation4] sm:$0xff] %vm2662, %v2607
      %2664 = vst.msk [vmem:[#allocation4 + $0x8] sm:$0xff] %vm2662, %v2608
      %2665 = vst.msk [vmem:[#allocation4 + $0x10] sm:$0xff] %vm2662, %v2609
      %2666 = vst.msk [vmem:[#allocation4 + $0x18] sm:$0xff] %vm2662, %v2610
      %2667 = vst.msk [vmem:[#allocation4 + $0x20] sm:$0xff] %vm2662, %v2611
      %2668 = vst.msk [vmem:[#allocation4 + $0x28] sm:$0xff] %vm2662, %v2612
      %2669 = vst.msk [vmem:[#allocation4 + $0x30] sm:$0xff] %vm2662, %v2613
      %2670 = vst.msk [vmem:[#allocation4 + $0x38] sm:$0xff] %vm2662, %v2614
      %2671 = vst.msk [vmem:[#allocation4 + $0x40] sm:$0xff] %vm2662, %v2615
      %2672 = vst.msk [vmem:[#allocation4 + $0x48] sm:$0xff] %vm2662, %v2616
      %2673 = vst.msk [vmem:[#allocation4 + $0x50] sm:$0xff] %vm2662, %v2617
      %2674 = vst.msk [vmem:[#allocation4 + $0x58] sm:$0xff] %vm2662, %v2618
      %2675 = vst.msk [vmem:[#allocation4 + $0x60] sm:$0xff] %vm2662, %v2619
      %2676 = vst.msk [vmem:[#allocation4 + $0x68] sm:$0xff] %vm2662, %v2620
      %2677 = vst.msk [vmem:[#allocation4 + $0x70] sm:$0xff] %vm2662, %v2621
      %2678 = vst.msk [vmem:[#allocation4 + $0x78] sm:$0xff] %vm2662, %v2622
      %2679 = vst.msk [vmem:[#allocation4 + $0x80] sm:$0xff] %vm2662, %v2623
      %2680 = vst.msk [vmem:[#allocation4 + $0x88] sm:$0xff] %vm2662, %v2624
      %2681 = vst.msk [vmem:[#allocation4 + $0x90] sm:$0xff] %vm2662, %v2625
      %2682 = vst.msk [vmem:[#allocation4 + $0x98] sm:$0xff] %vm2662, %v2626
      %2683 = vst.msk [vmem:[#allocation4 + $0xa0] sm:$0xff] %vm2662, %v2627
      %2684 = vst.msk [vmem:[#allocation4 + $0xa8] sm:$0xff] %vm2662, %v2628
      %2685 = vst.msk [vmem:[#allocation4 + $0xb0] sm:$0xff] %vm2662, %v2629
      %2686 = vst.msk [vmem:[#allocation4 + $0xb8] sm:$0xff] %vm2662, %v2630
      %2687 = vst.msk [vmem:[#allocation4 + $0xc0] sm:$0xff] %vm2662, %v2631
      %2688 = vst.msk [vmem:[#allocation4 + $0xc8] sm:$0xff] %vm2662, %v2632
      %2689 = vst.msk [vmem:[#allocation4 + $0xd0] sm:$0xff] %vm2662, %v2633
      %2690 = vst.msk [vmem:[#allocation4 + $0xd8] sm:$0xff] %vm2662, %v2634
      %2691 = vst.msk [vmem:[#allocation4 + $0xe0] sm:$0xff] %vm2662, %v2635
      %2692 = vst.msk [vmem:[#allocation4 + $0xe8] sm:$0xff] %vm2662, %v2636
      %2693 = vst.msk [vmem:[#allocation4 + $0xf0] sm:$0xff] %vm2662, %v2637
      %2694 = vst.msk [vmem:[#allocation4 + $0xf8] sm:$0xff] %vm2662, %v2638
      %2695 = vst.msk [vmem:[#allocation4 + $0x100] sm:$0xff] %vm2662, %v2639
      %2696 = vst.msk [vmem:[#allocation4 + $0x108] sm:$0xff] %vm2662, %v2640
      %2697 = vst.msk [vmem:[#allocation4 + $0x110] sm:$0xff] %vm2662, %v2641
      %2698 = vst.msk [vmem:[#allocation4 + $0x118] sm:$0xff] %vm2662, %v2642
      %2699 = vst.msk [vmem:[#allocation4 + $0x120] sm:$0xff] %vm2662, %v2643
      %2700 = vst.msk [vmem:[#allocation4 + $0x128] sm:$0xff] %vm2662, %v2644
      %2701 = vst.msk [vmem:[#allocation4 + $0x130] sm:$0xff] %vm2662, %v2645
      %2702 = vst.msk [vmem:[#allocation4 + $0x138] sm:$0xff] %vm2662, %v2646
      %2703 = vst.msk [vmem:[#allocation4 + $0x140] sm:$0xff] %vm2662, %v2647
      %2704 = vst.msk [vmem:[#allocation4 + $0x148] sm:$0xff] %vm2662, %v2648
      %2705 = vst.msk [vmem:[#allocation4 + $0x150] sm:$0xff] %vm2662, %v2649
      %2706 = vst.msk [vmem:[#allocation4 + $0x158] sm:$0xff] %vm2662, %v2650
      %2707 = vst.msk [vmem:[#allocation4 + $0x160] sm:$0xff] %vm2662, %v2651
      %2708 = vst.msk [vmem:[#allocation4 + $0x168] sm:$0xff] %vm2662, %v2652
      %2709 = vst.msk [vmem:[#allocation4 + $0x170] sm:$0xff] %vm2662, %v2653
      %2710 = vst.msk [vmem:[#allocation4 + $0x178] sm:$0xff] %vm2662, %v2654
      %2711 = vst.msk [vmem:[#allocation4 + $0x180] sm:$0xff] %vm2662, %v2655
      %2712 = vst.msk [vmem:[#allocation4 + $0x188] sm:$0xff] %vm2662, %v2656
      %2713 = vst.msk [vmem:[#allocation4 + $0x190] sm:$0xff] %vm2662, %v2657
      %2714 = vst.msk [vmem:[#allocation4 + $0x198] sm:$0xff] %vm2662, %v2658
      %2715 = vst.msk [vmem:[#allocation4 + $0x1a0] sm:$0xff] %vm2662, %v2659
      %2716 = vst.msk [vmem:[#allocation4 + $0x1a8] sm:$0xff] %vm2662, %v2660
      %2717 = vst.msk [vmem:[#allocation4 + $0x1b0] sm:$0xff] %vm2662, %v2661
      %v2718 = vld [vmem:[#allocation4] sm:$0xff]
      %v2719 = vld [vmem:[#allocation4 + $0x8] sm:$0xff]
      %v2720 = vld [vmem:[#allocation4 + $0x10] sm:$0xff]
      %v2721 = vld [vmem:[#allocation4 + $0x18] sm:$0xff]
      %v2722 = vld [vmem:[#allocation4 + $0x20] sm:$0xff]
      %v2723 = vld [vmem:[#allocation4 + $0x28] sm:$0xff]
      %v2724 = vld [vmem:[#allocation4 + $0x30] sm:$0xff]
      %v2725 = vld [vmem:[#allocation4 + $0x38] sm:$0xff]
      %v2726 = vld [vmem:[#allocation4 + $0x40] sm:$0xff]
      %v2727 = vld [vmem:[#allocation4 + $0x48] sm:$0xff]
      %v2728 = vld [vmem:[#allocation4 + $0x50] sm:$0xff]
      %v2729 = vld [vmem:[#allocation4 + $0x58] sm:$0xff]
      %v2730 = vld [vmem:[#allocation4 + $0x60] sm:$0x1]
      %2731 = vst.msk [vmem:[#allocation5] sm:$0xff] %vm2662, %v2718
      %2732 = vst.msk [vmem:[#allocation5 + $0x20] sm:$0xff] %vm2662, %v2719
      %2733 = vst.msk [vmem:[#allocation5 + $0x40] sm:$0xff] %vm2662, %v2720
      %2734 = vst.msk [vmem:[#allocation5 + $0x60] sm:$0xff] %vm2662, %v2721
      %2735 = vst.msk [vmem:[#allocation5 + $0x80] sm:$0xff] %vm2662, %v2722
      %2736 = vst.msk [vmem:[#allocation5 + $0xa0] sm:$0xff] %vm2662, %v2723
      %2737 = vst.msk [vmem:[#allocation5 + $0xc0] sm:$0xff] %vm2662, %v2724
      %2738 = vst.msk [vmem:[#allocation5 + $0xe0] sm:$0xff] %vm2662, %v2725
      %2739 = vst.msk [vmem:[#allocation5 + $0x100] sm:$0xff] %vm2662, %v2726
      %2740 = vst.msk [vmem:[#allocation5 + $0x120] sm:$0xff] %vm2662, %v2727
      %2741 = vst.msk [vmem:[#allocation5 + $0x140] sm:$0xff] %vm2662, %v2728
      %2742 = vst.msk [vmem:[#allocation5 + $0x160] sm:$0xff] %vm2662, %v2729
      %vm2743 = vcmask 253952
      %2744 = vst.msk [vmem:[#allocation5 + $0x180] sm:$0x1] %vm2743, %v2730
      %v2745 = vld [vmem:[#allocation4 + $0x1] sm:$0xff]
      %v2746 = vld [vmem:[#allocation4 + $0x9] sm:$0xff]
      %v2747 = vld [vmem:[#allocation4 + $0x11] sm:$0xff]
      %v2748 = vld [vmem:[#allocation4 + $0x19] sm:$0xff]
      %v2749 = vld [vmem:[#allocation4 + $0x21] sm:$0xff]
      %v2750 = vld [vmem:[#allocation4 + $0x29] sm:$0xff]
      %v2751 = vld [vmem:[#allocation4 + $0x31] sm:$0xff]
      %v2752 = vld [vmem:[#allocation4 + $0x39] sm:$0xff]
      %v2753 = vld [vmem:[#allocation4 + $0x41] sm:$0xff]
      %v2754 = vld [vmem:[#allocation4 + $0x49] sm:$0xff]
      %v2755 = vld [vmem:[#allocation4 + $0x51] sm:$0xff]
      %v2756 = vld [vmem:[#allocation4 + $0x59] sm:$0xff]
      %v2757 = vld [vmem:[#allocation4 + $0x61] sm:$0x1]
      %2771 = vrot.lane.b32.xlu0 %v2745, 32
      %v2772 = vpop.permute.xlu0 %2771
      %2773 = vrot.lane.b32.xlu0 %v2746, 32
      %v2774 = vpop.permute.xlu0 %2773
      %2775 = vrot.lane.b32.xlu0 %v2747, 32
      %v2776 = vpop.permute.xlu0 %2775
      %2777 = vrot.lane.b32.xlu0 %v2748, 32
      %v2778 = vpop.permute.xlu0 %2777
      %2779 = vrot.lane.b32.xlu0 %v2749, 32
      %v2780 = vpop.permute.xlu0 %2779
      %2781 = vrot.lane.b32.xlu0 %v2750, 32
      %v2782 = vpop.permute.xlu0 %2781
      %2783 = vrot.lane.b32.xlu0 %v2751, 32
      %v2784 = vpop.permute.xlu0 %2783
      %2785 = vrot.lane.b32.xlu0 %v2752, 32
      %v2786 = vpop.permute.xlu0 %2785
      %2787 = vrot.lane.b32.xlu0 %v2753, 32
      %v2788 = vpop.permute.xlu0 %2787
      %2789 = vrot.lane.b32.xlu0 %v2754, 32
      %v2790 = vpop.permute.xlu0 %2789
      %2791 = vrot.lane.b32.xlu0 %v2755, 32
      %v2792 = vpop.permute.xlu0 %2791
      %2793 = vrot.lane.b32.xlu0 %v2756, 32
      %v2794 = vpop.permute.xlu0 %2793
      %2795 = vrot.lane.b32.xlu0 %v2757, 32
      %v2796 = vpop.permute.xlu0 %2795
      %vm2810 = vcmask 523520
      %2811 = vst.msk [vmem:[#allocation5] sm:$0xff] %vm2810, %v2772
      %2812 = vst.msk [vmem:[#allocation5 + $0x20] sm:$0xff] %vm2810, %v2774
      %2813 = vst.msk [vmem:[#allocation5 + $0x40] sm:$0xff] %vm2810, %v2776
      %2814 = vst.msk [vmem:[#allocation5 + $0x60] sm:$0xff] %vm2810, %v2778
      %2815 = vst.msk [vmem:[#allocation5 + $0x80] sm:$0xff] %vm2810, %v2780
      %2816 = vst.msk [vmem:[#allocation5 + $0xa0] sm:$0xff] %vm2810, %v2782
      %2817 = vst.msk [vmem:[#allocation5 + $0xc0] sm:$0xff] %vm2810, %v2784
      %2818 = vst.msk [vmem:[#allocation5 + $0xe0] sm:$0xff] %vm2810, %v2786
      %2819 = vst.msk [vmem:[#allocation5 + $0x100] sm:$0xff] %vm2810, %v2788
      %2820 = vst.msk [vmem:[#allocation5 + $0x120] sm:$0xff] %vm2810, %v2790
      %2821 = vst.msk [vmem:[#allocation5 + $0x140] sm:$0xff] %vm2810, %v2792
      %2822 = vst.msk [vmem:[#allocation5 + $0x160] sm:$0xff] %vm2810, %v2794
      %vm2823 = vcmask 516352
      %2824 = vst.msk [vmem:[#allocation5 + $0x180] sm:$0x1] %vm2823, %v2796
      %v2825 = vld [vmem:[#allocation4 + $0xb] sm:$0xff]
      %v2826 = vld [vmem:[#allocation4 + $0x13] sm:$0xff]
      %v2827 = vld [vmem:[#allocation4 + $0x1b] sm:$0xff]
      %v2828 = vld [vmem:[#allocation4 + $0x23] sm:$0xff]
      %v2829 = vld [vmem:[#allocation4 + $0x2b] sm:$0xff]
      %v2830 = vld [vmem:[#allocation4 + $0x33] sm:$0xff]
      %v2831 = vld [vmem:[#allocation4 + $0x3b] sm:$0xff]
      %v2832 = vld [vmem:[#allocation4 + $0x43] sm:$0xff]
      %v2833 = vld [vmem:[#allocation4 + $0x4b] sm:$0xff]
      %v2834 = vld [vmem:[#allocation4 + $0x53] sm:$0xff]
      %v2835 = vld [vmem:[#allocation4 + $0x5b] sm:$0xff]
      %v2836 = vld [vmem:[#allocation4 + $0x63] sm:$0xff]
      %v2837 = vld [vmem:[#allocation4 + $0x6b] sm:$0x1]
      %2851 = vrot.lane.b32.xlu0 %v2825, 64
      %v2852 = vpop.permute.xlu0 %2851
      %2853 = vrot.lane.b32.xlu0 %v2826, 64
      %v2854 = vpop.permute.xlu0 %2853
      %2855 = vrot.lane.b32.xlu0 %v2827, 64
      %v2856 = vpop.permute.xlu0 %2855
      %2857 = vrot.lane.b32.xlu0 %v2828, 64
      %v2858 = vpop.permute.xlu0 %2857
      %2859 = vrot.lane.b32.xlu0 %v2829, 64
      %v2860 = vpop.permute.xlu0 %2859
      %2861 = vrot.lane.b32.xlu0 %v2830, 64
      %v2862 = vpop.permute.xlu0 %2861
      %2863 = vrot.lane.b32.xlu0 %v2831, 64
      %v2864 = vpop.permute.xlu0 %2863
      %2865 = vrot.lane.b32.xlu0 %v2832, 64
      %v2866 = vpop.permute.xlu0 %2865
      %2867 = vrot.lane.b32.xlu0 %v2833, 64
      %v2868 = vpop.permute.xlu0 %2867
      %2869 = vrot.lane.b32.xlu0 %v2834, 64
      %v2870 = vpop.permute.xlu0 %2869
      %2871 = vrot.lane.b32.xlu0 %v2835, 64
      %v2872 = vpop.permute.xlu0 %2871
      %2873 = vrot.lane.b32.xlu0 %v2836, 64
      %v2874 = vpop.permute.xlu0 %2873
      %2875 = vrot.lane.b32.xlu0 %v2837, 64
      %v2876 = vpop.permute.xlu0 %2875
      %vm2890 = vcmask 785920
      %2891 = vst.msk [vmem:[#allocation5] sm:$0xff] %vm2890, %v2852
      %2892 = vst.msk [vmem:[#allocation5 + $0x20] sm:$0xff] %vm2890, %v2854
      %2893 = vst.msk [vmem:[#allocation5 + $0x40] sm:$0xff] %vm2890, %v2856
      %2894 = vst.msk [vmem:[#allocation5 + $0x60] sm:$0xff] %vm2890, %v2858
      %2895 = vst.msk [vmem:[#allocation5 + $0x80] sm:$0xff] %vm2890, %v2860
      %2896 = vst.msk [vmem:[#allocation5 + $0xa0] sm:$0xff] %vm2890, %v2862
      %2897 = vst.msk [vmem:[#allocation5 + $0xc0] sm:$0xff] %vm2890, %v2864
      %2898 = vst.msk [vmem:[#allocation5 + $0xe0] sm:$0xff] %vm2890, %v2866
      %2899 = vst.msk [vmem:[#allocation5 + $0x100] sm:$0xff] %vm2890, %v2868
      %2900 = vst.msk [vmem:[#allocation5 + $0x120] sm:$0xff] %vm2890, %v2870
      %2901 = vst.msk [vmem:[#allocation5 + $0x140] sm:$0xff] %vm2890, %v2872
      %2902 = vst.msk [vmem:[#allocation5 + $0x160] sm:$0xff] %vm2890, %v2874
      %vm2903 = vcmask 778752
      %2904 = vst.msk [vmem:[#allocation5 + $0x180] sm:$0x1] %vm2903, %v2876
      %v2905 = vld [vmem:[#allocation4 + $0xc] sm:$0xff]
      %v2906 = vld [vmem:[#allocation4 + $0x14] sm:$0xff]
      %v2907 = vld [vmem:[#allocation4 + $0x1c] sm:$0xff]
      %v2908 = vld [vmem:[#allocation4 + $0x24] sm:$0xff]
      %v2909 = vld [vmem:[#allocation4 + $0x2c] sm:$0xff]
      %v2910 = vld [vmem:[#allocation4 + $0x34] sm:$0xff]
      %v2911 = vld [vmem:[#allocation4 + $0x3c] sm:$0xff]
      %v2912 = vld [vmem:[#allocation4 + $0x44] sm:$0xff]
      %v2913 = vld [vmem:[#allocation4 + $0x4c] sm:$0xff]
      %v2914 = vld [vmem:[#allocation4 + $0x54] sm:$0xff]
      %v2915 = vld [vmem:[#allocation4 + $0x5c] sm:$0xff]
      %v2916 = vld [vmem:[#allocation4 + $0x64] sm:$0xff]
      %v2917 = vld [vmem:[#allocation4 + $0x6c] sm:$0x1]
      %2931 = vrot.lane.b32.xlu0 %v2905, 96
      %v2932 = vpop.permute.xlu0 %2931
      %2933 = vrot.lane.b32.xlu0 %v2906, 96
      %v2934 = vpop.permute.xlu0 %2933
      %2935 = vrot.lane.b32.xlu0 %v2907, 96
      %v2936 = vpop.permute.xlu0 %2935
      %2937 = vrot.lane.b32.xlu0 %v2908, 96
      %v2938 = vpop.permute.xlu0 %2937
      %2939 = vrot.lane.b32.xlu0 %v2909, 96
      %v2940 = vpop.permute.xlu0 %2939
      %2941 = vrot.lane.b32.xlu0 %v2910, 96
      %v2942 = vpop.permute.xlu0 %2941
      %2943 = vrot.lane.b32.xlu0 %v2911, 96
      %v2944 = vpop.permute.xlu0 %2943
      %2945 = vrot.lane.b32.xlu0 %v2912, 96
      %v2946 = vpop.permute.xlu0 %2945
      %2947 = vrot.lane.b32.xlu0 %v2913, 96
      %v2948 = vpop.permute.xlu0 %2947
      %2949 = vrot.lane.b32.xlu0 %v2914, 96
      %v2950 = vpop.permute.xlu0 %2949
      %2951 = vrot.lane.b32.xlu0 %v2915, 96
      %v2952 = vpop.permute.xlu0 %2951
      %2953 = vrot.lane.b32.xlu0 %v2916, 96
      %v2954 = vpop.permute.xlu0 %2953
      %2955 = vrot.lane.b32.xlu0 %v2917, 96
      %v2956 = vpop.permute.xlu0 %2955
      %vm2970 = vcmask 1048320
      %2971 = vst.msk [vmem:[#allocation5] sm:$0xff] %vm2970, %v2932
      %2972 = vst.msk [vmem:[#allocation5 + $0x20] sm:$0xff] %vm2970, %v2934
      %2973 = vst.msk [vmem:[#allocation5 + $0x40] sm:$0xff] %vm2970, %v2936
      %2974 = vst.msk [vmem:[#allocation5 + $0x60] sm:$0xff] %vm2970, %v2938
      %2975 = vst.msk [vmem:[#allocation5 + $0x80] sm:$0xff] %vm2970, %v2940
      %2976 = vst.msk [vmem:[#allocation5 + $0xa0] sm:$0xff] %vm2970, %v2942
      %2977 = vst.msk [vmem:[#allocation5 + $0xc0] sm:$0xff] %vm2970, %v2944
      %2978 = vst.msk [vmem:[#allocation5 + $0xe0] sm:$0xff] %vm2970, %v2946
      %2979 = vst.msk [vmem:[#allocation5 + $0x100] sm:$0xff] %vm2970, %v2948
      %2980 = vst.msk [vmem:[#allocation5 + $0x120] sm:$0xff] %vm2970, %v2950
      %2981 = vst.msk [vmem:[#allocation5 + $0x140] sm:$0xff] %vm2970, %v2952
      %2982 = vst.msk [vmem:[#allocation5 + $0x160] sm:$0xff] %vm2970, %v2954
      %vm2983 = vcmask 1041152
      %2984 = vst.msk [vmem:[#allocation5 + $0x180] sm:$0x1] %vm2983, %v2956
      %v2985 = vld [vmem:[#allocation4 + $0x6e] sm:$0xff]
      %v2986 = vld [vmem:[#allocation4 + $0x76] sm:$0xff]
      %v2987 = vld [vmem:[#allocation4 + $0x7e] sm:$0xff]
      %v2988 = vld [vmem:[#allocation4 + $0x86] sm:$0xff]
      %v2989 = vld [vmem:[#allocation4 + $0x8e] sm:$0xff]
      %v2990 = vld [vmem:[#allocation4 + $0x96] sm:$0xff]
      %v2991 = vld [vmem:[#allocation4 + $0x9e] sm:$0xff]
      %v2992 = vld [vmem:[#allocation4 + $0xa6] sm:$0xff]
      %v2993 = vld [vmem:[#allocation4 + $0xae] sm:$0xff]
      %v2994 = vld [vmem:[#allocation4 + $0xb6] sm:$0xff]
      %v2995 = vld [vmem:[#allocation4 + $0xbe] sm:$0xff]
      %v2996 = vld [vmem:[#allocation4 + $0xc6] sm:$0xff]
      %v2997 = vld [vmem:[#allocation4 + $0xce] sm:$0x1]
      %2998 = vst.msk [vmem:[#allocation5 + $0x8] sm:$0xff] %vm2662, %v2985
      %2999 = vst.msk [vmem:[#allocation5 + $0x28] sm:$0xff] %vm2662, %v2986
      %3000 = vst.msk [vmem:[#allocation5 + $0x48] sm:$0xff] %vm2662, %v2987
      %3001 = vst.msk [vmem:[#allocation5 + $0x68] sm:$0xff] %vm2662, %v2988
      %3002 = vst.msk [vmem:[#allocation5 + $0x88] sm:$0xff] %vm2662, %v2989
      %3003 = vst.msk [vmem:[#allocation5 + $0xa8] sm:$0xff] %vm2662, %v2990
      %3004 = vst.msk [vmem:[#allocation5 + $0xc8] sm:$0xff] %vm2662, %v2991
      %3005 = vst.msk [vmem:[#allocation5 + $0xe8] sm:$0xff] %vm2662, %v2992
      %3006 = vst.msk [vmem:[#allocation5 + $0x108] sm:$0xff] %vm2662, %v2993
      %3007 = vst.msk [vmem:[#allocation5 + $0x128] sm:$0xff] %vm2662, %v2994
      %3008 = vst.msk [vmem:[#allocation5 + $0x148] sm:$0xff] %vm2662, %v2995
      %3009 = vst.msk [vmem:[#allocation5 + $0x168] sm:$0xff] %vm2662, %v2996
      %3010 = vst.msk [vmem:[#allocation5 + $0x188] sm:$0x1] %vm2743, %v2997
      %v3011 = vld [vmem:[#allocation4 + $0x6f] sm:$0xff]
      %v3012 = vld [vmem:[#allocation4 + $0x77] sm:$0xff]
      %v3013 = vld [vmem:[#allocation4 + $0x7f] sm:$0xff]
      %v3014 = vld [vmem:[#allocation4 + $0x87] sm:$0xff]
      %v3015 = vld [vmem:[#allocation4 + $0x8f] sm:$0xff]
      %v3016 = vld [vmem:[#allocation4 + $0x97] sm:$0xff]
      %v3017 = vld [vmem:[#allocation4 + $0x9f] sm:$0xff]
      %v3018 = vld [vmem:[#allocation4 + $0xa7] sm:$0xff]
      %v3019 = vld [vmem:[#allocation4 + $0xaf] sm:$0xff]
      %v3020 = vld [vmem:[#allocation4 + $0xb7] sm:$0xff]
      %v3021 = vld [vmem:[#allocation4 + $0xbf] sm:$0xff]
      %v3022 = vld [vmem:[#allocation4 + $0xc7] sm:$0xff]
      %v3023 = vld [vmem:[#allocation4 + $0xcf] sm:$0x1]
      %3037 = vrot.lane.b32.xlu0 %v3011, 32
      %v3038 = vpop.permute.xlu0 %3037
      %3039 = vrot.lane.b32.xlu0 %v3012, 32
      %v3040 = vpop.permute.xlu0 %3039
      %3041 = vrot.lane.b32.xlu0 %v3013, 32
      %v3042 = vpop.permute.xlu0 %3041
      %3043 = vrot.lane.b32.xlu0 %v3014, 32
      %v3044 = vpop.permute.xlu0 %3043
      %3045 = vrot.lane.b32.xlu0 %v3015, 32
      %v3046 = vpop.permute.xlu0 %3045
      %3047 = vrot.lane.b32.xlu0 %v3016, 32
      %v3048 = vpop.permute.xlu0 %3047
      %3049 = vrot.lane.b32.xlu0 %v3017, 32
      %v3050 = vpop.permute.xlu0 %3049
      %3051 = vrot.lane.b32.xlu0 %v3018, 32
      %v3052 = vpop.permute.xlu0 %3051
      %3053 = vrot.lane.b32.xlu0 %v3019, 32
      %v3054 = vpop.permute.xlu0 %3053
      %3055 = vrot.lane.b32.xlu0 %v3020, 32
      %v3056 = vpop.permute.xlu0 %3055
      %3057 = vrot.lane.b32.xlu0 %v3021, 32
      %v3058 = vpop.permute.xlu0 %3057
      %3059 = vrot.lane.b32.xlu0 %v3022, 32
      %v3060 = vpop.permute.xlu0 %3059
      %3061 = vrot.lane.b32.xlu0 %v3023, 32
      %v3062 = vpop.permute.xlu0 %3061
      %3076 = vst.msk [vmem:[#allocation5 + $0x8] sm:$0xff] %vm2810, %v3038
      %3077 = vst.msk [vmem:[#allocation5 + $0x28] sm:$0xff] %vm2810, %v3040
      %3078 = vst.msk [vmem:[#allocation5 + $0x48] sm:$0xff] %vm2810, %v3042
      %3079 = vst.msk [vmem:[#allocation5 + $0x68] sm:$0xff] %vm2810, %v3044
      %3080 = vst.msk [vmem:[#allocation5 + $0x88] sm:$0xff] %vm2810, %v3046
      %3081 = vst.msk [vmem:[#allocation5 + $0xa8] sm:$0xff] %vm2810, %v3048
      %3082 = vst.msk [vmem:[#allocation5 + $0xc8] sm:$0xff] %vm2810, %v3050
      %3083 = vst.msk [vmem:[#allocation5 + $0xe8] sm:$0xff] %vm2810, %v3052
      %3084 = vst.msk [vmem:[#allocation5 + $0x108] sm:$0xff] %vm2810, %v3054
      %3085 = vst.msk [vmem:[#allocation5 + $0x128] sm:$0xff] %vm2810, %v3056
      %3086 = vst.msk [vmem:[#allocation5 + $0x148] sm:$0xff] %vm2810, %v3058
      %3087 = vst.msk [vmem:[#allocation5 + $0x168] sm:$0xff] %vm2810, %v3060
      %3088 = vst.msk [vmem:[#allocation5 + $0x188] sm:$0x1] %vm2823, %v3062
      %v3089 = vld [vmem:[#allocation4 + $0x79] sm:$0xff]
      %v3090 = vld [vmem:[#allocation4 + $0x81] sm:$0xff]
      %v3091 = vld [vmem:[#allocation4 + $0x89] sm:$0xff]
      %v3092 = vld [vmem:[#allocation4 + $0x91] sm:$0xff]
      %v3093 = vld [vmem:[#allocation4 + $0x99] sm:$0xff]
      %v3094 = vld [vmem:[#allocation4 + $0xa1] sm:$0xff]
      %v3095 = vld [vmem:[#allocation4 + $0xa9] sm:$0xff]
      %v3096 = vld [vmem:[#allocation4 + $0xb1] sm:$0xff]
      %v3097 = vld [vmem:[#allocation4 + $0xb9] sm:$0xff]
      %v3098 = vld [vmem:[#allocation4 + $0xc1] sm:$0xff]
      %v3099 = vld [vmem:[#allocation4 + $0xc9] sm:$0xff]
      %v3100 = vld [vmem:[#allocation4 + $0xd1] sm:$0xff]
      %v3101 = vld [vmem:[#allocation4 + $0xd9] sm:$0x1]
      %3115 = vrot.lane.b32.xlu0 %v3089, 64
      %v3116 = vpop.permute.xlu0 %3115
      %3117 = vrot.lane.b32.xlu0 %v3090, 64
      %v3118 = vpop.permute.xlu0 %3117
      %3119 = vrot.lane.b32.xlu0 %v3091, 64
      %v3120 = vpop.permute.xlu0 %3119
      %3121 = vrot.lane.b32.xlu0 %v3092, 64
      %v3122 = vpop.permute.xlu0 %3121
      %3123 = vrot.lane.b32.xlu0 %v3093, 64
      %v3124 = vpop.permute.xlu0 %3123
      %3125 = vrot.lane.b32.xlu0 %v3094, 64
      %v3126 = vpop.permute.xlu0 %3125
      %3127 = vrot.lane.b32.xlu0 %v3095, 64
      %v3128 = vpop.permute.xlu0 %3127
      %3129 = vrot.lane.b32.xlu0 %v3096, 64
      %v3130 = vpop.permute.xlu0 %3129
      %3131 = vrot.lane.b32.xlu0 %v3097, 64
      %v3132 = vpop.permute.xlu0 %3131
      %3133 = vrot.lane.b32.xlu0 %v3098, 64
      %v3134 = vpop.permute.xlu0 %3133
      %3135 = vrot.lane.b32.xlu0 %v3099, 64
      %v3136 = vpop.permute.xlu0 %3135
      %3137 = vrot.lane.b32.xlu0 %v3100, 64
      %v3138 = vpop.permute.xlu0 %3137
      %3139 = vrot.lane.b32.xlu0 %v3101, 64
      %v3140 = vpop.permute.xlu0 %3139
      %3154 = vst.msk [vmem:[#allocation5 + $0x8] sm:$0xff] %vm2890, %v3116
      %3155 = vst.msk [vmem:[#allocation5 + $0x28] sm:$0xff] %vm2890, %v3118
      %3156 = vst.msk [vmem:[#allocation5 + $0x48] sm:$0xff] %vm2890, %v3120
      %3157 = vst.msk [vmem:[#allocation5 + $0x68] sm:$0xff] %vm2890, %v3122
      %3158 = vst.msk [vmem:[#allocation5 + $0x88] sm:$0xff] %vm2890, %v3124
      %3159 = vst.msk [vmem:[#allocation5 + $0xa8] sm:$0xff] %vm2890, %v3126
      %3160 = vst.msk [vmem:[#allocation5 + $0xc8] sm:$0xff] %vm2890, %v3128
      %3161 = vst.msk [vmem:[#allocation5 + $0xe8] sm:$0xff] %vm2890, %v3130
      %3162 = vst.msk [vmem:[#allocation5 + $0x108] sm:$0xff] %vm2890, %v3132
      %3163 = vst.msk [vmem:[#allocation5 + $0x128] sm:$0xff] %vm2890, %v3134
      %3164 = vst.msk [vmem:[#allocation5 + $0x148] sm:$0xff] %vm2890, %v3136
      %3165 = vst.msk [vmem:[#allocation5 + $0x168] sm:$0xff] %vm2890, %v3138
      %3166 = vst.msk [vmem:[#allocation5 + $0x188] sm:$0x1] %vm2903, %v3140
      %v3167 = vld [vmem:[#allocation4 + $0x7a] sm:$0xff]
      %v3168 = vld [vmem:[#allocation4 + $0x82] sm:$0xff]
      %v3169 = vld [vmem:[#allocation4 + $0x8a] sm:$0xff]
      %v3170 = vld [vmem:[#allocation4 + $0x92] sm:$0xff]
      %v3171 = vld [vmem:[#allocation4 + $0x9a] sm:$0xff]
      %v3172 = vld [vmem:[#allocation4 + $0xa2] sm:$0xff]
      %v3173 = vld [vmem:[#allocation4 + $0xaa] sm:$0xff]
      %v3174 = vld [vmem:[#allocation4 + $0xb2] sm:$0xff]
      %v3175 = vld [vmem:[#allocation4 + $0xba] sm:$0xff]
      %v3176 = vld [vmem:[#allocation4 + $0xc2] sm:$0xff]
      %v3177 = vld [vmem:[#allocation4 + $0xca] sm:$0xff]
      %v3178 = vld [vmem:[#allocation4 + $0xd2] sm:$0xff]
      %v3179 = vld [vmem:[#allocation4 + $0xda] sm:$0x1]
      %3193 = vrot.lane.b32.xlu0 %v3167, 96
      %v3194 = vpop.permute.xlu0 %3193
      %3195 = vrot.lane.b32.xlu0 %v3168, 96
      %v3196 = vpop.permute.xlu0 %3195
      %3197 = vrot.lane.b32.xlu0 %v3169, 96
      %v3198 = vpop.permute.xlu0 %3197
      %3199 = vrot.lane.b32.xlu0 %v3170, 96
      %v3200 = vpop.permute.xlu0 %3199
      %3201 = vrot.lane.b32.xlu0 %v3171, 96
      %v3202 = vpop.permute.xlu0 %3201
      %3203 = vrot.lane.b32.xlu0 %v3172, 96
      %v3204 = vpop.permute.xlu0 %3203
      %3205 = vrot.lane.b32.xlu0 %v3173, 96
      %v3206 = vpop.permute.xlu0 %3205
      %3207 = vrot.lane.b32.xlu0 %v3174, 96
      %v3208 = vpop.permute.xlu0 %3207
      %3209 = vrot.lane.b32.xlu0 %v3175, 96
      %v3210 = vpop.permute.xlu0 %3209
      %3211 = vrot.lane.b32.xlu0 %v3176, 96
      %v3212 = vpop.permute.xlu0 %3211
      %3213 = vrot.lane.b32.xlu0 %v3177, 96
      %v3214 = vpop.permute.xlu0 %3213
      %3215 = vrot.lane.b32.xlu0 %v3178, 96
      %v3216 = vpop.permute.xlu0 %3215
      %3217 = vrot.lane.b32.xlu0 %v3179, 96
      %v3218 = vpop.permute.xlu0 %3217
      %3232 = vst.msk [vmem:[#allocation5 + $0x8] sm:$0xff] %vm2970, %v3194
      %3233 = vst.msk [vmem:[#allocation5 + $0x28] sm:$0xff] %vm2970, %v3196
      %3234 = vst.msk [vmem:[#allocation5 + $0x48] sm:$0xff] %vm2970, %v3198
      %3235 = vst.msk [vmem:[#allocation5 + $0x68] sm:$0xff] %vm2970, %v3200
      %3236 = vst.msk [vmem:[#allocation5 + $0x88] sm:$0xff] %vm2970, %v3202
      %3237 = vst.msk [vmem:[#allocation5 + $0xa8] sm:$0xff] %vm2970, %v3204
      %3238 = vst.msk [vmem:[#allocation5 + $0xc8] sm:$0xff] %vm2970, %v3206
      %3239 = vst.msk [vmem:[#allocation5 + $0xe8] sm:$0xff] %vm2970, %v3208
      %3240 = vst.msk [vmem:[#allocation5 + $0x108] sm:$0xff] %vm2970, %v3210
      %3241 = vst.msk [vmem:[#allocation5 + $0x128] sm:$0xff] %vm2970, %v3212
      %3242 = vst.msk [vmem:[#allocation5 + $0x148] sm:$0xff] %vm2970, %v3214
      %3243 = vst.msk [vmem:[#allocation5 + $0x168] sm:$0xff] %vm2970, %v3216
      %3244 = vst.msk [vmem:[#allocation5 + $0x188] sm:$0x1] %vm2983, %v3218
      %v3245 = vld [vmem:[#allocation4 + $0xdc] sm:$0xff]
      %v3246 = vld [vmem:[#allocation4 + $0xe4] sm:$0xff]
      %v3247 = vld [vmem:[#allocation4 + $0xec] sm:$0xff]
      %v3248 = vld [vmem:[#allocation4 + $0xf4] sm:$0xff]
      %v3249 = vld [vmem:[#allocation4 + $0xfc] sm:$0xff]
      %v3250 = vld [vmem:[#allocation4 + $0x104] sm:$0xff]
      %v3251 = vld [vmem:[#allocation4 + $0x10c] sm:$0xff]
      %v3252 = vld [vmem:[#allocation4 + $0x114] sm:$0xff]
      %v3253 = vld [vmem:[#allocation4 + $0x11c] sm:$0xff]
      %v3254 = vld [vmem:[#allocation4 + $0x124] sm:$0xff]
      %v3255 = vld [vmem:[#allocation4 + $0x12c] sm:$0xff]
      %v3256 = vld [vmem:[#allocation4 + $0x134] sm:$0xff]
      %v3257 = vld [vmem:[#allocation4 + $0x13c] sm:$0x1]
      %3258 = vst.msk [vmem:[#allocation5 + $0x10] sm:$0xff] %vm2662, %v3245
      %3259 = vst.msk [vmem:[#allocation5 + $0x30] sm:$0xff] %vm2662, %v3246
      %3260 = vst.msk [vmem:[#allocation5 + $0x50] sm:$0xff] %vm2662, %v3247
      %3261 = vst.msk [vmem:[#allocation5 + $0x70] sm:$0xff] %vm2662, %v3248
      %3262 = vst.msk [vmem:[#allocation5 + $0x90] sm:$0xff] %vm2662, %v3249
      %3263 = vst.msk [vmem:[#allocation5 + $0xb0] sm:$0xff] %vm2662, %v3250
      %3264 = vst.msk [vmem:[#allocation5 + $0xd0] sm:$0xff] %vm2662, %v3251
      %3265 = vst.msk [vmem:[#allocation5 + $0xf0] sm:$0xff] %vm2662, %v3252
      %3266 = vst.msk [vmem:[#allocation5 + $0x110] sm:$0xff] %vm2662, %v3253
      %3267 = vst.msk [vmem:[#allocation5 + $0x130] sm:$0xff] %vm2662, %v3254
      %3268 = vst.msk [vmem:[#allocation5 + $0x150] sm:$0xff] %vm2662, %v3255
      %3269 = vst.msk [vmem:[#allocation5 + $0x170] sm:$0xff] %vm2662, %v3256
      %3270 = vst.msk [vmem:[#allocation5 + $0x190] sm:$0x1] %vm2743, %v3257
      %v3271 = vld [vmem:[#allocation4 + $0xdd] sm:$0xff]
      %v3272 = vld [vmem:[#allocation4 + $0xe5] sm:$0xff]
      %v3273 = vld [vmem:[#allocation4 + $0xed] sm:$0xff]
      %v3274 = vld [vmem:[#allocation4 + $0xf5] sm:$0xff]
      %v3275 = vld [vmem:[#allocation4 + $0xfd] sm:$0xff]
      %v3276 = vld [vmem:[#allocation4 + $0x105] sm:$0xff]
      %v3277 = vld [vmem:[#allocation4 + $0x10d] sm:$0xff]
      %v3278 = vld [vmem:[#allocation4 + $0x115] sm:$0xff]
      %v3279 = vld [vmem:[#allocation4 + $0x11d] sm:$0xff]
      %v3280 = vld [vmem:[#allocation4 + $0x125] sm:$0xff]
      %v3281 = vld [vmem:[#allocation4 + $0x12d] sm:$0xff]
      %v3282 = vld [vmem:[#allocation4 + $0x135] sm:$0xff]
      %v3283 = vld [vmem:[#allocation4 + $0x13d] sm:$0x1]
      %3297 = vrot.lane.b32.xlu0 %v3271, 32
      %v3298 = vpop.permute.xlu0 %3297
      %3299 = vrot.lane.b32.xlu0 %v3272, 32
      %v3300 = vpop.permute.xlu0 %3299
      %3301 = vrot.lane.b32.xlu0 %v3273, 32
      %v3302 = vpop.permute.xlu0 %3301
      %3303 = vrot.lane.b32.xlu0 %v3274, 32
      %v3304 = vpop.permute.xlu0 %3303
      %3305 = vrot.lane.b32.xlu0 %v3275, 32
      %v3306 = vpop.permute.xlu0 %3305
      %3307 = vrot.lane.b32.xlu0 %v3276, 32
      %v3308 = vpop.permute.xlu0 %3307
      %3309 = vrot.lane.b32.xlu0 %v3277, 32
      %v3310 = vpop.permute.xlu0 %3309
      %3311 = vrot.lane.b32.xlu0 %v3278, 32
      %v3312 = vpop.permute.xlu0 %3311
      %3313 = vrot.lane.b32.xlu0 %v3279, 32
      %v3314 = vpop.permute.xlu0 %3313
      %3315 = vrot.lane.b32.xlu0 %v3280, 32
      %v3316 = vpop.permute.xlu0 %3315
      %3317 = vrot.lane.b32.xlu0 %v3281, 32
      %v3318 = vpop.permute.xlu0 %3317
      %3319 = vrot.lane.b32.xlu0 %v3282, 32
      %v3320 = vpop.permute.xlu0 %3319
      %3321 = vrot.lane.b32.xlu0 %v3283, 32
      %v3322 = vpop.permute.xlu0 %3321
      %3336 = vst.msk [vmem:[#allocation5 + $0x10] sm:$0xff] %vm2810, %v3298
      %3337 = vst.msk [vmem:[#allocation5 + $0x30] sm:$0xff] %vm2810, %v3300
      %3338 = vst.msk [vmem:[#allocation5 + $0x50] sm:$0xff] %vm2810, %v3302
      %3339 = vst.msk [vmem:[#allocation5 + $0x70] sm:$0xff] %vm2810, %v3304
      %3340 = vst.msk [vmem:[#allocation5 + $0x90] sm:$0xff] %vm2810, %v3306
      %3341 = vst.msk [vmem:[#allocation5 + $0xb0] sm:$0xff] %vm2810, %v3308
      %3342 = vst.msk [vmem:[#allocation5 + $0xd0] sm:$0xff] %vm2810, %v3310
      %3343 = vst.msk [vmem:[#allocation5 + $0xf0] sm:$0xff] %vm2810, %v3312
      %3344 = vst.msk [vmem:[#allocation5 + $0x110] sm:$0xff] %vm2810, %v3314
      %3345 = vst.msk [vmem:[#allocation5 + $0x130] sm:$0xff] %vm2810, %v3316
      %3346 = vst.msk [vmem:[#allocation5 + $0x150] sm:$0xff] %vm2810, %v3318
      %3347 = vst.msk [vmem:[#allocation5 + $0x170] sm:$0xff] %vm2810, %v3320
      %3348 = vst.msk [vmem:[#allocation5 + $0x190] sm:$0x1] %vm2823, %v3322
      %v3349 = vld [vmem:[#allocation4 + $0xe7] sm:$0xff]
      %v3350 = vld [vmem:[#allocation4 + $0xef] sm:$0xff]
      %v3351 = vld [vmem:[#allocation4 + $0xf7] sm:$0xff]
      %v3352 = vld [vmem:[#allocation4 + $0xff] sm:$0xff]
      %v3353 = vld [vmem:[#allocation4 + $0x107] sm:$0xff]
      %v3354 = vld [vmem:[#allocation4 + $0x10f] sm:$0xff]
      %v3355 = vld [vmem:[#allocation4 + $0x117] sm:$0xff]
      %v3356 = vld [vmem:[#allocation4 + $0x11f] sm:$0xff]
      %v3357 = vld [vmem:[#allocation4 + $0x127] sm:$0xff]
      %v3358 = vld [vmem:[#allocation4 + $0x12f] sm:$0xff]
      %v3359 = vld [vmem:[#allocation4 + $0x137] sm:$0xff]
      %v3360 = vld [vmem:[#allocation4 + $0x13f] sm:$0xff]
      %v3361 = vld [vmem:[#allocation4 + $0x147] sm:$0x1]
      %3375 = vrot.lane.b32.xlu0 %v3349, 64
      %v3376 = vpop.permute.xlu0 %3375
      %3377 = vrot.lane.b32.xlu0 %v3350, 64
      %v3378 = vpop.permute.xlu0 %3377
      %3379 = vrot.lane.b32.xlu0 %v3351, 64
      %v3380 = vpop.permute.xlu0 %3379
      %3381 = vrot.lane.b32.xlu0 %v3352, 64
      %v3382 = vpop.permute.xlu0 %3381
      %3383 = vrot.lane.b32.xlu0 %v3353, 64
      %v3384 = vpop.permute.xlu0 %3383
      %3385 = vrot.lane.b32.xlu0 %v3354, 64
      %v3386 = vpop.permute.xlu0 %3385
      %3387 = vrot.lane.b32.xlu0 %v3355, 64
      %v3388 = vpop.permute.xlu0 %3387
      %3389 = vrot.lane.b32.xlu0 %v3356, 64
      %v3390 = vpop.permute.xlu0 %3389
      %3391 = vrot.lane.b32.xlu0 %v3357, 64
      %v3392 = vpop.permute.xlu0 %3391
      %3393 = vrot.lane.b32.xlu0 %v3358, 64
      %v3394 = vpop.permute.xlu0 %3393
      %3395 = vrot.lane.b32.xlu0 %v3359, 64
      %v3396 = vpop.permute.xlu0 %3395
      %3397 = vrot.lane.b32.xlu0 %v3360, 64
      %v3398 = vpop.permute.xlu0 %3397
      %3399 = vrot.lane.b32.xlu0 %v3361, 64
      %v3400 = vpop.permute.xlu0 %3399
      %3414 = vst.msk [vmem:[#allocation5 + $0x10] sm:$0xff] %vm2890, %v3376
      %3415 = vst.msk [vmem:[#allocation5 + $0x30] sm:$0xff] %vm2890, %v3378
      %3416 = vst.msk [vmem:[#allocation5 + $0x50] sm:$0xff] %vm2890, %v3380
      %3417 = vst.msk [vmem:[#allocation5 + $0x70] sm:$0xff] %vm2890, %v3382
      %3418 = vst.msk [vmem:[#allocation5 + $0x90] sm:$0xff] %vm2890, %v3384
      %3419 = vst.msk [vmem:[#allocation5 + $0xb0] sm:$0xff] %vm2890, %v3386
      %3420 = vst.msk [vmem:[#allocation5 + $0xd0] sm:$0xff] %vm2890, %v3388
      %3421 = vst.msk [vmem:[#allocation5 + $0xf0] sm:$0xff] %vm2890, %v3390
      %3422 = vst.msk [vmem:[#allocation5 + $0x110] sm:$0xff] %vm2890, %v3392
      %3423 = vst.msk [vmem:[#allocation5 + $0x130] sm:$0xff] %vm2890, %v3394
      %3424 = vst.msk [vmem:[#allocation5 + $0x150] sm:$0xff] %vm2890, %v3396
      %3425 = vst.msk [vmem:[#allocation5 + $0x170] sm:$0xff] %vm2890, %v3398
      %3426 = vst.msk [vmem:[#allocation5 + $0x190] sm:$0x1] %vm2903, %v3400
      %v3427 = vld [vmem:[#allocation4 + $0xe8] sm:$0xff]
      %v3428 = vld [vmem:[#allocation4 + $0xf0] sm:$0xff]
      %v3429 = vld [vmem:[#allocation4 + $0xf8] sm:$0xff]
      %v3430 = vld [vmem:[#allocation4 + $0x100] sm:$0xff]
      %v3431 = vld [vmem:[#allocation4 + $0x108] sm:$0xff]
      %v3432 = vld [vmem:[#allocation4 + $0x110] sm:$0xff]
      %v3433 = vld [vmem:[#allocation4 + $0x118] sm:$0xff]
      %v3434 = vld [vmem:[#allocation4 + $0x120] sm:$0xff]
      %v3435 = vld [vmem:[#allocation4 + $0x128] sm:$0xff]
      %v3436 = vld [vmem:[#allocation4 + $0x130] sm:$0xff]
      %v3437 = vld [vmem:[#allocation4 + $0x138] sm:$0xff]
      %v3438 = vld [vmem:[#allocation4 + $0x140] sm:$0xff]
      %v3439 = vld [vmem:[#allocation4 + $0x148] sm:$0x1]
      %3453 = vrot.lane.b32.xlu0 %v3427, 96
      %v3454 = vpop.permute.xlu0 %3453
      %3455 = vrot.lane.b32.xlu0 %v3428, 96
      %v3456 = vpop.permute.xlu0 %3455
      %3457 = vrot.lane.b32.xlu0 %v3429, 96
      %v3458 = vpop.permute.xlu0 %3457
      %3459 = vrot.lane.b32.xlu0 %v3430, 96
      %v3460 = vpop.permute.xlu0 %3459
      %3461 = vrot.lane.b32.xlu0 %v3431, 96
      %v3462 = vpop.permute.xlu0 %3461
      %3463 = vrot.lane.b32.xlu0 %v3432, 96
      %v3464 = vpop.permute.xlu0 %3463
      %3465 = vrot.lane.b32.xlu0 %v3433, 96
      %v3466 = vpop.permute.xlu0 %3465
      %3467 = vrot.lane.b32.xlu0 %v3434, 96
      %v3468 = vpop.permute.xlu0 %3467
      %3469 = vrot.lane.b32.xlu0 %v3435, 96
      %v3470 = vpop.permute.xlu0 %3469
      %3471 = vrot.lane.b32.xlu0 %v3436, 96
      %v3472 = vpop.permute.xlu0 %3471
      %3473 = vrot.lane.b32.xlu0 %v3437, 96
      %v3474 = vpop.permute.xlu0 %3473
      %3475 = vrot.lane.b32.xlu0 %v3438, 96
      %v3476 = vpop.permute.xlu0 %3475
      %3477 = vrot.lane.b32.xlu0 %v3439, 96
      %v3478 = vpop.permute.xlu0 %3477
      %3492 = vst.msk [vmem:[#allocation5 + $0x10] sm:$0xff] %vm2970, %v3454
      %3493 = vst.msk [vmem:[#allocation5 + $0x30] sm:$0xff] %vm2970, %v3456
      %3494 = vst.msk [vmem:[#allocation5 + $0x50] sm:$0xff] %vm2970, %v3458
      %3495 = vst.msk [vmem:[#allocation5 + $0x70] sm:$0xff] %vm2970, %v3460
      %3496 = vst.msk [vmem:[#allocation5 + $0x90] sm:$0xff] %vm2970, %v3462
      %3497 = vst.msk [vmem:[#allocation5 + $0xb0] sm:$0xff] %vm2970, %v3464
      %3498 = vst.msk [vmem:[#allocation5 + $0xd0] sm:$0xff] %vm2970, %v3466
      %3499 = vst.msk [vmem:[#allocation5 + $0xf0] sm:$0xff] %vm2970, %v3468
      %3500 = vst.msk [vmem:[#allocation5 + $0x110] sm:$0xff] %vm2970, %v3470
      %3501 = vst.msk [vmem:[#allocation5 + $0x130] sm:$0xff] %vm2970, %v3472
      %3502 = vst.msk [vmem:[#allocation5 + $0x150] sm:$0xff] %vm2970, %v3474
      %3503 = vst.msk [vmem:[#allocation5 + $0x170] sm:$0xff] %vm2970, %v3476
      %3504 = vst.msk [vmem:[#allocation5 + $0x190] sm:$0x1] %vm2983, %v3478
      %v3505 = vld [vmem:[#allocation4 + $0x14a] sm:$0xff]
      %v3506 = vld [vmem:[#allocation4 + $0x152] sm:$0xff]
      %v3507 = vld [vmem:[#allocation4 + $0x15a] sm:$0xff]
      %v3508 = vld [vmem:[#allocation4 + $0x162] sm:$0xff]
      %v3509 = vld [vmem:[#allocation4 + $0x16a] sm:$0xff]
      %v3510 = vld [vmem:[#allocation4 + $0x172] sm:$0xff]
      %v3511 = vld [vmem:[#allocation4 + $0x17a] sm:$0xff]
      %v3512 = vld [vmem:[#allocation4 + $0x182] sm:$0xff]
      %v3513 = vld [vmem:[#allocation4 + $0x18a] sm:$0xff]
      %v3514 = vld [vmem:[#allocation4 + $0x192] sm:$0xff]
      %v3515 = vld [vmem:[#allocation4 + $0x19a] sm:$0xff]
      %v3516 = vld [vmem:[#allocation4 + $0x1a2] sm:$0xff]
      %v3517 = vld [vmem:[#allocation4 + $0x1aa] sm:$0x1]
      %3518 = vst.msk [vmem:[#allocation5 + $0x18] sm:$0xff] %vm2662, %v3505
      %3519 = vst.msk [vmem:[#allocation5 + $0x38] sm:$0xff] %vm2662, %v3506
      %3520 = vst.msk [vmem:[#allocation5 + $0x58] sm:$0xff] %vm2662, %v3507
      %3521 = vst.msk [vmem:[#allocation5 + $0x78] sm:$0xff] %vm2662, %v3508
      %3522 = vst.msk [vmem:[#allocation5 + $0x98] sm:$0xff] %vm2662, %v3509
      %3523 = vst.msk [vmem:[#allocation5 + $0xb8] sm:$0xff] %vm2662, %v3510
      %3524 = vst.msk [vmem:[#allocation5 + $0xd8] sm:$0xff] %vm2662, %v3511
      %3525 = vst.msk [vmem:[#allocation5 + $0xf8] sm:$0xff] %vm2662, %v3512
      %3526 = vst.msk [vmem:[#allocation5 + $0x118] sm:$0xff] %vm2662, %v3513
      %3527 = vst.msk [vmem:[#allocation5 + $0x138] sm:$0xff] %vm2662, %v3514
      %3528 = vst.msk [vmem:[#allocation5 + $0x158] sm:$0xff] %vm2662, %v3515
      %3529 = vst.msk [vmem:[#allocation5 + $0x178] sm:$0xff] %vm2662, %v3516
      %3530 = vst.msk [vmem:[#allocation5 + $0x198] sm:$0x1] %vm2743, %v3517
      %v3531 = vld [vmem:[#allocation4 + $0x14b] sm:$0xff]
      %v3532 = vld [vmem:[#allocation4 + $0x153] sm:$0xff]
      %v3533 = vld [vmem:[#allocation4 + $0x15b] sm:$0xff]
      %v3534 = vld [vmem:[#allocation4 + $0x163] sm:$0xff]
      %v3535 = vld [vmem:[#allocation4 + $0x16b] sm:$0xff]
      %v3536 = vld [vmem:[#allocation4 + $0x173] sm:$0xff]
      %v3537 = vld [vmem:[#allocation4 + $0x17b] sm:$0xff]
      %v3538 = vld [vmem:[#allocation4 + $0x183] sm:$0xff]
      %v3539 = vld [vmem:[#allocation4 + $0x18b] sm:$0xff]
      %v3540 = vld [vmem:[#allocation4 + $0x193] sm:$0xff]
      %v3541 = vld [vmem:[#allocation4 + $0x19b] sm:$0xff]
      %v3542 = vld [vmem:[#allocation4 + $0x1a3] sm:$0xff]
      %v3543 = vld [vmem:[#allocation4 + $0x1ab] sm:$0x1]
      %3557 = vrot.lane.b32.xlu0 %v3531, 32
      %v3558 = vpop.permute.xlu0 %3557
      %3559 = vrot.lane.b32.xlu0 %v3532, 32
      %v3560 = vpop.permute.xlu0 %3559
      %3561 = vrot.lane.b32.xlu0 %v3533, 32
      %v3562 = vpop.permute.xlu0 %3561
      %3563 = vrot.lane.b32.xlu0 %v3534, 32
      %v3564 = vpop.permute.xlu0 %3563
      %3565 = vrot.lane.b32.xlu0 %v3535, 32
      %v3566 = vpop.permute.xlu0 %3565
      %3567 = vrot.lane.b32.xlu0 %v3536, 32
      %v3568 = vpop.permute.xlu0 %3567
      %3569 = vrot.lane.b32.xlu0 %v3537, 32
      %v3570 = vpop.permute.xlu0 %3569
      %3571 = vrot.lane.b32.xlu0 %v3538, 32
      %v3572 = vpop.permute.xlu0 %3571
      %3573 = vrot.lane.b32.xlu0 %v3539, 32
      %v3574 = vpop.permute.xlu0 %3573
      %3575 = vrot.lane.b32.xlu0 %v3540, 32
      %v3576 = vpop.permute.xlu0 %3575
      %3577 = vrot.lane.b32.xlu0 %v3541, 32
      %v3578 = vpop.permute.xlu0 %3577
      %3579 = vrot.lane.b32.xlu0 %v3542, 32
      %v3580 = vpop.permute.xlu0 %3579
      %3581 = vrot.lane.b32.xlu0 %v3543, 32
      %v3582 = vpop.permute.xlu0 %3581
      %3596 = vst.msk [vmem:[#allocation5 + $0x18] sm:$0xff] %vm2810, %v3558
      %3597 = vst.msk [vmem:[#allocation5 + $0x38] sm:$0xff] %vm2810, %v3560
      %3598 = vst.msk [vmem:[#allocation5 + $0x58] sm:$0xff] %vm2810, %v3562
      %3599 = vst.msk [vmem:[#allocation5 + $0x78] sm:$0xff] %vm2810, %v3564
      %3600 = vst.msk [vmem:[#allocation5 + $0x98] sm:$0xff] %vm2810, %v3566
      %3601 = vst.msk [vmem:[#allocation5 + $0xb8] sm:$0xff] %vm2810, %v3568
      %3602 = vst.msk [vmem:[#allocation5 + $0xd8] sm:$0xff] %vm2810, %v3570
      %3603 = vst.msk [vmem:[#allocation5 + $0xf8] sm:$0xff] %vm2810, %v3572
      %3604 = vst.msk [vmem:[#allocation5 + $0x118] sm:$0xff] %vm2810, %v3574
      %3605 = vst.msk [vmem:[#allocation5 + $0x138] sm:$0xff] %vm2810, %v3576
      %3606 = vst.msk [vmem:[#allocation5 + $0x158] sm:$0xff] %vm2810, %v3578
      %3607 = vst.msk [vmem:[#allocation5 + $0x178] sm:$0xff] %vm2810, %v3580
      %3608 = vst.msk [vmem:[#allocation5 + $0x198] sm:$0x1] %vm2823, %v3582
      %v3609 = vld [vmem:[#allocation4 + $0x155] sm:$0xff]
      %v3610 = vld [vmem:[#allocation4 + $0x15d] sm:$0xff]
      %v3611 = vld [vmem:[#allocation4 + $0x165] sm:$0xff]
      %v3612 = vld [vmem:[#allocation4 + $0x16d] sm:$0xff]
      %v3613 = vld [vmem:[#allocation4 + $0x175] sm:$0xff]
      %v3614 = vld [vmem:[#allocation4 + $0x17d] sm:$0xff]
      %v3615 = vld [vmem:[#allocation4 + $0x185] sm:$0xff]
      %v3616 = vld [vmem:[#allocation4 + $0x18d] sm:$0xff]
      %v3617 = vld [vmem:[#allocation4 + $0x195] sm:$0xff]
      %v3618 = vld [vmem:[#allocation4 + $0x19d] sm:$0xff]
      %v3619 = vld [vmem:[#allocation4 + $0x1a5] sm:$0xff]
      %v3620 = vld [vmem:[#allocation4 + $0x1ad] sm:$0xff]
      %v3621 = vld [vmem:[#allocation4 + $0x1b5] sm:$0x1]
      %3635 = vrot.lane.b32.xlu0 %v3609, 64
      %v3636 = vpop.permute.xlu0 %3635
      %3637 = vrot.lane.b32.xlu0 %v3610, 64
      %v3638 = vpop.permute.xlu0 %3637
      %3639 = vrot.lane.b32.xlu0 %v3611, 64
      %v3640 = vpop.permute.xlu0 %3639
      %3641 = vrot.lane.b32.xlu0 %v3612, 64
      %v3642 = vpop.permute.xlu0 %3641
      %3643 = vrot.lane.b32.xlu0 %v3613, 64
      %v3644 = vpop.permute.xlu0 %3643
      %3645 = vrot.lane.b32.xlu0 %v3614, 64
      %v3646 = vpop.permute.xlu0 %3645
      %3647 = vrot.lane.b32.xlu0 %v3615, 64
      %v3648 = vpop.permute.xlu0 %3647
      %3649 = vrot.lane.b32.xlu0 %v3616, 64
      %v3650 = vpop.permute.xlu0 %3649
      %3651 = vrot.lane.b32.xlu0 %v3617, 64
      %v3652 = vpop.permute.xlu0 %3651
      %3653 = vrot.lane.b32.xlu0 %v3618, 64
      %v3654 = vpop.permute.xlu0 %3653
      %3655 = vrot.lane.b32.xlu0 %v3619, 64
      %v3656 = vpop.permute.xlu0 %3655
      %3657 = vrot.lane.b32.xlu0 %v3620, 64
      %v3658 = vpop.permute.xlu0 %3657
      %3659 = vrot.lane.b32.xlu0 %v3621, 64
      %v3660 = vpop.permute.xlu0 %3659
      %3674 = vst.msk [vmem:[#allocation5 + $0x18] sm:$0xff] %vm2890, %v3636
      %3675 = vst.msk [vmem:[#allocation5 + $0x38] sm:$0xff] %vm2890, %v3638
      %3676 = vst.msk [vmem:[#allocation5 + $0x58] sm:$0xff] %vm2890, %v3640
      %3677 = vst.msk [vmem:[#allocation5 + $0x78] sm:$0xff] %vm2890, %v3642
      %3678 = vst.msk [vmem:[#allocation5 + $0x98] sm:$0xff] %vm2890, %v3644
      %3679 = vst.msk [vmem:[#allocation5 + $0xb8] sm:$0xff] %vm2890, %v3646
      %3680 = vst.msk [vmem:[#allocation5 + $0xd8] sm:$0xff] %vm2890, %v3648
      %3681 = vst.msk [vmem:[#allocation5 + $0xf8] sm:$0xff] %vm2890, %v3650
      %3682 = vst.msk [vmem:[#allocation5 + $0x118] sm:$0xff] %vm2890, %v3652
      %3683 = vst.msk [vmem:[#allocation5 + $0x138] sm:$0xff] %vm2890, %v3654
      %3684 = vst.msk [vmem:[#allocation5 + $0x158] sm:$0xff] %vm2890, %v3656
      %3685 = vst.msk [vmem:[#allocation5 + $0x178] sm:$0xff] %vm2890, %v3658
      %3686 = vst.msk [vmem:[#allocation5 + $0x198] sm:$0x1] %vm2903, %v3660
      %v3687 = vld [vmem:[#allocation4 + $0x156] sm:$0xff]
      %v3688 = vld [vmem:[#allocation4 + $0x15e] sm:$0xff]
      %v3689 = vld [vmem:[#allocation4 + $0x166] sm:$0xff]
      %v3690 = vld [vmem:[#allocation4 + $0x16e] sm:$0xff]
      %v3691 = vld [vmem:[#allocation4 + $0x176] sm:$0xff]
      %v3692 = vld [vmem:[#allocation4 + $0x17e] sm:$0xff]
      %v3693 = vld [vmem:[#allocation4 + $0x186] sm:$0xff]
      %v3694 = vld [vmem:[#allocation4 + $0x18e] sm:$0xff]
      %v3695 = vld [vmem:[#allocation4 + $0x196] sm:$0xff]
      %v3696 = vld [vmem:[#allocation4 + $0x19e] sm:$0xff]
      %v3697 = vld [vmem:[#allocation4 + $0x1a6] sm:$0xff]
      %v3698 = vld [vmem:[#allocation4 + $0x1ae] sm:$0xff]
      %v3699 = vld [vmem:[#allocation4 + $0x1b6] sm:$0x1]
      %3713 = vrot.lane.b32.xlu0 %v3687, 96
      %v3714 = vpop.permute.xlu0 %3713
      %3715 = vrot.lane.b32.xlu0 %v3688, 96
      %v3716 = vpop.permute.xlu0 %3715
      %3717 = vrot.lane.b32.xlu0 %v3689, 96
      %v3718 = vpop.permute.xlu0 %3717
      %3719 = vrot.lane.b32.xlu0 %v3690, 96
      %v3720 = vpop.permute.xlu0 %3719
      %3721 = vrot.lane.b32.xlu0 %v3691, 96
      %v3722 = vpop.permute.xlu0 %3721
      %3723 = vrot.lane.b32.xlu0 %v3692, 96
      %v3724 = vpop.permute.xlu0 %3723
      %3725 = vrot.lane.b32.xlu0 %v3693, 96
      %v3726 = vpop.permute.xlu0 %3725
      %3727 = vrot.lane.b32.xlu0 %v3694, 96
      %v3728 = vpop.permute.xlu0 %3727
      %3729 = vrot.lane.b32.xlu0 %v3695, 96
      %v3730 = vpop.permute.xlu0 %3729
      %3731 = vrot.lane.b32.xlu0 %v3696, 96
      %v3732 = vpop.permute.xlu0 %3731
      %3733 = vrot.lane.b32.xlu0 %v3697, 96
      %v3734 = vpop.permute.xlu0 %3733
      %3735 = vrot.lane.b32.xlu0 %v3698, 96
      %v3736 = vpop.permute.xlu0 %3735
      %3737 = vrot.lane.b32.xlu0 %v3699, 96
      %v3738 = vpop.permute.xlu0 %3737
      %3752 = vst.msk [vmem:[#allocation5 + $0x18] sm:$0xff] %vm2970, %v3714
      %3753 = vst.msk [vmem:[#allocation5 + $0x38] sm:$0xff] %vm2970, %v3716
      %3754 = vst.msk [vmem:[#allocation5 + $0x58] sm:$0xff] %vm2970, %v3718
      %3755 = vst.msk [vmem:[#allocation5 + $0x78] sm:$0xff] %vm2970, %v3720
      %3756 = vst.msk [vmem:[#allocation5 + $0x98] sm:$0xff] %vm2970, %v3722
      %3757 = vst.msk [vmem:[#allocation5 + $0xb8] sm:$0xff] %vm2970, %v3724
      %3758 = vst.msk [vmem:[#allocation5 + $0xd8] sm:$0xff] %vm2970, %v3726
      %3759 = vst.msk [vmem:[#allocation5 + $0xf8] sm:$0xff] %vm2970, %v3728
      %3760 = vst.msk [vmem:[#allocation5 + $0x118] sm:$0xff] %vm2970, %v3730
      %3761 = vst.msk [vmem:[#allocation5 + $0x138] sm:$0xff] %vm2970, %v3732
      %3762 = vst.msk [vmem:[#allocation5 + $0x158] sm:$0xff] %vm2970, %v3734
      %3763 = vst.msk [vmem:[#allocation5 + $0x178] sm:$0xff] %vm2970, %v3736
      %3764 = vst.msk [vmem:[#allocation5 + $0x198] sm:$0x1] %vm2983, %v3738
      %v3765 = vld [vmem:[#allocation5] sm:$0xff]
      %v3766 = vld [vmem:[#allocation5 + $0x8] sm:$0xff]
      %v3767 = vld [vmem:[#allocation5 + $0x10] sm:$0xff]
      %v3768 = vld [vmem:[#allocation5 + $0x18] sm:$0xff]
      %v3769 = vld [vmem:[#allocation5 + $0x20] sm:$0xff]
      %v3770 = vld [vmem:[#allocation5 + $0x28] sm:$0xff]
      %v3771 = vld [vmem:[#allocation5 + $0x30] sm:$0xff]
      %v3772 = vld [vmem:[#allocation5 + $0x38] sm:$0xff]
      %v3773 = vld [vmem:[#allocation5 + $0x40] sm:$0xff]
      %v3774 = vld [vmem:[#allocation5 + $0x48] sm:$0xff]
      %v3775 = vld [vmem:[#allocation5 + $0x50] sm:$0xff]
      %v3776 = vld [vmem:[#allocation5 + $0x58] sm:$0xff]
      %v3777 = vld [vmem:[#allocation5 + $0x60] sm:$0xff]
      %v3778 = vld [vmem:[#allocation5 + $0x68] sm:$0xff]
      %v3779 = vld [vmem:[#allocation5 + $0x70] sm:$0xff]
      %v3780 = vld [vmem:[#allocation5 + $0x78] sm:$0xff]
      %v3781 = vld [vmem:[#allocation5 + $0x80] sm:$0xff]
      %v3782 = vld [vmem:[#allocation5 + $0x88] sm:$0xff]
      %v3783 = vld [vmem:[#allocation5 + $0x90] sm:$0xff]
      %v3784 = vld [vmem:[#allocation5 + $0x98] sm:$0xff]
      %v3785 = vld [vmem:[#allocation5 + $0xa0] sm:$0xff]
      %v3786 = vld [vmem:[#allocation5 + $0xa8] sm:$0xff]
      %v3787 = vld [vmem:[#allocation5 + $0xb0] sm:$0xff]
      %v3788 = vld [vmem:[#allocation5 + $0xb8] sm:$0xff]
      %v3789 = vld [vmem:[#allocation5 + $0xc0] sm:$0xff]
      %v3790 = vld [vmem:[#allocation5 + $0xc8] sm:$0xff]
      %v3791 = vld [vmem:[#allocation5 + $0xd0] sm:$0xff]
      %v3792 = vld [vmem:[#allocation5 + $0xd8] sm:$0xff]
      %v3793 = vld [vmem:[#allocation5 + $0xe0] sm:$0xff]
      %v3794 = vld [vmem:[#allocation5 + $0xe8] sm:$0xff]
      %v3795 = vld [vmem:[#allocation5 + $0xf0] sm:$0xff]
      %v3796 = vld [vmem:[#allocation5 + $0xf8] sm:$0xff]
      %v3797 = vld [vmem:[#allocation5 + $0x100] sm:$0xff]
      %v3798 = vld [vmem:[#allocation5 + $0x108] sm:$0xff]
      %v3799 = vld [vmem:[#allocation5 + $0x110] sm:$0xff]
      %v3800 = vld [vmem:[#allocation5 + $0x118] sm:$0xff]
      %v3801 = vld [vmem:[#allocation5 + $0x120] sm:$0xff]
      %v3802 = vld [vmem:[#allocation5 + $0x128] sm:$0xff]
      %v3803 = vld [vmem:[#allocation5 + $0x130] sm:$0xff]
      %v3804 = vld [vmem:[#allocation5 + $0x138] sm:$0xff]
      %v3805 = vld [vmem:[#allocation5 + $0x140] sm:$0xff]
      %v3806 = vld [vmem:[#allocation5 + $0x148] sm:$0xff]
      %v3807 = vld [vmem:[#allocation5 + $0x150] sm:$0xff]
      %v3808 = vld [vmem:[#allocation5 + $0x158] sm:$0xff]
      %v3809 = vld [vmem:[#allocation5 + $0x160] sm:$0xff]
      %v3810 = vld [vmem:[#allocation5 + $0x168] sm:$0xff]
      %v3811 = vld [vmem:[#allocation5 + $0x170] sm:$0xff]
      %v3812 = vld [vmem:[#allocation5 + $0x178] sm:$0xff]
      %v3813 = vld [vmem:[#allocation5 + $0x180] sm:$0x1]
      %v3814 = vld [vmem:[#allocation5 + $0x188] sm:$0x1]
      %v3815 = vld [vmem:[#allocation5 + $0x190] sm:$0x1]
      %v3816 = vld [vmem:[#allocation5 + $0x198] sm:$0x1]
      %v3817 = vpack.c.bf16 %v3769, %v3765
      %v3818 = vpack.c.bf16 %v3770, %v3766
      %v3819 = vpack.c.bf16 %v3771, %v3767
      %v3820 = vpack.c.bf16 %v3772, %v3768
      %v3821 = vpack.c.bf16 %v3777, %v3773
      %v3822 = vpack.c.bf16 %v3778, %v3774
      %v3823 = vpack.c.bf16 %v3779, %v3775
      %v3824 = vpack.c.bf16 %v3780, %v3776
      %v3825 = vpack.c.bf16 %v3785, %v3781
      %v3826 = vpack.c.bf16 %v3786, %v3782
      %v3827 = vpack.c.bf16 %v3787, %v3783
      %v3828 = vpack.c.bf16 %v3788, %v3784
      %v3829 = vpack.c.bf16 %v3793, %v3789
      %v3830 = vpack.c.bf16 %v3794, %v3790
      %v3831 = vpack.c.bf16 %v3795, %v3791
      %v3832 = vpack.c.bf16 %v3796, %v3792
      %v3833 = vpack.c.bf16 %v3801, %v3797
      %v3834 = vpack.c.bf16 %v3802, %v3798
      %v3835 = vpack.c.bf16 %v3803, %v3799
      %v3836 = vpack.c.bf16 %v3804, %v3800
      %v3837 = vpack.c.bf16 %v3809, %v3805
      %v3838 = vpack.c.bf16 %v3810, %v3806
      %v3839 = vpack.c.bf16 %v3811, %v3807
      %v3840 = vpack.c.bf16 %v3812, %v3808
      %v3841 = vpack.c.bf16 %v3813, %v3813
      %v3842 = vpack.c.bf16 %v3814, %v3814
      %v3843 = vpack.c.bf16 %v3815, %v3815
      %v3844 = vpack.c.bf16 %v3816, %v3816
      %v3845 = vld [vmem:[%s3] sm:$0xf]
      %v3846 = vld [vmem:[%s3 + $0x4] sm:$0xf]
      %v3847 = vld [vmem:[%s3 + $0x8] sm:$0xf]
      %v3848 = vld [vmem:[%s3 + $0xc] sm:$0xf]
      %v3849 = vld [vmem:[%s3 + $0x10] sm:$0xf]
      %v3850 = vld [vmem:[%s3 + $0x14] sm:$0xf]
      %v3851 = vld [vmem:[%s3 + $0x18] sm:$0xf]
      %v3852 = vld [vmem:[%s3 + $0x1c] sm:$0xf]
      %v3853 = vld [vmem:[%s3 + $0x20] sm:$0xf]
      %v3854 = vld [vmem:[%s3 + $0x24] sm:$0xf]
      %v3855 = vld [vmem:[%s3 + $0x28] sm:$0xf]
      %v3856 = vld [vmem:[%s3 + $0x2c] sm:$0xf]
      %v3857 = vld [vmem:[%s3 + $0x30] sm:$0xf]
      %v3858 = vld [vmem:[%s3 + $0x34] sm:$0xf]
      %v3859 = vld [vmem:[%s3 + $0x38] sm:$0xf]
      %v3860 = vld [vmem:[%s3 + $0x3c] sm:$0xf]
      %v3861 = vld [vmem:[%s3 + $0x40] sm:$0xf]
      %v3862 = vld [vmem:[%s3 + $0x44] sm:$0xf]
      %v3863 = vld [vmem:[%s3 + $0x48] sm:$0xf]
      %v3864 = vld [vmem:[%s3 + $0x4c] sm:$0xf]
      %v3865 = vld [vmem:[%s3 + $0x50] sm:$0xf]
      %v3866 = vld [vmem:[%s3 + $0x54] sm:$0xf]
      %v3867 = vld [vmem:[%s3 + $0x58] sm:$0xf]
      %v3868 = vld [vmem:[%s3 + $0x5c] sm:$0xf]
      %v3869 = vld [vmem:[%s3 + $0x60] sm:$0xf]
      %v3870 = vld [vmem:[%s3 + $0x64] sm:$0xf]
      %v3871 = vld [vmem:[%s3 + $0x68] sm:$0xf]
      %v3872 = vld [vmem:[%s3 + $0x6c] sm:$0xf]
      %v3873 = vld [vmem:[%s3 + $0x70] sm:$0xf]
      %v3874 = vld [vmem:[%s3 + $0x74] sm:$0xf]
      %v3875 = vld [vmem:[%s3 + $0x78] sm:$0xf]
      %v3876 = vld [vmem:[%s3 + $0x7c] sm:$0xf]
      %v3877 = vld [vmem:[%s3 + $0x80] sm:$0xf]
      %v3878 = vld [vmem:[%s3 + $0x84] sm:$0xf]
      %v3879 = vld [vmem:[%s3 + $0x88] sm:$0xf]
      %v3880 = vld [vmem:[%s3 + $0x8c] sm:$0xf]
      %v3881 = vld [vmem:[%s3 + $0x90] sm:$0xf]
      %v3882 = vld [vmem:[%s3 + $0x94] sm:$0xf]
      %v3883 = vld [vmem:[%s3 + $0x98] sm:$0xf]
      %v3884 = vld [vmem:[%s3 + $0x9c] sm:$0xf]
      %v3885 = vld [vmem:[%s3 + $0xa0] sm:$0xf]
      %v3886 = vld [vmem:[%s3 + $0xa4] sm:$0xf]
      %v3887 = vld [vmem:[%s3 + $0xa8] sm:$0xf]
      %v3888 = vld [vmem:[%s3 + $0xac] sm:$0xf]
      %v3889 = vld [vmem:[%s3 + $0xb0] sm:$0xf]
      %v3890 = vld [vmem:[%s3 + $0xb4] sm:$0xf]
      %v3891 = vld [vmem:[%s3 + $0xb8] sm:$0xf]
      %v3892 = vld [vmem:[%s3 + $0xbc] sm:$0xf]
      %v3893 = vld [vmem:[%s3 + $0xc0] sm:$0xf]
      %v3894 = vld [vmem:[%s3 + $0xc4] sm:$0xf]
      %v3895 = vld [vmem:[%s3 + $0xc8] sm:$0xf]
      %v3896 = vld [vmem:[%s3 + $0xcc] sm:$0xf]
      %v3897 = vld [vmem:[%s3 + $0xd0] sm:$0xf]
      %v3898 = vld [vmem:[%s3 + $0xd4] sm:$0xf]
      %v3899 = vld [vmem:[%s3 + $0xd8] sm:$0xf]
      %v3900 = vld [vmem:[%s3 + $0xdc] sm:$0xf]
      %v3901 = vld [vmem:[%s3 + $0xe0] sm:$0xf]
      %v3902 = vld [vmem:[%s3 + $0xe4] sm:$0xf]
      %v3903 = vld [vmem:[%s3 + $0xe8] sm:$0xf]
      %v3904 = vld [vmem:[%s3 + $0xec] sm:$0xf]
      %v3905 = vld [vmem:[%s3 + $0xf0] sm:$0xf]
      %v3906 = vld [vmem:[%s3 + $0xf4] sm:$0xf]
      %v3907 = vld [vmem:[%s3 + $0xf8] sm:$0xf]
      %v3908 = vld [vmem:[%s3 + $0xfc] sm:$0xf]
      %v3909 = vld [vmem:[%s4] sm:$0x1]
      %v3911 = vlaneseq
      %v3912 = vshrl.u32 %v3911, 7
      %v3913 = vsub.s32 0, %v3912
      %v3914 = vrot.slane %v3909, %v3913
      %v3980 = vunpack.c.l.b16 %v3845
      %v3981 = vunpack.c.l.b16 %v3846
      %v3982 = vunpack.c.l.b16 %v3847
      %v3983 = vunpack.c.l.b16 %v3848
      %v3984 = vunpack.c.l.b16 %v3849
      %v3985 = vunpack.c.l.b16 %v3850
      %v3986 = vunpack.c.l.b16 %v3851
      %v3987 = vunpack.c.l.b16 %v3852
      %v3988 = vunpack.c.l.b16 %v3853
      %v3989 = vunpack.c.l.b16 %v3854
      %v3990 = vunpack.c.l.b16 %v3855
      %v3991 = vunpack.c.l.b16 %v3856
      %v3992 = vunpack.c.l.b16 %v3857
      %v3993 = vunpack.c.l.b16 %v3858
      %v3994 = vunpack.c.l.b16 %v3859
      %v3995 = vunpack.c.l.b16 %v3860
      %v3996 = vunpack.c.l.b16 %v3861
      %v3997 = vunpack.c.l.b16 %v3862
      %v3998 = vunpack.c.l.b16 %v3863
      %v3999 = vunpack.c.l.b16 %v3864
      %v4000 = vunpack.c.l.b16 %v3865
      %v4001 = vunpack.c.l.b16 %v3866
      %v4002 = vunpack.c.l.b16 %v3867
      %v4003 = vunpack.c.l.b16 %v3868
      %v4004 = vunpack.c.l.b16 %v3869
      %v4005 = vunpack.c.l.b16 %v3870
      %v4006 = vunpack.c.l.b16 %v3871
      %v4007 = vunpack.c.l.b16 %v3872
      %v4008 = vunpack.c.l.b16 %v3873
      %v4009 = vunpack.c.l.b16 %v3874
      %v4010 = vunpack.c.l.b16 %v3875
      %v4011 = vunpack.c.l.b16 %v3876
      %v4012 = vunpack.c.l.b16 %v3877
      %v4013 = vunpack.c.l.b16 %v3878
      %v4014 = vunpack.c.l.b16 %v3879
      %v4015 = vunpack.c.l.b16 %v3880
      %v4016 = vunpack.c.l.b16 %v3881
      %v4017 = vunpack.c.l.b16 %v3882
      %v4018 = vunpack.c.l.b16 %v3883
      %v4019 = vunpack.c.l.b16 %v3884
      %v4020 = vunpack.c.l.b16 %v3885
      %v4021 = vunpack.c.l.b16 %v3886
      %v4022 = vunpack.c.l.b16 %v3887
      %v4023 = vunpack.c.l.b16 %v3888
      %v4024 = vunpack.c.l.b16 %v3889
      %v4025 = vunpack.c.l.b16 %v3890
      %v4026 = vunpack.c.l.b16 %v3891
      %v4027 = vunpack.c.l.b16 %v3892
      %v4028 = vunpack.c.l.b16 %v3893
      %v4029 = vunpack.c.l.b16 %v3894
      %v4030 = vunpack.c.l.b16 %v3895
      %v4031 = vunpack.c.l.b16 %v3896
      %v4032 = vunpack.c.l.b16 %v3897
      %v4033 = vunpack.c.l.b16 %v3898
      %v4034 = vunpack.c.l.b16 %v3899
      %v4035 = vunpack.c.l.b16 %v3900
      %v4036 = vunpack.c.l.b16 %v3901
      %v4037 = vunpack.c.l.b16 %v3902
      %v4038 = vunpack.c.l.b16 %v3903
      %v4039 = vunpack.c.l.b16 %v3904
      %v4040 = vunpack.c.l.b16 %v3905
      %v4041 = vunpack.c.l.b16 %v3906
      %v4042 = vunpack.c.l.b16 %v3907
      %v4043 = vunpack.c.l.b16 %v3908
      %v4044 = vpack.c.b16 %v3981, %v3980
      %v4045 = vpack.c.b16 %v3983, %v3982
      %v4046 = vpack.c.b16 %v3985, %v3984
      %v4047 = vpack.c.b16 %v3987, %v3986
      %v4048 = vpack.c.b16 %v3989, %v3988
      %v4049 = vpack.c.b16 %v3991, %v3990
      %v4050 = vpack.c.b16 %v3993, %v3992
      %v4051 = vpack.c.b16 %v3995, %v3994
      %v4052 = vpack.c.b16 %v3997, %v3996
      %v4053 = vpack.c.b16 %v3999, %v3998
      %v4054 = vpack.c.b16 %v4001, %v4000
      %v4055 = vpack.c.b16 %v4003, %v4002
      %v4056 = vpack.c.b16 %v4005, %v4004
      %v4057 = vpack.c.b16 %v4007, %v4006
      %v4058 = vpack.c.b16 %v4009, %v4008
      %v4059 = vpack.c.b16 %v4011, %v4010
      %v4060 = vpack.c.b16 %v4013, %v4012
      %v4061 = vpack.c.b16 %v4015, %v4014
      %v4062 = vpack.c.b16 %v4017, %v4016
      %v4063 = vpack.c.b16 %v4019, %v4018
      %v4064 = vpack.c.b16 %v4021, %v4020
      %v4065 = vpack.c.b16 %v4023, %v4022
      %v4066 = vpack.c.b16 %v4025, %v4024
      %v4067 = vpack.c.b16 %v4027, %v4026
      %v4068 = vpack.c.b16 %v4029, %v4028
      %v4069 = vpack.c.b16 %v4031, %v4030
      %v4070 = vpack.c.b16 %v4033, %v4032
      %v4071 = vpack.c.b16 %v4035, %v4034
      %v4072 = vpack.c.b16 %v4037, %v4036
      %v4073 = vpack.c.b16 %v4039, %v4038
      %v4074 = vpack.c.b16 %v4041, %v4040
      %v4075 = vpack.c.b16 %v4043, %v4042
      %4108 = vmatprep.subr.bf16.mxu0 0
      %4109 = vmatpush1.bf16.msra.mxu0 %v4044
      %4110 = vmatprep.subr.bf16.mxu0 0
      %4111 = vmatpush1.bf16.msra.mxu0 %v4045
      %4112 = vmatprep.subr.bf16.mxu0 0
      %4113 = vmatpush1.bf16.msra.mxu0 %v4046
      %4114 = vmatprep.subr.bf16.mxu0 0
      %4115 = vmatpush1.bf16.msra.mxu0 %v4047
      %4116 = vmatprep.subr.bf16.mxu0 0
      %4117 = vmatpush1.bf16.msra.mxu0 %v4048
      %4118 = vmatprep.subr.bf16.mxu0 0
      %4119 = vmatpush1.bf16.msra.mxu0 %v4049
      %4120 = vmatprep.subr.bf16.mxu0 0
      %4121 = vmatpush1.bf16.msra.mxu0 %v4050
      %4122 = vmatprep.subr.bf16.mxu0 0
      %4123 = vmatpush1.bf16.msra.mxu0 %v4051
      %4124 = vmatprep.subr.bf16.mxu0 0
      %4125 = vmatpush1.bf16.msra.mxu0 %v4052
      %4126 = vmatprep.subr.bf16.mxu0 0
      %4127 = vmatpush1.bf16.msra.mxu0 %v4053
      %4128 = vmatprep.subr.bf16.mxu0 0
      %4129 = vmatpush1.bf16.msra.mxu0 %v4054
      %4130 = vmatprep.subr.bf16.mxu0 0
      %4131 = vmatpush1.bf16.msra.mxu0 %v4055
      %4132 = vmatprep.subr.bf16.mxu0 0
      %4133 = vmatpush1.bf16.msra.mxu0 %v4056
      %4134 = vmatprep.subr.bf16.mxu0 0
      %4135 = vmatpush1.bf16.msra.mxu0 %v4057
      %4136 = vmatprep.subr.bf16.mxu0 0
      %4137 = vmatpush1.bf16.msra.mxu0 %v4058
      %4138 = vmatprep.subr.bf16.mxu0 0
      %4139 = vmatpush1.bf16.msra.mxu0 %v4059
      %4140 = vmatprep.mubr.bf16.mxu0 %v3818
      %4141 = vmatmul.mubr.bf16.gmra.mrb[0].mxu0 %v3817
      %v4142 = vpop.f32.mrb[0].mxu0
      %v4143 = vadd.f32 %v3914, %v4142
      %v4144 = vpop.f32.mrb[0].mxu0
      %v4145 = vpop.f32.mrb[0].mxu0
      %v4146 = vadd.f32 %v3914, %v4145
      %v4147 = vpop.f32.mrb[0].mxu0
      %4148 = vmatprep.mubr.bf16.mxu0 %v3822
      %4149 = vmatmul.mubr.bf16.gmra.mrb[0].mxu0 %v3821
      %v4150 = vpop.f32.mrb[0].mxu0
      %v4151 = vadd.f32 %v3914, %v4150
      %v4152 = vpop.f32.mrb[0].mxu0
      %v4153 = vpop.f32.mrb[0].mxu0
      %v4154 = vadd.f32 %v3914, %v4153
      %v4155 = vpop.f32.mrb[0].mxu0
      %4156 = vmatprep.mubr.bf16.mxu0 %v3826
      %4157 = vmatmul.mubr.bf16.gmra.mrb[0].mxu0 %v3825
      %v4158 = vpop.f32.mrb[0].mxu0
      %v4159 = vadd.f32 %v3914, %v4158
      %v4160 = vpop.f32.mrb[0].mxu0
      %v4161 = vpop.f32.mrb[0].mxu0
      %v4162 = vadd.f32 %v3914, %v4161
      %v4163 = vpop.f32.mrb[0].mxu0
      %4164 = vmatprep.mubr.bf16.mxu0 %v3830
      %4165 = vmatmul.mubr.bf16.gmra.mrb[0].mxu0 %v3829
      %v4166 = vpop.f32.mrb[0].mxu0
      %v4167 = vadd.f32 %v3914, %v4166
      %v4168 = vpop.f32.mrb[0].mxu0
      %v4169 = vpop.f32.mrb[0].mxu0
      %v4170 = vadd.f32 %v3914, %v4169
      %v4171 = vpop.f32.mrb[0].mxu0
      %4172 = vmatprep.mubr.bf16.mxu0 %v3834
      %4173 = vmatmul.mubr.bf16.gmra.mrb[0].mxu0 %v3833
      %v4174 = vpop.f32.mrb[0].mxu0
      %v4175 = vadd.f32 %v3914, %v4174
      %v4176 = vpop.f32.mrb[0].mxu0
      %v4177 = vpop.f32.mrb[0].mxu0
      %v4178 = vadd.f32 %v3914, %v4177
      %v4179 = vpop.f32.mrb[0].mxu0
      %4180 = vmatprep.mubr.bf16.mxu0 %v3838
      %4181 = vmatmul.mubr.bf16.gmra.mrb[0].mxu0 %v3837
      %v4182 = vpop.f32.mrb[0].mxu0
      %v4183 = vadd.f32 %v3914, %v4182
      %v4184 = vpop.f32.mrb[0].mxu0
      %v4185 = vpop.f32.mrb[0].mxu0
      %v4186 = vadd.f32 %v3914, %v4185
      %v4187 = vpop.f32.mrb[0].mxu0
      %4188 = vmatprep.mubr.bf16.mxu0 %v3842
      %4189 = vmatmul.mubr.bf16.gmra.mrb[0].mxu0 %v3841
      %v4190 = vpop.f32.mrb[0].mxu0
      %v4191 = vadd.f32 %v3914, %v4190
      %v4192 = vpop.f32.mrb[0].mxu0
      %v4193 = vpop.f32.mrb[0].mxu0
      %v4194 = vpop.f32.mrb[0].mxu0
      %4195 = vdwg.mxu0
      %4196 = vmatprep.subr.bf16.mxu0 0
      %4197 = vmatpush1.bf16.msra.mxu0 %v4060
      %4198 = vmatprep.subr.bf16.mxu0 0
      %4199 = vmatpush1.bf16.msra.mxu0 %v4061
      %4200 = vmatprep.subr.bf16.mxu0 0
      %4201 = vmatpush1.bf16.msra.mxu0 %v4062
      %4202 = vmatprep.subr.bf16.mxu0 0
      %4203 = vmatpush1.bf16.msra.mxu0 %v4063
      %4204 = vmatprep.subr.bf16.mxu0 0
      %4205 = vmatpush1.bf16.msra.mxu0 %v4064
      %4206 = vmatprep.subr.bf16.mxu0 0
      %4207 = vmatpush1.bf16.msra.mxu0 %v4065
      %4208 = vmatprep.subr.bf16.mxu0 0
      %4209 = vmatpush1.bf16.msra.mxu0 %v4066
      %4210 = vmatprep.subr.bf16.mxu0 0
      %4211 = vmatpush1.bf16.msra.mxu0 %v4067
      %4212 = vmatprep.subr.bf16.mxu0 0
      %4213 = vmatpush1.bf16.msra.mxu0 %v4068
      %4214 = vmatprep.subr.bf16.mxu0 0
      %4215 = vmatpush1.bf16.msra.mxu0 %v4069
      %4216 = vmatprep.subr.bf16.mxu0 0
      %4217 = vmatpush1.bf16.msra.mxu0 %v4070
      %4218 = vmatprep.subr.bf16.mxu0 0
      %4219 = vmatpush1.bf16.msra.mxu0 %v4071
      %4220 = vmatprep.subr.bf16.mxu0 0
      %4221 = vmatpush1.bf16.msra.mxu0 %v4072
      %4222 = vmatprep.subr.bf16.mxu0 0
      %4223 = vmatpush1.bf16.msra.mxu0 %v4073
      %4224 = vmatprep.subr.bf16.mxu0 0
      %4225 = vmatpush1.bf16.msra.mxu0 %v4074
      %4226 = vmatprep.subr.bf16.mxu0 0
      %4227 = vmatpush1.bf16.msra.mxu0 %v4075
      %4228 = vmatprep.mubr.bf16.mxu0 %v3820
      %4229 = vmatmul.mubr.bf16.gmra.mrb[0].mxu0 %v3819
      %v4230 = vpop.f32.mrb[0].mxu0
      %v4231 = vadd.f32 %v4143, %v4230
      %v4232 = vpop.f32.mrb[0].mxu0
      %v4233 = vpop.f32.mrb[0].mxu0
      %v4234 = vadd.f32 %v4146, %v4233
      %v4235 = vpop.f32.mrb[0].mxu0
      %4236 = vmatprep.mubr.bf16.mxu0 %v3824
      %4237 = vmatmul.mubr.bf16.gmra.mrb[0].mxu0 %v3823
      %v4238 = vpop.f32.mrb[0].mxu0
      %v4239 = vadd.f32 %v4151, %v4238
      %v4240 = vpop.f32.mrb[0].mxu0
      %v4241 = vpop.f32.mrb[0].mxu0
      %v4242 = vadd.f32 %v4154, %v4241
      %v4243 = vpop.f32.mrb[0].mxu0
      %4244 = vmatprep.mubr.bf16.mxu0 %v3828
      %4245 = vmatmul.mubr.bf16.gmra.mrb[0].mxu0 %v3827
      %v4246 = vpop.f32.mrb[0].mxu0
      %v4247 = vadd.f32 %v4159, %v4246
      %v4248 = vpop.f32.mrb[0].mxu0
      %v4249 = vpop.f32.mrb[0].mxu0
      %v4250 = vadd.f32 %v4162, %v4249
      %v4251 = vpop.f32.mrb[0].mxu0
      %4252 = vmatprep.mubr.bf16.mxu0 %v3832
      %4253 = vmatmul.mubr.bf16.gmra.mrb[0].mxu0 %v3831
      %v4254 = vpop.f32.mrb[0].mxu0
      %v4255 = vadd.f32 %v4167, %v4254
      %v4256 = vpop.f32.mrb[0].mxu0
      %v4257 = vpop.f32.mrb[0].mxu0
      %v4258 = vadd.f32 %v4170, %v4257
      %v4259 = vpop.f32.mrb[0].mxu0
      %4260 = vmatprep.mubr.bf16.mxu0 %v3836
      %4261 = vmatmul.mubr.bf16.gmra.mrb[0].mxu0 %v3835
      %v4262 = vpop.f32.mrb[0].mxu0
      %v4263 = vadd.f32 %v4175, %v4262
      %v4264 = vpop.f32.mrb[0].mxu0
      %v4265 = vpop.f32.mrb[0].mxu0
      %v4266 = vadd.f32 %v4178, %v4265
      %v4267 = vpop.f32.mrb[0].mxu0
      %4268 = vmatprep.mubr.bf16.mxu0 %v3840
      %4269 = vmatmul.mubr.bf16.gmra.mrb[0].mxu0 %v3839
      %v4270 = vpop.f32.mrb[0].mxu0
      %v4271 = vadd.f32 %v4183, %v4270
      %v4272 = vpop.f32.mrb[0].mxu0
      %v4273 = vpop.f32.mrb[0].mxu0
      %v4274 = vadd.f32 %v4186, %v4273
      %v4275 = vpop.f32.mrb[0].mxu0
      %4276 = vmatprep.mubr.bf16.mxu0 %v3844
      %4277 = vmatmul.mubr.bf16.gmra.mrb[0].mxu0 %v3843
      %v4278 = vpop.f32.mrb[0].mxu0
      %v4279 = vadd.f32 %v4191, %v4278
      %v4280 = vpop.f32.mrb[0].mxu0
      %v4281 = vpop.f32.mrb[0].mxu0
      %v4282 = vpop.f32.mrb[0].mxu0
      %4283 = vdwg.mxu0
      %v4284 = vmax.f32 %v4231, 0.0
      %v4285 = vmax.f32 %v4234, 0.0
      %v4286 = vmax.f32 %v4239, 0.0
      %v4287 = vmax.f32 %v4242, 0.0
      %v4288 = vmax.f32 %v4247, 0.0
      %v4289 = vmax.f32 %v4250, 0.0
      %v4290 = vmax.f32 %v4255, 0.0
      %v4291 = vmax.f32 %v4258, 0.0
      %v4292 = vmax.f32 %v4263, 0.0
      %v4293 = vmax.f32 %v4266, 0.0
      %v4294 = vmax.f32 %v4271, 0.0
      %v4295 = vmax.f32 %v4274, 0.0
      %v4296 = vmax.f32 %v4279, 0.0
      %4297 = vst.msk [vmem:[#allocation6] sm:$0xff] %vm536, %v4284
      %4298 = vst.msk [vmem:[#allocation6 + $0x8] sm:$0xff] %vm536, %v4285
      %4299 = vst.msk [vmem:[#allocation6 + $0x10] sm:$0xff] %vm536, %v4286
      %4300 = vst.msk [vmem:[#allocation6 + $0x18] sm:$0xff] %vm536, %v4287
      %4301 = vst.msk [vmem:[#allocation6 + $0x20] sm:$0xff] %vm536, %v4288
      %4302 = vst.msk [vmem:[#allocation6 + $0x28] sm:$0xff] %vm536, %v4289
      %4303 = vst.msk [vmem:[#allocation6 + $0x30] sm:$0xff] %vm536, %v4290
      %4304 = vst.msk [vmem:[#allocation6 + $0x38] sm:$0xff] %vm536, %v4291
      %4305 = vst.msk [vmem:[#allocation6 + $0x40] sm:$0xff] %vm536, %v4292
      %4306 = vst.msk [vmem:[#allocation6 + $0x48] sm:$0xff] %vm536, %v4293
      %4307 = vst.msk [vmem:[#allocation6 + $0x50] sm:$0xff] %vm536, %v4294
      %4308 = vst.msk [vmem:[#allocation6 + $0x58] sm:$0xff] %vm536, %v4295
      %4309 = vst.msk [vmem:[#allocation6 + $0x60] sm:$0x1] %vm552, %v4296
      %v4310 = vld [vmem:[#allocation6] sm:$0xff]
      %v4311 = vld [vmem:[#allocation6 + $0x8] sm:$0xff]
      %v4312 = vld [vmem:[#allocation6 + $0x10] sm:$0xff]
      %v4313 = vld [vmem:[#allocation6 + $0x18] sm:$0xff]
      %v4314 = vld [vmem:[#allocation6 + $0x20] sm:$0xff]
      %v4315 = vld [vmem:[#allocation6 + $0x28] sm:$0xff]
      %v4316 = vld [vmem:[#allocation6 + $0x30] sm:$0xff]
      %v4317 = vld [vmem:[#allocation6 + $0x38] sm:$0xff]
      %v4318 = vld [vmem:[#allocation6 + $0x40] sm:$0xff]
      %v4319 = vld [vmem:[#allocation6 + $0x48] sm:$0x1]
      %4320 = vst.msk [vmem:[#allocation7] sm:$0xff] %vm536, %v4310
      %4321 = vst.msk [vmem:[#allocation7 + $0x28] sm:$0xff] %vm536, %v4311
      %4322 = vst.msk [vmem:[#allocation7 + $0x50] sm:$0xff] %vm536, %v4312
      %4323 = vst.msk [vmem:[#allocation7 + $0x78] sm:$0xff] %vm536, %v4313
      %4324 = vst.msk [vmem:[#allocation7 + $0xa0] sm:$0xff] %vm536, %v4314
      %4325 = vst.msk [vmem:[#allocation7 + $0xc8] sm:$0xff] %vm536, %v4315
      %4326 = vst.msk [vmem:[#allocation7 + $0xf0] sm:$0xff] %vm536, %v4316
      %4327 = vst.msk [vmem:[#allocation7 + $0x118] sm:$0xff] %vm536, %v4317
      %4328 = vst.msk [vmem:[#allocation7 + $0x140] sm:$0xff] %vm536, %v4318
      %4329 = vst.msk [vmem:[#allocation7 + $0x168] sm:$0x1] %vm552, %v4319
      %v4330 = vld [vmem:[#allocation6 + $0x1] sm:$0xff]
      %v4331 = vld [vmem:[#allocation6 + $0x9] sm:$0xff]
      %v4332 = vld [vmem:[#allocation6 + $0x11] sm:$0xff]
      %v4333 = vld [vmem:[#allocation6 + $0x19] sm:$0xff]
      %v4334 = vld [vmem:[#allocation6 + $0x21] sm:$0xff]
      %v4335 = vld [vmem:[#allocation6 + $0x29] sm:$0xff]
      %v4336 = vld [vmem:[#allocation6 + $0x31] sm:$0xff]
      %v4337 = vld [vmem:[#allocation6 + $0x39] sm:$0xff]
      %v4338 = vld [vmem:[#allocation6 + $0x41] sm:$0xff]
      %v4339 = vld [vmem:[#allocation6 + $0x49] sm:$0x1]
      %4350 = vrot.lane.b32.xlu0 %v4330, 64
      %v4351 = vpop.permute.xlu0 %4350
      %4352 = vrot.lane.b32.xlu0 %v4331, 64
      %v4353 = vpop.permute.xlu0 %4352
      %4354 = vrot.lane.b32.xlu0 %v4332, 64
      %v4355 = vpop.permute.xlu0 %4354
      %4356 = vrot.lane.b32.xlu0 %v4333, 64
      %v4357 = vpop.permute.xlu0 %4356
      %4358 = vrot.lane.b32.xlu0 %v4334, 64
      %v4359 = vpop.permute.xlu0 %4358
      %4360 = vrot.lane.b32.xlu0 %v4335, 64
      %v4361 = vpop.permute.xlu0 %4360
      %4362 = vrot.lane.b32.xlu0 %v4336, 64
      %v4363 = vpop.permute.xlu0 %4362
      %4364 = vrot.lane.b32.xlu0 %v4337, 64
      %v4365 = vpop.permute.xlu0 %4364
      %4366 = vrot.lane.b32.xlu0 %v4338, 64
      %v4367 = vpop.permute.xlu0 %4366
      %4368 = vrot.lane.b32.xlu0 %v4339, 64
      %v4369 = vpop.permute.xlu0 %4368
      %4380 = vst.msk [vmem:[#allocation7] sm:$0xff] %vm709, %v4351
      %4381 = vst.msk [vmem:[#allocation7 + $0x28] sm:$0xff] %vm709, %v4353
      %4382 = vst.msk [vmem:[#allocation7 + $0x50] sm:$0xff] %vm709, %v4355
      %4383 = vst.msk [vmem:[#allocation7 + $0x78] sm:$0xff] %vm709, %v4357
      %4384 = vst.msk [vmem:[#allocation7 + $0xa0] sm:$0xff] %vm709, %v4359
      %4385 = vst.msk [vmem:[#allocation7 + $0xc8] sm:$0xff] %vm709, %v4361
      %4386 = vst.msk [vmem:[#allocation7 + $0xf0] sm:$0xff] %vm709, %v4363
      %4387 = vst.msk [vmem:[#allocation7 + $0x118] sm:$0xff] %vm709, %v4365
      %4388 = vst.msk [vmem:[#allocation7 + $0x140] sm:$0xff] %vm709, %v4367
      %4389 = vst.msk [vmem:[#allocation7 + $0x168] sm:$0x1] %vm1452, %v4369
      %v4390 = vld [vmem:[#allocation6 + $0x2] sm:$0xff]
      %v4391 = vld [vmem:[#allocation6 + $0xa] sm:$0xff]
      %v4392 = vld [vmem:[#allocation6 + $0x12] sm:$0xff]
      %v4393 = vld [vmem:[#allocation6 + $0x1a] sm:$0xff]
      %v4394 = vld [vmem:[#allocation6 + $0x22] sm:$0xff]
      %v4395 = vld [vmem:[#allocation6 + $0x2a] sm:$0xff]
      %v4396 = vld [vmem:[#allocation6 + $0x32] sm:$0xff]
      %v4397 = vld [vmem:[#allocation6 + $0x3a] sm:$0xff]
      %v4398 = vld [vmem:[#allocation6 + $0x42] sm:$0xff]
      %v4399 = vld [vmem:[#allocation6 + $0x4a] sm:$0x1]
      %4400 = vst.msk [vmem:[#allocation7 + $0x8] sm:$0xff] %vm536, %v4390
      %4401 = vst.msk [vmem:[#allocation7 + $0x30] sm:$0xff] %vm536, %v4391
      %4402 = vst.msk [vmem:[#allocation7 + $0x58] sm:$0xff] %vm536, %v4392
      %4403 = vst.msk [vmem:[#allocation7 + $0x80] sm:$0xff] %vm536, %v4393
      %4404 = vst.msk [vmem:[#allocation7 + $0xa8] sm:$0xff] %vm536, %v4394
      %4405 = vst.msk [vmem:[#allocation7 + $0xd0] sm:$0xff] %vm536, %v4395
      %4406 = vst.msk [vmem:[#allocation7 + $0xf8] sm:$0xff] %vm536, %v4396
      %4407 = vst.msk [vmem:[#allocation7 + $0x120] sm:$0xff] %vm536, %v4397
      %4408 = vst.msk [vmem:[#allocation7 + $0x148] sm:$0xff] %vm536, %v4398
      %4409 = vst.msk [vmem:[#allocation7 + $0x170] sm:$0x1] %vm552, %v4399
      %v4410 = vld [vmem:[#allocation6 + $0xb] sm:$0xff]
      %v4411 = vld [vmem:[#allocation6 + $0x13] sm:$0xff]
      %v4412 = vld [vmem:[#allocation6 + $0x1b] sm:$0xff]
      %v4413 = vld [vmem:[#allocation6 + $0x23] sm:$0xff]
      %v4414 = vld [vmem:[#allocation6 + $0x2b] sm:$0xff]
      %v4415 = vld [vmem:[#allocation6 + $0x33] sm:$0xff]
      %v4416 = vld [vmem:[#allocation6 + $0x3b] sm:$0xff]
      %v4417 = vld [vmem:[#allocation6 + $0x43] sm:$0xff]
      %v4418 = vld [vmem:[#allocation6 + $0x4b] sm:$0xff]
      %v4419 = vld [vmem:[#allocation6 + $0x53] sm:$0x1]
      %4430 = vrot.lane.b32.xlu0 %v4410, 64
      %v4431 = vpop.permute.xlu0 %4430
      %4432 = vrot.lane.b32.xlu0 %v4411, 64
      %v4433 = vpop.permute.xlu0 %4432
      %4434 = vrot.lane.b32.xlu0 %v4412, 64
      %v4435 = vpop.permute.xlu0 %4434
      %4436 = vrot.lane.b32.xlu0 %v4413, 64
      %v4437 = vpop.permute.xlu0 %4436
      %4438 = vrot.lane.b32.xlu0 %v4414, 64
      %v4439 = vpop.permute.xlu0 %4438
      %4440 = vrot.lane.b32.xlu0 %v4415, 64
      %v4441 = vpop.permute.xlu0 %4440
      %4442 = vrot.lane.b32.xlu0 %v4416, 64
      %v4443 = vpop.permute.xlu0 %4442
      %4444 = vrot.lane.b32.xlu0 %v4417, 64
      %v4445 = vpop.permute.xlu0 %4444
      %4446 = vrot.lane.b32.xlu0 %v4418, 64
      %v4447 = vpop.permute.xlu0 %4446
      %4448 = vrot.lane.b32.xlu0 %v4419, 64
      %v4449 = vpop.permute.xlu0 %4448
      %4460 = vst.msk [vmem:[#allocation7 + $0x8] sm:$0xff] %vm709, %v4431
      %4461 = vst.msk [vmem:[#allocation7 + $0x30] sm:$0xff] %vm709, %v4433
      %4462 = vst.msk [vmem:[#allocation7 + $0x58] sm:$0xff] %vm709, %v4435
      %4463 = vst.msk [vmem:[#allocation7 + $0x80] sm:$0xff] %vm709, %v4437
      %4464 = vst.msk [vmem:[#allocation7 + $0xa8] sm:$0xff] %vm709, %v4439
      %4465 = vst.msk [vmem:[#allocation7 + $0xd0] sm:$0xff] %vm709, %v4441
      %4466 = vst.msk [vmem:[#allocation7 + $0xf8] sm:$0xff] %vm709, %v4443
      %4467 = vst.msk [vmem:[#allocation7 + $0x120] sm:$0xff] %vm709, %v4445
      %4468 = vst.msk [vmem:[#allocation7 + $0x148] sm:$0xff] %vm709, %v4447
      %4469 = vst.msk [vmem:[#allocation7 + $0x170] sm:$0x1] %vm1452, %v4449
      %v4470 = vld [vmem:[#allocation6 + $0xc] sm:$0xff]
      %v4471 = vld [vmem:[#allocation6 + $0x14] sm:$0xff]
      %v4472 = vld [vmem:[#allocation6 + $0x1c] sm:$0xff]
      %v4473 = vld [vmem:[#allocation6 + $0x24] sm:$0xff]
      %v4474 = vld [vmem:[#allocation6 + $0x2c] sm:$0xff]
      %v4475 = vld [vmem:[#allocation6 + $0x34] sm:$0xff]
      %v4476 = vld [vmem:[#allocation6 + $0x3c] sm:$0xff]
      %v4477 = vld [vmem:[#allocation6 + $0x44] sm:$0xff]
      %v4478 = vld [vmem:[#allocation6 + $0x4c] sm:$0xff]
      %v4479 = vld [vmem:[#allocation6 + $0x54] sm:$0x1]
      %4480 = vst.msk [vmem:[#allocation7 + $0x10] sm:$0xff] %vm536, %v4470
      %4481 = vst.msk [vmem:[#allocation7 + $0x38] sm:$0xff] %vm536, %v4471
      %4482 = vst.msk [vmem:[#allocation7 + $0x60] sm:$0xff] %vm536, %v4472
      %4483 = vst.msk [vmem:[#allocation7 + $0x88] sm:$0xff] %vm536, %v4473
      %4484 = vst.msk [vmem:[#allocation7 + $0xb0] sm:$0xff] %vm536, %v4474
      %4485 = vst.msk [vmem:[#allocation7 + $0xd8] sm:$0xff] %vm536, %v4475
      %4486 = vst.msk [vmem:[#allocation7 + $0x100] sm:$0xff] %vm536, %v4476
      %4487 = vst.msk [vmem:[#allocation7 + $0x128] sm:$0xff] %vm536, %v4477
      %4488 = vst.msk [vmem:[#allocation7 + $0x150] sm:$0xff] %vm536, %v4478
      %4489 = vst.msk [vmem:[#allocation7 + $0x178] sm:$0x1] %vm552, %v4479
      %v4490 = vld [vmem:[#allocation6 + $0xd] sm:$0xff]
      %v4491 = vld [vmem:[#allocation6 + $0x15] sm:$0xff]
      %v4492 = vld [vmem:[#allocation6 + $0x1d] sm:$0xff]
      %v4493 = vld [vmem:[#allocation6 + $0x25] sm:$0xff]
      %v4494 = vld [vmem:[#allocation6 + $0x2d] sm:$0xff]
      %v4495 = vld [vmem:[#allocation6 + $0x35] sm:$0xff]
      %v4496 = vld [vmem:[#allocation6 + $0x3d] sm:$0xff]
      %v4497 = vld [vmem:[#allocation6 + $0x45] sm:$0xff]
      %v4498 = vld [vmem:[#allocation6 + $0x4d] sm:$0xff]
      %v4499 = vld [vmem:[#allocation6 + $0x55] sm:$0x1]
      %4510 = vrot.lane.b32.xlu0 %v4490, 64
      %v4511 = vpop.permute.xlu0 %4510
      %4512 = vrot.lane.b32.xlu0 %v4491, 64
      %v4513 = vpop.permute.xlu0 %4512
      %4514 = vrot.lane.b32.xlu0 %v4492, 64
      %v4515 = vpop.permute.xlu0 %4514
      %4516 = vrot.lane.b32.xlu0 %v4493, 64
      %v4517 = vpop.permute.xlu0 %4516
      %4518 = vrot.lane.b32.xlu0 %v4494, 64
      %v4519 = vpop.permute.xlu0 %4518
      %4520 = vrot.lane.b32.xlu0 %v4495, 64
      %v4521 = vpop.permute.xlu0 %4520
      %4522 = vrot.lane.b32.xlu0 %v4496, 64
      %v4523 = vpop.permute.xlu0 %4522
      %4524 = vrot.lane.b32.xlu0 %v4497, 64
      %v4525 = vpop.permute.xlu0 %4524
      %4526 = vrot.lane.b32.xlu0 %v4498, 64
      %v4527 = vpop.permute.xlu0 %4526
      %4528 = vrot.lane.b32.xlu0 %v4499, 64
      %v4529 = vpop.permute.xlu0 %4528
      %4540 = vst.msk [vmem:[#allocation7 + $0x10] sm:$0xff] %vm709, %v4511
      %4541 = vst.msk [vmem:[#allocation7 + $0x38] sm:$0xff] %vm709, %v4513
      %4542 = vst.msk [vmem:[#allocation7 + $0x60] sm:$0xff] %vm709, %v4515
      %4543 = vst.msk [vmem:[#allocation7 + $0x88] sm:$0xff] %vm709, %v4517
      %4544 = vst.msk [vmem:[#allocation7 + $0xb0] sm:$0xff] %vm709, %v4519
      %4545 = vst.msk [vmem:[#allocation7 + $0xd8] sm:$0xff] %vm709, %v4521
      %4546 = vst.msk [vmem:[#allocation7 + $0x100] sm:$0xff] %vm709, %v4523
      %4547 = vst.msk [vmem:[#allocation7 + $0x128] sm:$0xff] %vm709, %v4525
      %4548 = vst.msk [vmem:[#allocation7 + $0x150] sm:$0xff] %vm709, %v4527
      %4549 = vst.msk [vmem:[#allocation7 + $0x178] sm:$0x1] %vm1452, %v4529
      %v4550 = vld [vmem:[#allocation6 + $0x16] sm:$0xff]
      %v4551 = vld [vmem:[#allocation6 + $0x1e] sm:$0xff]
      %v4552 = vld [vmem:[#allocation6 + $0x26] sm:$0xff]
      %v4553 = vld [vmem:[#allocation6 + $0x2e] sm:$0xff]
      %v4554 = vld [vmem:[#allocation6 + $0x36] sm:$0xff]
      %v4555 = vld [vmem:[#allocation6 + $0x3e] sm:$0xff]
      %v4556 = vld [vmem:[#allocation6 + $0x46] sm:$0xff]
      %v4557 = vld [vmem:[#allocation6 + $0x4e] sm:$0xff]
      %v4558 = vld [vmem:[#allocation6 + $0x56] sm:$0xff]
      %v4559 = vld [vmem:[#allocation6 + $0x5e] sm:$0x1]
      %4560 = vst.msk [vmem:[#allocation7 + $0x18] sm:$0xff] %vm536, %v4550
      %4561 = vst.msk [vmem:[#allocation7 + $0x40] sm:$0xff] %vm536, %v4551
      %4562 = vst.msk [vmem:[#allocation7 + $0x68] sm:$0xff] %vm536, %v4552
      %4563 = vst.msk [vmem:[#allocation7 + $0x90] sm:$0xff] %vm536, %v4553
      %4564 = vst.msk [vmem:[#allocation7 + $0xb8] sm:$0xff] %vm536, %v4554
      %4565 = vst.msk [vmem:[#allocation7 + $0xe0] sm:$0xff] %vm536, %v4555
      %4566 = vst.msk [vmem:[#allocation7 + $0x108] sm:$0xff] %vm536, %v4556
      %4567 = vst.msk [vmem:[#allocation7 + $0x130] sm:$0xff] %vm536, %v4557
      %4568 = vst.msk [vmem:[#allocation7 + $0x158] sm:$0xff] %vm536, %v4558
      %4569 = vst.msk [vmem:[#allocation7 + $0x180] sm:$0x1] %vm552, %v4559
      %v4570 = vld [vmem:[#allocation6 + $0x17] sm:$0xff]
      %v4571 = vld [vmem:[#allocation6 + $0x1f] sm:$0xff]
      %v4572 = vld [vmem:[#allocation6 + $0x27] sm:$0xff]
      %v4573 = vld [vmem:[#allocation6 + $0x2f] sm:$0xff]
      %v4574 = vld [vmem:[#allocation6 + $0x37] sm:$0xff]
      %v4575 = vld [vmem:[#allocation6 + $0x3f] sm:$0xff]
      %v4576 = vld [vmem:[#allocation6 + $0x47] sm:$0xff]
      %v4577 = vld [vmem:[#allocation6 + $0x4f] sm:$0xff]
      %v4578 = vld [vmem:[#allocation6 + $0x57] sm:$0xff]
      %v4579 = vld [vmem:[#allocation6 + $0x5f] sm:$0x1]
      %4590 = vrot.lane.b32.xlu0 %v4570, 64
      %v4591 = vpop.permute.xlu0 %4590
      %4592 = vrot.lane.b32.xlu0 %v4571, 64
      %v4593 = vpop.permute.xlu0 %4592
      %4594 = vrot.lane.b32.xlu0 %v4572, 64
      %v4595 = vpop.permute.xlu0 %4594
      %4596 = vrot.lane.b32.xlu0 %v4573, 64
      %v4597 = vpop.permute.xlu0 %4596
      %4598 = vrot.lane.b32.xlu0 %v4574, 64
      %v4599 = vpop.permute.xlu0 %4598
      %4600 = vrot.lane.b32.xlu0 %v4575, 64
      %v4601 = vpop.permute.xlu0 %4600
      %4602 = vrot.lane.b32.xlu0 %v4576, 64
      %v4603 = vpop.permute.xlu0 %4602
      %4604 = vrot.lane.b32.xlu0 %v4577, 64
      %v4605 = vpop.permute.xlu0 %4604
      %4606 = vrot.lane.b32.xlu0 %v4578, 64
      %v4607 = vpop.permute.xlu0 %4606
      %4608 = vrot.lane.b32.xlu0 %v4579, 64
      %v4609 = vpop.permute.xlu0 %4608
      %4620 = vst.msk [vmem:[#allocation7 + $0x18] sm:$0xff] %vm709, %v4591
      %4621 = vst.msk [vmem:[#allocation7 + $0x40] sm:$0xff] %vm709, %v4593
      %4622 = vst.msk [vmem:[#allocation7 + $0x68] sm:$0xff] %vm709, %v4595
      %4623 = vst.msk [vmem:[#allocation7 + $0x90] sm:$0xff] %vm709, %v4597
      %4624 = vst.msk [vmem:[#allocation7 + $0xb8] sm:$0xff] %vm709, %v4599
      %4625 = vst.msk [vmem:[#allocation7 + $0xe0] sm:$0xff] %vm709, %v4601
      %4626 = vst.msk [vmem:[#allocation7 + $0x108] sm:$0xff] %vm709, %v4603
      %4627 = vst.msk [vmem:[#allocation7 + $0x130] sm:$0xff] %vm709, %v4605
      %4628 = vst.msk [vmem:[#allocation7 + $0x158] sm:$0xff] %vm709, %v4607
      %4629 = vst.msk [vmem:[#allocation7 + $0x180] sm:$0x1] %vm1452, %v4609
      %v4630 = vld [vmem:[#allocation6 + $0x18] sm:$0xff]
      %v4631 = vld [vmem:[#allocation6 + $0x20] sm:$0xff]
      %v4632 = vld [vmem:[#allocation6 + $0x28] sm:$0xff]
      %v4633 = vld [vmem:[#allocation6 + $0x30] sm:$0xff]
      %v4634 = vld [vmem:[#allocation6 + $0x38] sm:$0xff]
      %v4635 = vld [vmem:[#allocation6 + $0x40] sm:$0xff]
      %v4636 = vld [vmem:[#allocation6 + $0x48] sm:$0xff]
      %v4637 = vld [vmem:[#allocation6 + $0x50] sm:$0xff]
      %v4638 = vld [vmem:[#allocation6 + $0x58] sm:$0xff]
      %v4639 = vld [vmem:[#allocation6 + $0x60] sm:$0x1]
      %4640 = vst.msk [vmem:[#allocation7 + $0x20] sm:$0xff] %vm536, %v4630
      %4641 = vst.msk [vmem:[#allocation7 + $0x48] sm:$0xff] %vm536, %v4631
      %4642 = vst.msk [vmem:[#allocation7 + $0x70] sm:$0xff] %vm536, %v4632
      %4643 = vst.msk [vmem:[#allocation7 + $0x98] sm:$0xff] %vm536, %v4633
      %4644 = vst.msk [vmem:[#allocation7 + $0xc0] sm:$0xff] %vm536, %v4634
      %4645 = vst.msk [vmem:[#allocation7 + $0xe8] sm:$0xff] %vm536, %v4635
      %4646 = vst.msk [vmem:[#allocation7 + $0x110] sm:$0xff] %vm536, %v4636
      %4647 = vst.msk [vmem:[#allocation7 + $0x138] sm:$0xff] %vm536, %v4637
      %4648 = vst.msk [vmem:[#allocation7 + $0x160] sm:$0xff] %vm536, %v4638
      %4649 = vst.msk [vmem:[#allocation7 + $0x188] sm:$0x1] %vm552, %v4639
      %v4650 = vld [vmem:[#allocation7] sm:$0xff]
      %v4651 = vld [vmem:[#allocation7 + $0x8] sm:$0xff]
      %v4652 = vld [vmem:[#allocation7 + $0x10] sm:$0xff]
      %v4653 = vld [vmem:[#allocation7 + $0x18] sm:$0xff]
      %v4654 = vld [vmem:[#allocation7 + $0x20] sm:$0xff]
      %v4655 = vld [vmem:[#allocation7 + $0x28] sm:$0xff]
      %v4656 = vld [vmem:[#allocation7 + $0x30] sm:$0xff]
      %v4657 = vld [vmem:[#allocation7 + $0x38] sm:$0xff]
      %v4658 = vld [vmem:[#allocation7 + $0x40] sm:$0xff]
      %v4659 = vld [vmem:[#allocation7 + $0x48] sm:$0xff]
      %v4660 = vld [vmem:[#allocation7 + $0x50] sm:$0xff]
      %v4661 = vld [vmem:[#allocation7 + $0x58] sm:$0xff]
      %v4662 = vld [vmem:[#allocation7 + $0x60] sm:$0xff]
      %v4663 = vld [vmem:[#allocation7 + $0x68] sm:$0xff]
      %v4664 = vld [vmem:[#allocation7 + $0x70] sm:$0xff]
      %v4665 = vld [vmem:[#allocation7 + $0x78] sm:$0xff]
      %v4666 = vld [vmem:[#allocation7 + $0x80] sm:$0xff]
      %v4667 = vld [vmem:[#allocation7 + $0x88] sm:$0xff]
      %v4668 = vld [vmem:[#allocation7 + $0x90] sm:$0xff]
      %v4669 = vld [vmem:[#allocation7 + $0x98] sm:$0xff]
      %v4670 = vld [vmem:[#allocation7 + $0xa0] sm:$0xff]
      %v4671 = vld [vmem:[#allocation7 + $0xa8] sm:$0xff]
      %v4672 = vld [vmem:[#allocation7 + $0xb0] sm:$0xff]
      %v4673 = vld [vmem:[#allocation7 + $0xb8] sm:$0xff]
      %v4674 = vld [vmem:[#allocation7 + $0xc0] sm:$0xff]
      %v4675 = vld [vmem:[#allocation7 + $0xc8] sm:$0xff]
      %v4676 = vld [vmem:[#allocation7 + $0xd0] sm:$0xff]
      %v4677 = vld [vmem:[#allocation7 + $0xd8] sm:$0xff]
      %v4678 = vld [vmem:[#allocation7 + $0xe0] sm:$0xff]
      %v4679 = vld [vmem:[#allocation7 + $0xe8] sm:$0xff]
      %v4680 = vld [vmem:[#allocation7 + $0xf0] sm:$0xff]
      %v4681 = vld [vmem:[#allocation7 + $0xf8] sm:$0xff]
      %v4682 = vld [vmem:[#allocation7 + $0x100] sm:$0xff]
      %v4683 = vld [vmem:[#allocation7 + $0x108] sm:$0xff]
      %v4684 = vld [vmem:[#allocation7 + $0x110] sm:$0xff]
      %v4685 = vld [vmem:[#allocation7 + $0x118] sm:$0xff]
      %v4686 = vld [vmem:[#allocation7 + $0x120] sm:$0xff]
      %v4687 = vld [vmem:[#allocation7 + $0x128] sm:$0xff]
      %v4688 = vld [vmem:[#allocation7 + $0x130] sm:$0xff]
      %v4689 = vld [vmem:[#allocation7 + $0x138] sm:$0xff]
      %v4690 = vld [vmem:[#allocation7 + $0x140] sm:$0xff]
      %v4691 = vld [vmem:[#allocation7 + $0x148] sm:$0xff]
      %v4692 = vld [vmem:[#allocation7 + $0x150] sm:$0xff]
      %v4693 = vld [vmem:[#allocation7 + $0x158] sm:$0xff]
      %v4694 = vld [vmem:[#allocation7 + $0x160] sm:$0xff]
      %v4695 = vld [vmem:[#allocation7 + $0x168] sm:$0x1]
      %v4696 = vld [vmem:[#allocation7 + $0x170] sm:$0x1]
      %v4697 = vld [vmem:[#allocation7 + $0x178] sm:$0x1]
      %v4698 = vld [vmem:[#allocation7 + $0x180] sm:$0x1]
      %v4699 = vld [vmem:[#allocation7 + $0x188] sm:$0x1]
      %v4700 = vpack.c.bf16 %v4655, %v4650
      %v4701 = vpack.c.bf16 %v4656, %v4651
      %v4702 = vpack.c.bf16 %v4657, %v4652
      %v4703 = vpack.c.bf16 %v4658, %v4653
      %v4704 = vpack.c.bf16 %v4659, %v4654
      %v4705 = vpack.c.bf16 %v4665, %v4660
      %v4706 = vpack.c.bf16 %v4666, %v4661
      %v4707 = vpack.c.bf16 %v4667, %v4662
      %v4708 = vpack.c.bf16 %v4668, %v4663
      %v4709 = vpack.c.bf16 %v4669, %v4664
      %v4710 = vpack.c.bf16 %v4675, %v4670
      %v4711 = vpack.c.bf16 %v4676, %v4671
      %v4712 = vpack.c.bf16 %v4677, %v4672
      %v4713 = vpack.c.bf16 %v4678, %v4673
      %v4714 = vpack.c.bf16 %v4679, %v4674
      %v4715 = vpack.c.bf16 %v4685, %v4680
      %v4716 = vpack.c.bf16 %v4686, %v4681
      %v4717 = vpack.c.bf16 %v4687, %v4682
      %v4718 = vpack.c.bf16 %v4688, %v4683
      %v4719 = vpack.c.bf16 %v4689, %v4684
      %v4720 = vpack.c.bf16 %v4695, %v4690
      %v4721 = vpack.c.bf16 %v4696, %v4691
      %v4722 = vpack.c.bf16 %v4697, %v4692
      %v4723 = vpack.c.bf16 %v4698, %v4693
      %v4724 = vpack.c.bf16 %v4699, %v4694
      %v4725 = vld [vmem:[%s5] sm:$0xf]
      %v4726 = vld [vmem:[%s5 + $0x4] sm:$0xf]
      %v4727 = vld [vmem:[%s5 + $0x8] sm:$0xf]
      %v4728 = vld [vmem:[%s5 + $0xc] sm:$0xf]
      %v4729 = vld [vmem:[%s5 + $0x10] sm:$0xf]
      %v4730 = vld [vmem:[%s5 + $0x14] sm:$0xf]
      %v4731 = vld [vmem:[%s5 + $0x18] sm:$0xf]
      %v4732 = vld [vmem:[%s5 + $0x1c] sm:$0xf]
      %v4733 = vld [vmem:[%s5 + $0x20] sm:$0xf]
      %v4734 = vld [vmem:[%s5 + $0x24] sm:$0xf]
      %v4735 = vld [vmem:[%s5 + $0x28] sm:$0xf]
      %v4736 = vld [vmem:[%s5 + $0x2c] sm:$0xf]
      %v4737 = vld [vmem:[%s5 + $0x30] sm:$0xf]
      %v4738 = vld [vmem:[%s5 + $0x34] sm:$0xf]
      %v4739 = vld [vmem:[%s5 + $0x38] sm:$0xf]
      %v4740 = vld [vmem:[%s5 + $0x3c] sm:$0xf]
      %v4741 = vld [vmem:[%s5 + $0x40] sm:$0xf]
      %v4742 = vld [vmem:[%s5 + $0x44] sm:$0xf]
      %v4743 = vld [vmem:[%s5 + $0x48] sm:$0xf]
      %v4744 = vld [vmem:[%s5 + $0x4c] sm:$0xf]
      %v4745 = vld [vmem:[%s5 + $0x50] sm:$0xf]
      %v4746 = vld [vmem:[%s5 + $0x54] sm:$0xf]
      %v4747 = vld [vmem:[%s5 + $0x58] sm:$0xf]
      %v4748 = vld [vmem:[%s5 + $0x5c] sm:$0xf]
      %v4749 = vld [vmem:[%s5 + $0x60] sm:$0xf]
      %v4750 = vld [vmem:[%s5 + $0x64] sm:$0xf]
      %v4751 = vld [vmem:[%s5 + $0x68] sm:$0xf]
      %v4752 = vld [vmem:[%s5 + $0x6c] sm:$0xf]
      %v4753 = vld [vmem:[%s5 + $0x70] sm:$0xf]
      %v4754 = vld [vmem:[%s5 + $0x74] sm:$0xf]
      %v4755 = vld [vmem:[%s5 + $0x78] sm:$0xf]
      %v4756 = vld [vmem:[%s5 + $0x7c] sm:$0xf]
      %v4757 = vld [vmem:[%s5 + $0x80] sm:$0xf]
      %v4758 = vld [vmem:[%s5 + $0x84] sm:$0xf]
      %v4759 = vld [vmem:[%s5 + $0x88] sm:$0xf]
      %v4760 = vld [vmem:[%s5 + $0x8c] sm:$0xf]
      %v4761 = vld [vmem:[%s5 + $0x90] sm:$0xf]
      %v4762 = vld [vmem:[%s5 + $0x94] sm:$0xf]
      %v4763 = vld [vmem:[%s5 + $0x98] sm:$0xf]
      %v4764 = vld [vmem:[%s5 + $0x9c] sm:$0xf]
      %v4765 = vld [vmem:[%s5 + $0xa0] sm:$0xf]
      %v4766 = vld [vmem:[%s5 + $0xa4] sm:$0xf]
      %v4767 = vld [vmem:[%s5 + $0xa8] sm:$0xf]
      %v4768 = vld [vmem:[%s5 + $0xac] sm:$0xf]
      %v4769 = vld [vmem:[%s5 + $0xb0] sm:$0xf]
      %v4770 = vld [vmem:[%s5 + $0xb4] sm:$0xf]
      %v4771 = vld [vmem:[%s5 + $0xb8] sm:$0xf]
      %v4772 = vld [vmem:[%s5 + $0xbc] sm:$0xf]
      %v4773 = vld [vmem:[%s5 + $0xc0] sm:$0xf]
      %v4774 = vld [vmem:[%s5 + $0xc4] sm:$0xf]
      %v4775 = vld [vmem:[%s5 + $0xc8] sm:$0xf]
      %v4776 = vld [vmem:[%s5 + $0xcc] sm:$0xf]
      %v4777 = vld [vmem:[%s5 + $0xd0] sm:$0xf]
      %v4778 = vld [vmem:[%s5 + $0xd4] sm:$0xf]
      %v4779 = vld [vmem:[%s5 + $0xd8] sm:$0xf]
      %v4780 = vld [vmem:[%s5 + $0xdc] sm:$0xf]
      %v4781 = vld [vmem:[%s5 + $0xe0] sm:$0xf]
      %v4782 = vld [vmem:[%s5 + $0xe4] sm:$0xf]
      %v4783 = vld [vmem:[%s5 + $0xe8] sm:$0xf]
      %v4784 = vld [vmem:[%s5 + $0xec] sm:$0xf]
      %v4785 = vld [vmem:[%s5 + $0xf0] sm:$0xf]
      %v4786 = vld [vmem:[%s5 + $0xf4] sm:$0xf]
      %v4787 = vld [vmem:[%s5 + $0xf8] sm:$0xf]
      %v4788 = vld [vmem:[%s5 + $0xfc] sm:$0xf]
      %v4789 = vld [vmem:[%s5 + $0x100] sm:$0xf]
      %v4790 = vld [vmem:[%s5 + $0x104] sm:$0xf]
      %v4791 = vld [vmem:[%s5 + $0x108] sm:$0xf]
      %v4792 = vld [vmem:[%s5 + $0x10c] sm:$0xf]
      %v4793 = vld [vmem:[%s5 + $0x110] sm:$0xf]
      %v4794 = vld [vmem:[%s5 + $0x114] sm:$0xf]
      %v4795 = vld [vmem:[%s5 + $0x118] sm:$0xf]
      %v4796 = vld [vmem:[%s5 + $0x11c] sm:$0xf]
      %v4797 = vld [vmem:[%s6] sm:$0x1]
      %v4799 = vlaneseq
      %v4800 = vshrl.u32 %v4799, 7
      %v4801 = vsub.s32 0, %v4800
      %v4802 = vrot.slane %v4797, %v4801
      %v4876 = vunpack.c.l.b16 %v4725
      %v4877 = vunpack.c.l.b16 %v4726
      %v4878 = vunpack.c.l.b16 %v4727
      %v4879 = vunpack.c.l.b16 %v4728
      %v4880 = vunpack.c.l.b16 %v4729
      %v4881 = vunpack.c.l.b16 %v4730
      %v4882 = vunpack.c.l.b16 %v4731
      %v4883 = vunpack.c.l.b16 %v4732
      %v4884 = vunpack.c.l.b16 %v4733
      %v4885 = vunpack.c.l.b16 %v4734
      %v4886 = vunpack.c.l.b16 %v4735
      %v4887 = vunpack.c.l.b16 %v4736
      %v4888 = vunpack.c.l.b16 %v4737
      %v4889 = vunpack.c.l.b16 %v4738
      %v4890 = vunpack.c.l.b16 %v4739
      %v4891 = vunpack.c.l.b16 %v4740
      %v4892 = vunpack.c.l.b16 %v4741
      %v4893 = vunpack.c.l.b16 %v4742
      %v4894 = vunpack.c.l.b16 %v4743
      %v4895 = vunpack.c.l.b16 %v4744
      %v4896 = vunpack.c.l.b16 %v4745
      %v4897 = vunpack.c.l.b16 %v4746
      %v4898 = vunpack.c.l.b16 %v4747
      %v4899 = vunpack.c.l.b16 %v4748
      %v4900 = vunpack.c.l.b16 %v4749
      %v4901 = vunpack.c.l.b16 %v4750
      %v4902 = vunpack.c.l.b16 %v4751
      %v4903 = vunpack.c.l.b16 %v4752
      %v4904 = vunpack.c.l.b16 %v4753
      %v4905 = vunpack.c.l.b16 %v4754
      %v4906 = vunpack.c.l.b16 %v4755
      %v4907 = vunpack.c.l.b16 %v4756
      %v4908 = vunpack.c.l.b16 %v4757
      %v4909 = vunpack.c.l.b16 %v4758
      %v4910 = vunpack.c.l.b16 %v4759
      %v4911 = vunpack.c.l.b16 %v4760
      %v4912 = vunpack.c.l.b16 %v4761
      %v4913 = vunpack.c.l.b16 %v4762
      %v4914 = vunpack.c.l.b16 %v4763
      %v4915 = vunpack.c.l.b16 %v4764
      %v4916 = vunpack.c.l.b16 %v4765
      %v4917 = vunpack.c.l.b16 %v4766
      %v4918 = vunpack.c.l.b16 %v4767
      %v4919 = vunpack.c.l.b16 %v4768
      %v4920 = vunpack.c.l.b16 %v4769
      %v4921 = vunpack.c.l.b16 %v4770
      %v4922 = vunpack.c.l.b16 %v4771
      %v4923 = vunpack.c.l.b16 %v4772
      %v4924 = vunpack.c.l.b16 %v4773
      %v4925 = vunpack.c.l.b16 %v4774
      %v4926 = vunpack.c.l.b16 %v4775
      %v4927 = vunpack.c.l.b16 %v4776
      %v4928 = vunpack.c.l.b16 %v4777
      %v4929 = vunpack.c.l.b16 %v4778
      %v4930 = vunpack.c.l.b16 %v4779
      %v4931 = vunpack.c.l.b16 %v4780
      %v4932 = vunpack.c.l.b16 %v4781
      %v4933 = vunpack.c.l.b16 %v4782
      %v4934 = vunpack.c.l.b16 %v4783
      %v4935 = vunpack.c.l.b16 %v4784
      %v4936 = vunpack.c.l.b16 %v4785
      %v4937 = vunpack.c.l.b16 %v4786
      %v4938 = vunpack.c.l.b16 %v4787
      %v4939 = vunpack.c.l.b16 %v4788
      %v4940 = vunpack.c.l.b16 %v4789
      %v4941 = vunpack.c.l.b16 %v4790
      %v4942 = vunpack.c.l.b16 %v4791
      %v4943 = vunpack.c.l.b16 %v4792
      %v4944 = vunpack.c.l.b16 %v4793
      %v4945 = vunpack.c.l.b16 %v4794
      %v4946 = vunpack.c.l.b16 %v4795
      %v4947 = vunpack.c.l.b16 %v4796
      %v4948 = vpack.c.b16 %v4877, %v4876
      %v4949 = vpack.c.b16 %v4879, %v4878
      %v4950 = vpack.c.b16 %v4881, %v4880
      %v4951 = vpack.c.b16 %v4883, %v4882
      %v4952 = vpack.c.b16 %v4885, %v4884
      %v4953 = vpack.c.b16 %v4887, %v4886
      %v4954 = vpack.c.b16 %v4889, %v4888
      %v4955 = vpack.c.b16 %v4891, %v4890
      %v4956 = vpack.c.b16 %v4893, %v4892
      %v4957 = vpack.c.b16 %v4895, %v4894
      %v4958 = vpack.c.b16 %v4897, %v4896
      %v4959 = vpack.c.b16 %v4899, %v4898
      %v4960 = vpack.c.b16 %v4901, %v4900
      %v4961 = vpack.c.b16 %v4903, %v4902
      %v4962 = vpack.c.b16 %v4905, %v4904
      %v4963 = vpack.c.b16 %v4907, %v4906
      %v4964 = vpack.c.b16 %v4909, %v4908
      %v4965 = vpack.c.b16 %v4911, %v4910
      %v4966 = vpack.c.b16 %v4913, %v4912
      %v4967 = vpack.c.b16 %v4915, %v4914
      %v4968 = vpack.c.b16 %v4917, %v4916
      %v4969 = vpack.c.b16 %v4919, %v4918
      %v4970 = vpack.c.b16 %v4921, %v4920
      %v4971 = vpack.c.b16 %v4923, %v4922
      %v4972 = vpack.c.b16 %v4925, %v4924
      %v4973 = vpack.c.b16 %v4927, %v4926
      %v4974 = vpack.c.b16 %v4929, %v4928
      %v4975 = vpack.c.b16 %v4931, %v4930
      %v4976 = vpack.c.b16 %v4933, %v4932
      %v4977 = vpack.c.b16 %v4935, %v4934
      %v4978 = vpack.c.b16 %v4937, %v4936
      %v4979 = vpack.c.b16 %v4939, %v4938
      %v4980 = vpack.c.b16 %v4941, %v4940
      %v4981 = vpack.c.b16 %v4943, %v4942
      %v4982 = vpack.c.b16 %v4945, %v4944
      %v4983 = vpack.c.b16 %v4947, %v4946
      %v5021 = vsel %vm536, %v4704, 0
      %v5024 = vsel %vm536, %v4709, 0
      %v5027 = vsel %vm536, %v4714, 0
      %v5030 = vsel %vm536, %v4719, 0
      %v5033 = vsel %vm536, %v4724, 0
      %5035 = vmatprep.subr.bf16.mxu0 0
      %5036 = vmatpush1.bf16.msra.mxu0 %v4948
      %5037 = vmatprep.subr.bf16.mxu0 0
      %5038 = vmatpush1.bf16.msra.mxu0 %v4949
      %5039 = vmatprep.subr.bf16.mxu0 0
      %5040 = vmatpush1.bf16.msra.mxu0 %v4950
      %5041 = vmatprep.subr.bf16.mxu0 0
      %5042 = vmatpush1.bf16.msra.mxu0 %v4951
      %5043 = vmatprep.subr.bf16.mxu0 0
      %5044 = vmatpush1.bf16.msra.mxu0 %v4952
      %5045 = vmatprep.subr.bf16.mxu0 0
      %5046 = vmatpush1.bf16.msra.mxu0 %v4953
      %5047 = vmatprep.subr.bf16.mxu0 0
      %5048 = vmatpush1.bf16.msra.mxu0 %v4954
      %5049 = vmatprep.subr.bf16.mxu0 0
      %5050 = vmatpush1.bf16.msra.mxu0 %v4955
      %5051 = vmatprep.subr.bf16.mxu0 0
      %5052 = vmatpush1.bf16.msra.mxu0 %v4956
      %5053 = vmatprep.subr.bf16.mxu0 0
      %5054 = vmatpush1.bf16.msra.mxu0 %v4957
      %5055 = vmatprep.subr.bf16.mxu0 0
      %5056 = vmatpush1.bf16.msra.mxu0 %v4958
      %5057 = vmatprep.subr.bf16.mxu0 0
      %5058 = vmatpush1.bf16.msra.mxu0 %v4959
      %5059 = vmatprep.subr.bf16.mxu0 0
      %5060 = vmatpush1.bf16.msra.mxu0 %v4960
      %5061 = vmatprep.subr.bf16.mxu0 0
      %5062 = vmatpush1.bf16.msra.mxu0 %v4961
      %5063 = vmatprep.subr.bf16.mxu0 0
      %5064 = vmatpush1.bf16.msra.mxu0 %v4962
      %5065 = vmatprep.subr.bf16.mxu0 0
      %5066 = vmatpush1.bf16.msra.mxu0 %v4963
      %5067 = vmatprep.mubr.bf16.mxu0 %v4701
      %5068 = vmatmul.mubr.bf16.gmra.mrb[0].mxu0 %v4700
      %v5069 = vpop.f32.mrb[0].mxu0
      %v5070 = vadd.f32 %v4802, %v5069
      %v5071 = vpop.f32.mrb[0].mxu0
      %v5072 = vpop.f32.mrb[0].mxu0
      %v5073 = vadd.f32 %v4802, %v5072
      %v5074 = vpop.f32.mrb[0].mxu0
      %5075 = vmatprep.mubr.bf16.mxu0 %v4706
      %5076 = vmatmul.mubr.bf16.gmra.mrb[0].mxu0 %v4705
      %v5077 = vpop.f32.mrb[0].mxu0
      %v5078 = vadd.f32 %v4802, %v5077
      %v5079 = vpop.f32.mrb[0].mxu0
      %v5080 = vpop.f32.mrb[0].mxu0
      %v5081 = vadd.f32 %v4802, %v5080
      %v5082 = vpop.f32.mrb[0].mxu0
      %5083 = vmatprep.mubr.bf16.mxu0 %v4711
      %5084 = vmatmul.mubr.bf16.gmra.mrb[0].mxu0 %v4710
      %v5085 = vpop.f32.mrb[0].mxu0
      %v5086 = vadd.f32 %v4802, %v5085
      %v5087 = vpop.f32.mrb[0].mxu0
      %v5088 = vpop.f32.mrb[0].mxu0
      %v5089 = vadd.f32 %v4802, %v5088
      %v5090 = vpop.f32.mrb[0].mxu0
      %5091 = vmatprep.mubr.bf16.mxu0 %v4716
      %5092 = vmatmul.mubr.bf16.gmra.mrb[0].mxu0 %v4715
      %v5093 = vpop.f32.mrb[0].mxu0
      %v5094 = vadd.f32 %v4802, %v5093
      %v5095 = vpop.f32.mrb[0].mxu0
      %v5096 = vpop.f32.mrb[0].mxu0
      %v5097 = vadd.f32 %v4802, %v5096
      %v5098 = vpop.f32.mrb[0].mxu0
      %5099 = vmatprep.mubr.bf16.mxu0 %v4721
      %5100 = vmatmul.mubr.bf16.gmra.mrb[0].mxu0 %v4720
      %v5101 = vpop.f32.mrb[0].mxu0
      %v5102 = vadd.f32 %v4802, %v5101
      %v5103 = vpop.f32.mrb[0].mxu0
      %v5104 = vpop.f32.mrb[0].mxu0
      %v5105 = vadd.f32 %v4802, %v5104
      %v5106 = vpop.f32.mrb[0].mxu0
      %5107 = vdwg.mxu0
      %5108 = vmatprep.subr.bf16.mxu0 0
      %5109 = vmatpush1.bf16.msra.mxu0 %v4964
      %5110 = vmatprep.subr.bf16.mxu0 0
      %5111 = vmatpush1.bf16.msra.mxu0 %v4965
      %5112 = vmatprep.subr.bf16.mxu0 0
      %5113 = vmatpush1.bf16.msra.mxu0 %v4966
      %5114 = vmatprep.subr.bf16.mxu0 0
      %5115 = vmatpush1.bf16.msra.mxu0 %v4967
      %5116 = vmatprep.subr.bf16.mxu0 0
      %5117 = vmatpush1.bf16.msra.mxu0 %v4968
      %5118 = vmatprep.subr.bf16.mxu0 0
      %5119 = vmatpush1.bf16.msra.mxu0 %v4969
      %5120 = vmatprep.subr.bf16.mxu0 0
      %5121 = vmatpush1.bf16.msra.mxu0 %v4970
      %5122 = vmatprep.subr.bf16.mxu0 0
      %5123 = vmatpush1.bf16.msra.mxu0 %v4971
      %5124 = vmatprep.subr.bf16.mxu0 0
      %5125 = vmatpush1.bf16.msra.mxu0 %v4972
      %5126 = vmatprep.subr.bf16.mxu0 0
      %5127 = vmatpush1.bf16.msra.mxu0 %v4973
      %5128 = vmatprep.subr.bf16.mxu0 0
      %5129 = vmatpush1.bf16.msra.mxu0 %v4974
      %5130 = vmatprep.subr.bf16.mxu0 0
      %5131 = vmatpush1.bf16.msra.mxu0 %v4975
      %5132 = vmatprep.subr.bf16.mxu0 0
      %5133 = vmatpush1.bf16.msra.mxu0 %v4976
      %5134 = vmatprep.subr.bf16.mxu0 0
      %5135 = vmatpush1.bf16.msra.mxu0 %v4977
      %5136 = vmatprep.subr.bf16.mxu0 0
      %5137 = vmatpush1.bf16.msra.mxu0 %v4978
      %5138 = vmatprep.subr.bf16.mxu0 0
      %5139 = vmatpush1.bf16.msra.mxu0 %v4979
      %5140 = vmatprep.mubr.bf16.mxu0 %v4703
      %5141 = vmatmul.mubr.bf16.gmra.mrb[0].mxu0 %v4702
      %v5142 = vpop.f32.mrb[0].mxu0
      %v5143 = vadd.f32 %v5070, %v5142
      %v5144 = vpop.f32.mrb[0].mxu0
      %v5145 = vpop.f32.mrb[0].mxu0
      %v5146 = vadd.f32 %v5073, %v5145
      %v5147 = vpop.f32.mrb[0].mxu0
      %5148 = vmatprep.mubr.bf16.mxu0 %v4708
      %5149 = vmatmul.mubr.bf16.gmra.mrb[0].mxu0 %v4707
      %v5150 = vpop.f32.mrb[0].mxu0
      %v5151 = vadd.f32 %v5078, %v5150
      %v5152 = vpop.f32.mrb[0].mxu0
      %v5153 = vpop.f32.mrb[0].mxu0
      %v5154 = vadd.f32 %v5081, %v5153
      %v5155 = vpop.f32.mrb[0].mxu0
      %5156 = vmatprep.mubr.bf16.mxu0 %v4713
      %5157 = vmatmul.mubr.bf16.gmra.mrb[0].mxu0 %v4712
      %v5158 = vpop.f32.mrb[0].mxu0
      %v5159 = vadd.f32 %v5086, %v5158
      %v5160 = vpop.f32.mrb[0].mxu0
      %v5161 = vpop.f32.mrb[0].mxu0
      %v5162 = vadd.f32 %v5089, %v5161
      %v5163 = vpop.f32.mrb[0].mxu0
      %5164 = vmatprep.mubr.bf16.mxu0 %v4718
      %5165 = vmatmul.mubr.bf16.gmra.mrb[0].mxu0 %v4717
      %v5166 = vpop.f32.mrb[0].mxu0
      %v5167 = vadd.f32 %v5094, %v5166
      %v5168 = vpop.f32.mrb[0].mxu0
      %v5169 = vpop.f32.mrb[0].mxu0
      %v5170 = vadd.f32 %v5097, %v5169
      %v5171 = vpop.f32.mrb[0].mxu0
      %5172 = vmatprep.mubr.bf16.mxu0 %v4723
      %5173 = vmatmul.mubr.bf16.gmra.mrb[0].mxu0 %v4722
      %v5174 = vpop.f32.mrb[0].mxu0
      %v5175 = vadd.f32 %v5102, %v5174
      %v5176 = vpop.f32.mrb[0].mxu0
      %v5177 = vpop.f32.mrb[0].mxu0
      %v5178 = vadd.f32 %v5105, %v5177
      %v5179 = vpop.f32.mrb[0].mxu0
      %5180 = vdwg.mxu0
      %5181 = vmatprep.subr.bf16.mxu0 0
      %5182 = vmatpush1.bf16.msra.mxu0 %v4980
      %5183 = vmatprep.subr.bf16.mxu0 0
      %5184 = vmatpush1.bf16.msra.mxu0 %v4981
      %5185 = vmatprep.subr.bf16.mxu0 0
      %5186 = vmatpush1.bf16.msra.mxu0 %v4982
      %5187 = vmatprep.subr.bf16.mxu0 0
      %5188 = vmatpush1.bf16.msra.mxu0 %v4983
      %5189 = vmatprep.subr.bf16.mxu0 0
      %5190 = vmatpush1.bf16.msra.mxu0 0
      %5191 = vmatprep.subr.bf16.mxu0 0
      %5192 = vmatpush1.bf16.msra.mxu0 0
      %5193 = vmatprep.subr.bf16.mxu0 0
      %5194 = vmatpush1.bf16.msra.mxu0 0
      %5195 = vmatprep.subr.bf16.mxu0 0
      %5196 = vmatpush1.bf16.msra.mxu0 0
      %5197 = vmatprep.subr.bf16.mxu0 0
      %5198 = vmatpush1.bf16.msra.mxu0 0
      %5199 = vmatprep.subr.bf16.mxu0 0
      %5200 = vmatpush1.bf16.msra.mxu0 0
      %5201 = vmatprep.subr.bf16.mxu0 0
      %5202 = vmatpush1.bf16.msra.mxu0 0
      %5203 = vmatprep.subr.bf16.mxu0 0
      %5204 = vmatpush1.bf16.msra.mxu0 0
      %5205 = vmatprep.subr.bf16.mxu0 0
      %5206 = vmatpush1.bf16.msra.mxu0 0
      %5207 = vmatprep.subr.bf16.mxu0 0
      %5208 = vmatpush1.bf16.msra.mxu0 0
      %5209 = vmatprep.subr.bf16.mxu0 0
      %5210 = vmatpush1.bf16.msra.mxu0 0
      %5211 = vmatprep.subr.bf16.mxu0 0
      %5212 = vmatpush1.bf16.msra.mxu0 0
      %5213 = vmatprep.mubr.bf16.mxu0 0
      %5214 = vmatmul.mubr.bf16.gmra.mrb[0].mxu0 %v5021
      %v5215 = vpop.f32.mrb[0].mxu0
      %v5216 = vadd.f32 %v5143, %v5215
      %v5217 = vpop.f32.mrb[0].mxu0
      %v5218 = vpop.f32.mrb[0].mxu0
      %v5219 = vadd.f32 %v5146, %v5218
      %v5220 = vpop.f32.mrb[0].mxu0
      %5221 = vmatprep.mubr.bf16.mxu0 0
      %5222 = vmatmul.mubr.bf16.gmra.mrb[0].mxu0 %v5024
      %v5223 = vpop.f32.mrb[0].mxu0
      %v5224 = vadd.f32 %v5151, %v5223
      %v5225 = vpop.f32.mrb[0].mxu0
      %v5226 = vpop.f32.mrb[0].mxu0
      %v5227 = vadd.f32 %v5154, %v5226
      %v5228 = vpop.f32.mrb[0].mxu0
      %5229 = vmatprep.mubr.bf16.mxu0 0
      %5230 = vmatmul.mubr.bf16.gmra.mrb[0].mxu0 %v5027
      %v5231 = vpop.f32.mrb[0].mxu0
      %v5232 = vadd.f32 %v5159, %v5231
      %v5233 = vpop.f32.mrb[0].mxu0
      %v5234 = vpop.f32.mrb[0].mxu0
      %v5235 = vadd.f32 %v5162, %v5234
      %v5236 = vpop.f32.mrb[0].mxu0
      %5237 = vmatprep.mubr.bf16.mxu0 0
      %5238 = vmatmul.mubr.bf16.gmra.mrb[0].mxu0 %v5030
      %v5239 = vpop.f32.mrb[0].mxu0
      %v5240 = vadd.f32 %v5167, %v5239
      %v5241 = vpop.f32.mrb[0].mxu0
      %v5242 = vpop.f32.mrb[0].mxu0
      %v5243 = vadd.f32 %v5170, %v5242
      %v5244 = vpop.f32.mrb[0].mxu0
      %5245 = vmatprep.mubr.bf16.mxu0 0
      %5246 = vmatmul.mubr.bf16.gmra.mrb[0].mxu0 %v5033
      %v5247 = vpop.f32.mrb[0].mxu0
      %v5248 = vadd.f32 %v5175, %v5247
      %v5249 = vpop.f32.mrb[0].mxu0
      %v5250 = vpop.f32.mrb[0].mxu0
      %v5251 = vadd.f32 %v5178, %v5250
      %v5252 = vpop.f32.mrb[0].mxu0
      %5253 = vdwg.mxu0
      %v5254 = vmax.f32 %v5216, 0.0
      %v5255 = vmax.f32 %v5219, 0.0
      %v5256 = vmax.f32 %v5224, 0.0
      %v5257 = vmax.f32 %v5227, 0.0
      %v5258 = vmax.f32 %v5232, 0.0
      %v5259 = vmax.f32 %v5235, 0.0
      %v5260 = vmax.f32 %v5240, 0.0
      %v5261 = vmax.f32 %v5243, 0.0
      %v5262 = vmax.f32 %v5248, 0.0
      %v5263 = vmax.f32 %v5251, 0.0
      %5264 = vst.msk [vmem:[%s278] sm:$0x7f] %vm1741, %v5254
      %vm5265 = vcmask 523267
      %5266 = vst.msk [vmem:[%s278 + $0x4] sm:$0xf8] %vm5265, %v5255
      %vm5267 = vcmask 517120
      %5268 = vst.msk [vmem:[%s278 + $0xc] sm:$0x3] %vm5267, %v5256
      %5269 = vst.msk [vmem:[%s278 + $0x8] sm:$0xc0] %vm913, %v5256
      %5270 = vst.msk [vmem:[%s278 + $0x10] sm:$0x1f] %vm636, %v5257
      %vm5271 = vcmask 523265
      %5272 = vst.msk [vmem:[%s278 + $0x14] sm:$0xfe] %vm5271, %v5258
      %5273 = vst.msk [vmem:[%s278 + $0x18] sm:$0xf0] %vm1321, %v5259
      %5274 = vst.msk [vmem:[%s278 + $0x20] sm:$0x7] %vm928, %v5260
      %vm5275 = vcmask 523271
      %5276 = vst.msk [vmem:[%s278 + $0x1c] sm:$0x80] %vm5275, %v5260
      %vm5277 = vcmask 521216
      %5278 = vst.msk [vmem:[%s278 + $0x24] sm:$0x3f] %vm5277, %v5261
      %5279 = vst.msk [vmem:[%s278 + $0x28] sm:$0xfc] %vm1727, %v5262
      %5280 = vst.msk [vmem:[%s278 + $0x30] sm:$0x1] %vm552, %v5263
      %p5281 = scmp.lt.s32.totalorder %s18, 1
      %s5282 = scalar_select %p5281, %s18, 1
      %s5283 = smul.addr %s5282, 7
      %s5284 = smul.addr %s5283, 8
      %s5285 = scalar_lea.vmem %s7, %s5284
      // Predicated region
      $region49: #{dqn_base_forward.1} parent=47 // pred_check
        %p5286 = pneg %p188
      $region50: #{dqn_base_forward.1} parent=47 // pred_check_branch
        %5288 = sbr.rel (%p5286) target = $region52
      $region51: #{dqn_base_forward.1} parent=47 // pred_region
        _
      $region52: #{dqn_base_forward.1} parent=47 // pred_fallthru
        _
    $region48: #{dqn_base_forward.1} parent=5 // pred_fallthru
      _
    %p5289 = scmp.le.s32.totalorder 2, %s13
    // Predicated region
    $region53: #{dqn_base_forward.1} parent=5 // pred_check
      %p5290 = pneg %p5289
    $region54: #{dqn_base_forward.1} parent=5 // pred_check_branch
      %5292 = sbr.rel (%p5290) target = $region56
    $region55: #{dqn_base_forward.1} parent=5 // pred_region
      %s5293 = ssub.s32 %s13, 2
      // Predicated region
      $region57: #{dqn_base_forward.1} parent=55 // pred_check
        %p5294 = pneg %p194
      $region58: #{dqn_base_forward.1} parent=55 // pred_check_branch
        %5296 = sbr.rel (%p5294) target = $region60
      $region59: #{dqn_base_forward.1} parent=55 // pred_region
        %p5297 = scmp.lt.s32.totalorder %s19, 1
        %s5298 = scalar_select %p5297, %s19, 1
        %s5299 = smul.addr %s5298, 7
        %s5300 = smul.addr %s5299, 8
        %s5301 = scalar_lea.vmem %s7, %s5300
      $region60: #{dqn_base_forward.1} parent=55 // pred_fallthru
        _
    $region56: #{dqn_base_forward.1} parent=5 // pred_fallthru
      _
  $region6: #{dqn_base_forward.1} parent=0 // loop_footer
    %s17 = sadd.s32 1, %s13
  $region7: #{dqn_base_forward.1} parent=0 // loop_footer_branch
    %12 = sbr.rel target = $region3
  $region8: #{dqn_base_forward.1} parent=0 // loop_exit
    _

</llo_original>
